<compile_context>
chip_gen: v7x
topology: tpu7x:2x2x1
jax: 0.10.0
libtpu: 0.0.40
codegen_flags: <defaults>
</compile_context>

<pallas_src>
import functools

import jax
import jax.numpy as jnp
import numpy as np
from jax.experimental import pallas as pl
from jax.experimental.pallas import tpu as pltpu

EPS = 1e-5
NEG_INF = -1e30  # finite mask constant (avoids inf-inf NaN if L is padded)


def _layernorm(x, w, b):
    mu = jnp.mean(x, axis=-1, keepdims=True)
    var = jnp.mean(jnp.square(x - mu), axis=-1, keepdims=True)
    return (x - mu) * jax.lax.rsqrt(var + EPS) * w + b


# ------------------------------ fused kernel -------------------------------

def encoder_kernel(eot_ref,                                   # SMEM (B,) int32
                   prompts_ref, pos_ref,
                   ln1w_ref, ln1b_ref, wqkv_ref, bqkv_ref, wo_ref, bo_ref,
                   ln2w_ref, ln2b_ref, wfc_ref, bfc_ref, wpj_ref, bpj_ref,
                   lnfw_ref, lnfb_ref, proj_ref,
                   out_ref,                                   # (Bt, 1, E)
                   x_ref, attn_ref,                           # VMEM scratch
                   *, num_heads, compute_dtype):
    b = pl.program_id(0)
    layer = pl.program_id(1)
    n_layers = pl.num_programs(1)

    Bt, L, D = x_ref.shape
    H = num_heads
    dh = D // H
    scale = 1.0 / float(dh) ** 0.5
    cd = compute_dtype

    # ---- layer 0: load (prompts + positional_embedding) into resident x ----
    @pl.when(layer == 0)
    def _():
        x_ref[...] = prompts_ref[...] + pos_ref[...]

    # ---------------- one pre-LN residual attention block ------------------
    x = x_ref[...]                                            # (Bt, L, D) f32

    h = _layernorm(x, ln1w_ref[0], ln1b_ref[0])
    qkv = jnp.dot(h.reshape(Bt * L, D).astype(cd), wqkv_ref[0],
                  preferred_element_type=jnp.float32) + bqkv_ref[0]
    qkv = qkv.reshape(Bt, L, 3 * D)

    rows = jax.lax.broadcasted_iota(jnp.int32, (L, L), 0)
    cols = jax.lax.broadcasted_iota(jnp.int32, (L, L), 1)
    causal = cols <= rows

    for hd in range(H):                       # static loop, Bt-batched einsums
        qs = slice(hd * dh, (hd + 1) * dh)
        ks = slice(D + hd * dh, D + (hd + 1) * dh)
        vs = slice(2 * D + hd * dh, 2 * D + (hd + 1) * dh)
        q_h = (qkv[:, :, qs] * scale).astype(cd)              # (Bt, L, dh)
        k_h = qkv[:, :, ks].astype(cd)
        v_h = qkv[:, :, vs].astype(cd)
        s = jnp.einsum("bqd,bkd->bqk", q_h, k_h,
                       preferred_element_type=jnp.float32)
        s = jnp.where(causal, s, NEG_INF)
        m = jnp.max(s, axis=-1, keepdims=True)
        e = jnp.exp(s - m)
        p = e * pl.reciprocal(jnp.sum(e, axis=-1, keepdims=True), approx=True)
        o_h = jnp.einsum("bqk,bkd->bqd", p.astype(cd), v_h,
                         preferred_element_type=jnp.float32)
        attn_ref[:, :, qs] = o_h              # head slab write (no concatenate)

    a = jnp.dot(attn_ref[...].reshape(Bt * L, D).astype(cd), wo_ref[0],
                preferred_element_type=jnp.float32) + bo_ref[0]
    x = x + a.reshape(Bt, L, D)

    h2 = _layernorm(x, ln2w_ref[0], ln2b_ref[0])
    h2 = jnp.dot(h2.reshape(Bt * L, D).astype(cd), wfc_ref[0],
                 preferred_element_type=jnp.float32) + bfc_ref[0]
    h2 = h2 * jax.nn.sigmoid(1.702 * h2)                      # QuickGELU (f32)
    h2 = jnp.dot(h2.astype(cd), wpj_ref[0],
                 preferred_element_type=jnp.float32) + bpj_ref[0]
    x = x + h2.reshape(Bt, L, D)
    x_ref[...] = x

    # ---- last layer: ln_final on EOT rows + text_projection ----------------
    @pl.when(layer == n_layers - 1)
    def _():
        E = proj_ref.shape[1]
        base = b * Bt
        picked = []
        for i in range(Bt):                                   # static, Bt small
            e_i = eot_ref[base + i]
            sel = jax.lax.broadcasted_iota(jnp.int32, (L, 1), 0) == e_i
            picked.append(jnp.sum(jnp.where(sel, x[i], 0.0),
                                  axis=0, keepdims=True))     # (1, D)
        xe = jnp.concatenate(picked, axis=0)                  # (Bt, D)
        hf = _layernorm(xe, lnfw_ref[...], lnfb_ref[...])
        out = jnp.dot(hf.astype(cd), proj_ref[...],
                      preferred_element_type=jnp.float32)
        out_ref[...] = out.reshape(Bt, 1, E).astype(out_ref.dtype)


# -------------------------------- wrapper -----------------------------------

def _pick_block_b(B, L):
    """Smallest divisor of B whose Bt*L >= 128 (fills MXU rows), else B."""
    want = -(-128 // L)
    for d in range(1, B + 1):
        if B % d == 0 and d >= want:
            return d
    return B


def text_encoder_forward(prompts, tokenized_prompts, params, num_heads,
                         *, compute_dtype=jnp.float32, block_b=None):
    B, L, D = prompts.shape
    NL = len(params["layers"])
    E = params["text_projection"].shape[1]
    F = params["layers"][0]["w_fc"].shape[1]
    Bt = block_b if block_b is not None else _pick_block_b(B, L)
    assert B % Bt == 0, "block_b must divide the batch"

    cd = compute_dtype
    stack = lambda n: jnp.stack([lyr[n] for lyr in params["layers"]], axis=0)
    ln1_w, ln1_b = stack("ln1_w"), stack("ln1_b")             # (NL,1,D) f32
    ln2_w, ln2_b = stack("ln2_w"), stack("ln2_b")
    b_qkv, b_o = stack("b_qkv"), stack("b_o")                 # f32 biases
    b_fc, b_pj = stack("b_fc"), stack("b_pj")
    w_qkv = stack("w_qkv").astype(cd)                         # (NL,D,3D)
    w_o = stack("w_o").astype(cd)                             # (NL,D,D)
    w_fc = stack("w_fc").astype(cd)                           # (NL,D,F)
    w_pj = stack("w_pj").astype(cd)                           # (NL,F,D)
    proj = params["text_projection"].astype(cd)               # (D,E)
    pos = params["pos_emb"]                                   # (L,D) f32
    lnf_w, lnf_b = params["lnf_w"], params["lnf_b"]           # (1,D) f32

    eot = jnp.argmax(tokenized_prompts, axis=-1).astype(jnp.int32)   # (B,)

    def rep(nd):
        return lambda b, l, e: (0,) * nd

    def per_layer(nd):
        return lambda b, l, e: (l,) + (0,) * (nd - 1)

    in_specs = [
        pl.BlockSpec((Bt, L, D), lambda b, l, e: (b, 0, 0)),  # prompts
        pl.BlockSpec((L, D), rep(2)),                         # pos_emb
        pl.BlockSpec((1, 1, D), per_layer(3)),                # ln1_w
        pl.BlockSpec((1, 1, D), per_layer(3)),                # ln1_b
        pl.BlockSpec((1, D, 3 * D), per_layer(3)),            # w_qkv
        pl.BlockSpec((1, 1, 3 * D), per_layer(3)),            # b_qkv
        pl.BlockSpec((1, D, D), per_layer(3)),                # w_o
        pl.BlockSpec((1, 1, D), per_layer(3)),                # b_o
        pl.BlockSpec((1, 1, D), per_layer(3)),                # ln2_w
        pl.BlockSpec((1, 1, D), per_layer(3)),                # ln2_b
        pl.BlockSpec((1, D, F), per_layer(3)),                # w_fc
        pl.BlockSpec((1, 1, F), per_layer(3)),                # b_fc
        pl.BlockSpec((1, F, D), per_layer(3)),                # w_pj
        pl.BlockSpec((1, 1, D), per_layer(3)),                # b_pj
        pl.BlockSpec((1, D), rep(2)),                         # lnf_w
        pl.BlockSpec((1, D), rep(2)),                         # lnf_b
        pl.BlockSpec((D, E), rep(2)),                         # text_projection
    ]
    out_specs = pl.BlockSpec((Bt, 1, E), lambda b, l, e: (b, 0, 0))

    # VMEM budget: double-buffered per-layer weight blocks + resident scratch.
    wi = jnp.dtype(cd).itemsize
    per_layer_bytes = (D * 3 * D + D * D + 2 * D * F) * wi + (8 * D + 3 * D + F) * 4
    fixed_bytes = (Bt * L * D + L * D + 2 * D + Bt * E) * 4 + D * E * wi
    scratch_bytes = 2 * Bt * L * D * 4
    est = 2 * (per_layer_bytes + fixed_bytes) + scratch_bytes
    vmem_limit = int(min(64 * 2**20, max(32 * 2**20, est + 8 * 2**20)))

    grid_spec = pltpu.PrefetchScalarGridSpec(
        num_scalar_prefetch=1,
        grid=(B // Bt, NL),                                   # layer axis last
        in_specs=in_specs,
        out_specs=out_specs,
        scratch_shapes=[pltpu.VMEM((Bt, L, D), jnp.float32),  # resident x
                        pltpu.VMEM((Bt, L, D), jnp.float32)], # attn head slab
    )

    out = pl.pallas_call(
        functools.partial(encoder_kernel, num_heads=num_heads,
                          compute_dtype=cd),
        out_shape=jax.ShapeDtypeStruct((B, 1, E), jnp.float32),
        grid_spec=grid_spec,
        compiler_params=pltpu.CompilerParams(
            dimension_semantics=("parallel", "arbitrary"),
            vmem_limit_bytes=vmem_limit),
    )(eot, prompts, pos, ln1_w, ln1_b, w_qkv, b_qkv, w_o, b_o,
      ln2_w, ln2_b, w_fc, b_fc, w_pj, b_pj, lnf_w, lnf_b, proj)
    return out[:, 0, :]


# ------------------------------ reference -----------------------------------

def reference_forward(prompts, tokenized_prompts, params, num_heads):
    x = prompts + params["pos_emb"]
    B, L, D = x.shape
    dh = D // num_heads
    causal = jnp.tril(jnp.ones((L, L), dtype=bool))
    hp = "highest"
    for layer in params["layers"]:
        h = _layernorm(x, layer["ln1_w"], layer["ln1_b"])
        qkv = jnp.dot(h, layer["w_qkv"], precision=hp) + layer["b_qkv"]
        q, k, v = jnp.split(qkv, 3, axis=-1)
        q = q.reshape(B, L, num_heads, dh)
        k = k.reshape(B, L, num_heads, dh)
        v = v.reshape(B, L, num_heads, dh)
        s = jnp.einsum("bqhd,bkhd->bhqk", q, k, precision=hp) / jnp.sqrt(float(dh))
        s = jnp.where(causal[None, None], s, -jnp.inf)
        p = jax.nn.softmax(s, axis=-1)
        a = jnp.einsum("bhqk,bkhd->bqhd", p, v, precision=hp).reshape(B, L, D)
        a = jnp.dot(a, layer["w_o"], precision=hp) + layer["b_o"]
        x = x + a
        h2 = _layernorm(x, layer["ln2_w"], layer["ln2_b"])
        h2 = jnp.dot(h2, layer["w_fc"], precision=hp) + layer["b_fc"]
        h2 = h2 * jax.nn.sigmoid(1.702 * h2)
        h2 = jnp.dot(h2, layer["w_pj"], precision=hp) + layer["b_pj"]
        x = x + h2
    x = _layernorm(x, params["lnf_w"], params["lnf_b"])
    eot = jnp.argmax(tokenized_prompts, axis=-1)
    x = x[jnp.arange(B), eot]
    return jnp.dot(x, params["text_projection"], precision=hp)


# ------------------------------- params / main -------------------------------

def make_params(key, *, L, D, E, ffn, num_layers):
    def nrm(k, shape, scale=0.02):
        return (scale * jax.random.normal(k, shape)).astype(jnp.float32)

    keys = jax.random.split(key, 4 + num_layers)
    params = {
        "pos_emb": nrm(keys[0], (L, D)),
        "lnf_w": 1.0 + nrm(keys[1], (1, D), 0.05),
        "lnf_b": nrm(keys[2], (1, D)),
        "text_projection": nrm(keys[3], (D, E)),
        "layers": [],
    }
    for i in range(num_layers):
        lk = jax.random.split(keys[4 + i], 12)
        params["layers"].append({
            "ln1_w": 1.0 + nrm(lk[0], (1, D), 0.05),
            "ln1_b": nrm(lk[1], (1, D)),
            "w_qkv": nrm(lk[2], (D, 3 * D)),
            "b_qkv": nrm(lk[3], (1, 3 * D)),
            "w_o": nrm(lk[4], (D, D)),
            "b_o": nrm(lk[5], (1, D)),
            "ln2_w": 1.0 + nrm(lk[6], (1, D), 0.05),
            "ln2_b": nrm(lk[7], (1, D)),
            "w_fc": nrm(lk[8], (D, ffn)),
            "b_fc": nrm(lk[9], (1, ffn)),
            "w_pj": nrm(lk[10], (ffn, D)),
            "b_pj": nrm(lk[11], (1, D)),
        })
    return params


if __name__ == "__main__":
    B, L, D, H, E = 2, 8, 32, 4, 16
    ffn, num_layers = 4 * D, 2

    root = jax.random.PRNGKey(0)
    k_par, k_prompts, k_tok = jax.random.split(root, 3)

    params = make_params(k_par, L=L, D=D, E=E, ffn=ffn, num_layers=num_layers)
    prompts = (0.02 * jax.random.normal(k_prompts, (B, L, D))).astype(jnp.float32)
    tokenized_prompts = jax.random.randint(k_tok, (B, L), 0, 1000, dtype=jnp.int32)

    ref = reference_forward(prompts, tokenized_prompts, params, num_heads=H)

    # f32 MXU path: tight check.
    out = text_encoder_forward(prompts, tokenized_prompts, params, num_heads=H,
                               compute_dtype=jnp.float32)
    out = jax.block_until_ready(out)
    np.testing.assert_allclose(np.asarray(out), np.asarray(ref),
                               rtol=2e-2, atol=2e-3)

    # bf16 MXU path (production config: half the weight DMA bytes): loose check.
    out_bf16 = text_encoder_forward(prompts, tokenized_prompts, params,
                                    num_heads=H, compute_dtype=jnp.bfloat16)
    out_bf16 = jax.block_until_ready(out_bf16)
    np.testing.assert_allclose(np.asarray(out_bf16), np.asarray(ref),
                               rtol=1e-1, atol=1e-2)

    print("KERNEL_OK")
</pallas_src>

<mosaic_0001>
module attributes {stable_mosaic.version = 11 : i64} {
  func.func @encoder_kernel(%arg0: i32, %arg1: i32, %arg2: memref<2xi32, #tpu.memory_space<smem>>, %arg3: memref<2x8x32xf32, #tpu.memory_space<vmem>>, %arg4: memref<8x32xf32, #tpu.memory_space<vmem>>, %arg5: memref<1x1x32xf32, #tpu.memory_space<vmem>>, %arg6: memref<1x1x32xf32, #tpu.memory_space<vmem>>, %arg7: memref<1x32x96xf32, #tpu.memory_space<vmem>>, %arg8: memref<1x1x96xf32, #tpu.memory_space<vmem>>, %arg9: memref<1x32x32xf32, #tpu.memory_space<vmem>>, %arg10: memref<1x1x32xf32, #tpu.memory_space<vmem>>, %arg11: memref<1x1x32xf32, #tpu.memory_space<vmem>>, %arg12: memref<1x1x32xf32, #tpu.memory_space<vmem>>, %arg13: memref<1x32x128xf32, #tpu.memory_space<vmem>>, %arg14: memref<1x1x128xf32, #tpu.memory_space<vmem>>, %arg15: memref<1x128x32xf32, #tpu.memory_space<vmem>>, %arg16: memref<1x1x32xf32, #tpu.memory_space<vmem>>, %arg17: memref<1x32xf32, #tpu.memory_space<vmem>>, %arg18: memref<1x32xf32, #tpu.memory_space<vmem>>, %arg19: memref<32x16xf32, #tpu.memory_space<vmem>>, %arg20: memref<2x1x16xf32, #tpu.memory_space<vmem>>, %arg21: memref<2x8x32xf32, #tpu.memory_space<vmem>>, %arg22: memref<2x8x32xf32, #tpu.memory_space<vmem>>) attributes {dimension_semantics = [#tpu.dimension_semantics<parallel>, #tpu.dimension_semantics<arbitrary>], iteration_bounds = array<i64: 1, 2>, scalar_prefetch = 1 : i64, scratch_operands = 2 : i64, tpu.core_type = #tpu.core_type<tc>, window_params = [{transform_indices = @transform_0, window_bounds = array<i64: 2, 8, 32>}, {pipeline_mode = #tpu.pipeline_mode<synchronous>, transform_indices = @transform_1, window_bounds = array<i64: 8, 32>}, {transform_indices = @transform_2, window_bounds = array<i64: 1, 1, 32>}, {transform_indices = @transform_3, window_bounds = array<i64: 1, 1, 32>}, {transform_indices = @transform_4, window_bounds = array<i64: 1, 32, 96>}, {transform_indices = @transform_5, window_bounds = array<i64: 1, 1, 96>}, {transform_indices = @transform_6, window_bounds = array<i64: 1, 32, 32>}, {transform_indices = @transform_7, window_bounds = array<i64: 1, 1, 32>}, {transform_indices = @transform_8, window_bounds = array<i64: 1, 1, 32>}, {transform_indices = @transform_9, window_bounds = array<i64: 1, 1, 32>}, {transform_indices = @transform_10, window_bounds = array<i64: 1, 32, 128>}, {transform_indices = @transform_11, window_bounds = array<i64: 1, 1, 128>}, {transform_indices = @transform_12, window_bounds = array<i64: 1, 128, 32>}, {transform_indices = @transform_13, window_bounds = array<i64: 1, 1, 32>}, {pipeline_mode = #tpu.pipeline_mode<synchronous>, transform_indices = @transform_14, window_bounds = array<i64: 1, 32>}, {pipeline_mode = #tpu.pipeline_mode<synchronous>, transform_indices = @transform_15, window_bounds = array<i64: 1, 32>}, {pipeline_mode = #tpu.pipeline_mode<synchronous>, transform_indices = @transform_16, window_bounds = array<i64: 32, 16>}, {transform_indices = @transform_17, window_bounds = array<i64: 2, 1, 16>}]} {
    %c0_i32 = arith.constant 0 : i32
    %0 = arith.cmpi eq, %arg1, %c0_i32 : i32
    %1 = arith.extui %0 : i1 to i32
    %c0_i32_0 = arith.constant 0 : i32
    %2 = arith.cmpi ne, %1, %c0_i32_0 : i32
    scf.if %2 {
      %c0_94 = arith.constant 0 : index
      %c0_95 = arith.constant 0 : index
      %c0_96 = arith.constant 0 : index
      %200 = vector.load %arg3[%c0_94, %c0_95, %c0_96] : memref<2x8x32xf32, #tpu.memory_space<vmem>>, vector<2x8x32xf32>
      %c0_97 = arith.constant 0 : index
      %c0_98 = arith.constant 0 : index
      %201 = vector.load %arg4[%c0_97, %c0_98] : memref<8x32xf32, #tpu.memory_space<vmem>>, vector<8x32xf32>
      %202 = vector.shape_cast %201 : vector<8x32xf32> to vector<1x8x32xf32>
      %203 = vector.broadcast %202 : vector<1x8x32xf32> to vector<2x8x32xf32>
      %204 = arith.addf %200, %203 : vector<2x8x32xf32>
      %c0_99 = arith.constant 0 : index
      %c0_100 = arith.constant 0 : index
      %c0_101 = arith.constant 0 : index
      %205 = vector.load %arg21[%c0_99, %c0_100, %c0_101] : memref<2x8x32xf32, #tpu.memory_space<vmem>>, vector<2x8x32xf32>
      tpu.vector_store %arg21[%c0_99, %c0_100, %c0_101], %204 {strides = array<i32>} : memref<2x8x32xf32, #tpu.memory_space<vmem>>, vector<2x8x32xf32>,
    } else {
    }
    %c0 = arith.constant 0 : index
    %c0_1 = arith.constant 0 : index
    %c0_2 = arith.constant 0 : index
    %3 = vector.load %arg21[%c0, %c0_1, %c0_2] : memref<2x8x32xf32, #tpu.memory_space<vmem>>, vector<2x8x32xf32>
    %c0_3 = arith.constant 0 : index
    %c0_4 = arith.constant 0 : index
    %c0_5 = arith.constant 0 : index
    %4 = vector.load %arg5[%c0_3, %c0_4, %c0_5] : memref<1x1x32xf32, #tpu.memory_space<vmem>>, vector<1x1x32xf32>
    %5 = vector.shape_cast %4 : vector<1x1x32xf32> to vector<1x32xf32>
    %c0_6 = arith.constant 0 : index
    %c0_7 = arith.constant 0 : index
    %c0_8 = arith.constant 0 : index
    %6 = vector.load %arg6[%c0_6, %c0_7, %c0_8] : memref<1x1x32xf32, #tpu.memory_space<vmem>>, vector<1x1x32xf32>
    %7 = vector.shape_cast %6 : vector<1x1x32xf32> to vector<1x32xf32>
    %cst = arith.constant dense<0.000000e+00> : vector<2x8xf32>
    %8 = vector.multi_reduction <add>, %3, %cst [2] : vector<2x8x32xf32> to vector<2x8xf32>
    %9 = vector.shape_cast %8 : vector<2x8xf32> to vector<2x8x1xf32>
    %cst_9 = arith.constant 3.200000e+01 : f32
    %10 = vector.broadcast %cst_9 : f32 to vector<2x8x1xf32>
    %11 = arith.divf %9, %10 : vector<2x8x1xf32>
    %12 = vector.broadcast %11 : vector<2x8x1xf32> to vector<2x8x32xf32>
    %13 = arith.subf %3, %12 : vector<2x8x32xf32>
    %14 = arith.mulf %13, %13 : vector<2x8x32xf32>
    %cst_10 = arith.constant dense<0.000000e+00> : vector<2x8xf32>
    %15 = vector.multi_reduction <add>, %14, %cst_10 [2] : vector<2x8x32xf32> to vector<2x8xf32>
    %16 = vector.shape_cast %15 : vector<2x8xf32> to vector<2x8x1xf32>
    %cst_11 = arith.constant 3.200000e+01 : f32
    %17 = vector.broadcast %cst_11 : f32 to vector<2x8x1xf32>
    %18 = arith.divf %16, %17 : vector<2x8x1xf32>
    %19 = vector.broadcast %11 : vector<2x8x1xf32> to vector<2x8x32xf32>
    %20 = arith.subf %3, %19 : vector<2x8x32xf32>
    %cst_12 = arith.constant 9.99999974E-6 : f32
    %21 = vector.broadcast %cst_12 : f32 to vector<2x8x1xf32>
    %22 = arith.addf %18, %21 : vector<2x8x1xf32>
    %23 = math.rsqrt %22 : vector<2x8x1xf32>
    %24 = vector.broadcast %23 : vector<2x8x1xf32> to vector<2x8x32xf32>
    %25 = arith.mulf %20, %24 : vector<2x8x32xf32>
    %26 = vector.shape_cast %5 : vector<1x32xf32> to vector<1x1x32xf32>
    %27 = vector.broadcast %26 : vector<1x1x32xf32> to vector<2x8x32xf32>
    %28 = arith.mulf %25, %27 : vector<2x8x32xf32>
    %29 = vector.shape_cast %7 : vector<1x32xf32> to vector<1x1x32xf32>
    %30 = vector.broadcast %29 : vector<1x1x32xf32> to vector<2x8x32xf32>
    %31 = arith.addf %28, %30 : vector<2x8x32xf32>
    %32 = vector.shape_cast %31 : vector<2x8x32xf32> to vector<16x32xf32>
    %c0_13 = arith.constant 0 : index
    %c0_14 = arith.constant 0 : index
    %c0_15 = arith.constant 0 : index
    %33 = vector.load %arg7[%c0_13, %c0_14, %c0_15] : memref<1x32x96xf32, #tpu.memory_space<vmem>>, vector<1x32x96xf32>
    %34 = vector.shape_cast %33 : vector<1x32x96xf32> to vector<32x96xf32>
    %cst_16 = arith.constant dense<0.000000e+00> : vector<16x96xf32>
    %35 = tpu.matmul %32, %34, %cst_16 {dimension_numbers = #tpu.dot_dimension_numbers<[1], [0], [0], [1], [0, 0, 1, 1], [], []>} : vector<16x32xf32>, vector<32x96xf32>, vector<16x96xf32> -> vector<16x96xf32>
    %c0_17 = arith.constant 0 : index
    %c0_18 = arith.constant 0 : index
    %c0_19 = arith.constant 0 : index
    %36 = vector.load %arg8[%c0_17, %c0_18, %c0_19] : memref<1x1x96xf32, #tpu.memory_space<vmem>>, vector<1x1x96xf32>
    %37 = vector.shape_cast %36 : vector<1x1x96xf32> to vector<1x96xf32>
    %38 = vector.broadcast %37 : vector<1x96xf32> to vector<16x96xf32>
    %39 = arith.addf %35, %38 : vector<16x96xf32>
    %40 = vector.shape_cast %39 : vector<16x96xf32> to vector<2x8x96xf32>
    %41 = tpu.iota {dimensions = array<i32: 0>} : vector<8x8xi32>
    %42 = tpu.iota {dimensions = array<i32: 1>} : vector<8x8xi32>
    %43 = arith.cmpi sle, %42, %41 : vector<8x8xi32>
    %44 = vector.extract_strided_slice %40 {offsets = [0, 0, 0], sizes = [2, 8, 8], strides = [1, 1, 1]} : vector<2x8x96xf32> to vector<2x8x8xf32>
    %cst_20 = arith.constant 0.353553385 : f32
    %45 = vector.broadcast %cst_20 : f32 to vector<2x8x8xf32>
    %46 = arith.mulf %44, %45 : vector<2x8x8xf32>
    %47 = vector.extract_strided_slice %40 {offsets = [0, 0, 32], sizes = [2, 8, 8], strides = [1, 1, 1]} : vector<2x8x96xf32> to vector<2x8x8xf32>
    %48 = vector.extract_strided_slice %40 {offsets = [0, 0, 64], sizes = [2, 8, 8], strides = [1, 1, 1]} : vector<2x8x96xf32> to vector<2x8x8xf32>
    "tpu.trace_start"() <{level = 10 : i32, message = "bqd,bkd->bqk"}> : () -> ()
    %cst_21 = arith.constant dense<0.000000e+00> : vector<2x8x8xf32>
    %49 = tpu.matmul %46, %47, %cst_21 {dimension_numbers = #tpu.dot_dimension_numbers<[2], [2], [1], [1], [0, 0, 0, 1, 1, 1], [0], [0]>} : vector<2x8x8xf32>, vector<2x8x8xf32>, vector<2x8x8xf32> -> vector<2x8x8xf32>
    %cst_22 = arith.constant -1.000000e+30 : f32
    "tpu.trace_stop"() : () -> ()
    %50 = vector.shape_cast %43 : vector<8x8xi1> to vector<1x8x8xi1>
    %51 = vector.broadcast %50 : vector<1x8x8xi1> to vector<2x8x8xi1>
    %52 = vector.broadcast %cst_22 : f32 to vector<2x8x8xf32>
    %53 = arith.select %51, %49, %52 : vector<2x8x8xi1>, vector<2x8x8xf32>
    %cst_23 = arith.constant dense<0xFF800000> : vector<2x8xf32>
    %54 = vector.multi_reduction <maximumf>, %53, %cst_23 [2] : vector<2x8x8xf32> to vector<2x8xf32>
    %55 = vector.shape_cast %54 : vector<2x8xf32> to vector<2x8x1xf32>
    %56 = vector.broadcast %55 : vector<2x8x1xf32> to vector<2x8x8xf32>
    %57 = arith.subf %53, %56 : vector<2x8x8xf32>
    %58 = math.exp %57 : vector<2x8x8xf32>
    %cst_24 = arith.constant dense<0.000000e+00> : vector<2x8xf32>
    %59 = vector.multi_reduction <add>, %58, %cst_24 [2] : vector<2x8x8xf32> to vector<2x8xf32>
    %60 = vector.shape_cast %59 : vector<2x8xf32> to vector<2x8x1xf32>
    %61 = tpu.reciprocal %60 {approx = true} : vector<2x8x1xf32> -> vector<2x8x1xf32>
    %62 = vector.broadcast %61 : vector<2x8x1xf32> to vector<2x8x8xf32>
    %63 = arith.mulf %58, %62 : vector<2x8x8xf32>
    "tpu.trace_start"() <{level = 10 : i32, message = "bqk,bkd->bqd"}> : () -> ()
    %cst_25 = arith.constant dense<0.000000e+00> : vector<2x8x8xf32>
    %64 = tpu.matmul %63, %48, %cst_25 {dimension_numbers = #tpu.dot_dimension_numbers<[2], [1], [1], [2], [0, 0, 0, 1, 1, 2], [0], [0]>} : vector<2x8x8xf32>, vector<2x8x8xf32>, vector<2x8x8xf32> -> vector<2x8x8xf32>
    "tpu.trace_stop"() : () -> ()
    %c0_26 = arith.constant 0 : index
    %c0_27 = arith.constant 0 : index
    %c0_28 = arith.constant 0 : index
    %65 = vector.load %arg22[%c0_26, %c0_27, %c0_28] : memref<2x8x32xf32, #tpu.memory_space<vmem>>, vector<2x8x8xf32>
    tpu.vector_store %arg22[%c0_26, %c0_27, %c0_28], %64 {strides = array<i32>} : memref<2x8x32xf32, #tpu.memory_space<vmem>>, vector<2x8x8xf32>,
    %66 = vector.extract_strided_slice %40 {offsets = [0, 0, 8], sizes = [2, 8, 8], strides = [1, 1, 1]} : vector<2x8x96xf32> to vector<2x8x8xf32>
    %cst_29 = arith.constant 0.353553385 : f32
    %67 = vector.broadcast %cst_29 : f32 to vector<2x8x8xf32>
    %68 = arith.mulf %66, %67 : vector<2x8x8xf32>
    %69 = vector.extract_strided_slice %40 {offsets = [0, 0, 40], sizes = [2, 8, 8], strides = [1, 1, 1]} : vector<2x8x96xf32> to vector<2x8x8xf32>
    %70 = vector.extract_strided_slice %40 {offsets = [0, 0, 72], sizes = [2, 8, 8], strides = [1, 1, 1]} : vector<2x8x96xf32> to vector<2x8x8xf32>
    "tpu.trace_start"() <{level = 10 : i32, message = "bqd,bkd->bqk"}> : () -> ()
    %cst_30 = arith.constant dense<0.000000e+00> : vector<2x8x8xf32>
    %71 = tpu.matmul %68, %69, %cst_30 {dimension_numbers = #tpu.dot_dimension_numbers<[2], [2], [1], [1], [0, 0, 0, 1, 1, 1], [0], [0]>} : vector<2x8x8xf32>, vector<2x8x8xf32>, vector<2x8x8xf32> -> vector<2x8x8xf32>
    %cst_31 = arith.constant -1.000000e+30 : f32
    "tpu.trace_stop"() : () -> ()
    %72 = vector.shape_cast %43 : vector<8x8xi1> to vector<1x8x8xi1>
    %73 = vector.broadcast %72 : vector<1x8x8xi1> to vector<2x8x8xi1>
    %74 = vector.broadcast %cst_31 : f32 to vector<2x8x8xf32>
    %75 = arith.select %73, %71, %74 : vector<2x8x8xi1>, vector<2x8x8xf32>
    %cst_32 = arith.constant dense<0xFF800000> : vector<2x8xf32>
    %76 = vector.multi_reduction <maximumf>, %75, %cst_32 [2] : vector<2x8x8xf32> to vector<2x8xf32>
    %77 = vector.shape_cast %76 : vector<2x8xf32> to vector<2x8x1xf32>
    %78 = vector.broadcast %77 : vector<2x8x1xf32> to vector<2x8x8xf32>
    %79 = arith.subf %75, %78 : vector<2x8x8xf32>
    %80 = math.exp %79 : vector<2x8x8xf32>
    %cst_33 = arith.constant dense<0.000000e+00> : vector<2x8xf32>
    %81 = vector.multi_reduction <add>, %80, %cst_33 [2] : vector<2x8x8xf32> to vector<2x8xf32>
    %82 = vector.shape_cast %81 : vector<2x8xf32> to vector<2x8x1xf32>
    %83 = tpu.reciprocal %82 {approx = true} : vector<2x8x1xf32> -> vector<2x8x1xf32>
    %84 = vector.broadcast %83 : vector<2x8x1xf32> to vector<2x8x8xf32>
    %85 = arith.mulf %80, %84 : vector<2x8x8xf32>
    "tpu.trace_start"() <{level = 10 : i32, message = "bqk,bkd->bqd"}> : () -> ()
    %cst_34 = arith.constant dense<0.000000e+00> : vector<2x8x8xf32>
    %86 = tpu.matmul %85, %70, %cst_34 {dimension_numbers = #tpu.dot_dimension_numbers<[2], [1], [1], [2], [0, 0, 0, 1, 1, 2], [0], [0]>} : vector<2x8x8xf32>, vector<2x8x8xf32>, vector<2x8x8xf32> -> vector<2x8x8xf32>
    "tpu.trace_stop"() : () -> ()
    %c0_35 = arith.constant 0 : index
    %c0_36 = arith.constant 0 : index
    %c8 = arith.constant 8 : index
    %87 = vector.load %arg22[%c0_35, %c0_36, %c8] : memref<2x8x32xf32, #tpu.memory_space<vmem>>, vector<2x8x8xf32>
    tpu.vector_store %arg22[%c0_35, %c0_36, %c8], %86 {strides = array<i32>} : memref<2x8x32xf32, #tpu.memory_space<vmem>>, vector<2x8x8xf32>,
    %88 = vector.extract_strided_slice %40 {offsets = [0, 0, 16], sizes = [2, 8, 8], strides = [1, 1, 1]} : vector<2x8x96xf32> to vector<2x8x8xf32>
    %cst_37 = arith.constant 0.353553385 : f32
    %89 = vector.broadcast %cst_37 : f32 to vector<2x8x8xf32>
    %90 = arith.mulf %88, %89 : vector<2x8x8xf32>
    %91 = vector.extract_strided_slice %40 {offsets = [0, 0, 48], sizes = [2, 8, 8], strides = [1, 1, 1]} : vector<2x8x96xf32> to vector<2x8x8xf32>
    %92 = vector.extract_strided_slice %40 {offsets = [0, 0, 80], sizes = [2, 8, 8], strides = [1, 1, 1]} : vector<2x8x96xf32> to vector<2x8x8xf32>
    "tpu.trace_start"() <{level = 10 : i32, message = "bqd,bkd->bqk"}> : () -> ()
    %cst_38 = arith.constant dense<0.000000e+00> : vector<2x8x8xf32>
    %93 = tpu.matmul %90, %91, %cst_38 {dimension_numbers = #tpu.dot_dimension_numbers<[2], [2], [1], [1], [0, 0, 0, 1, 1, 1], [0], [0]>} : vector<2x8x8xf32>, vector<2x8x8xf32>, vector<2x8x8xf32> -> vector<2x8x8xf32>
    %cst_39 = arith.constant -1.000000e+30 : f32
    "tpu.trace_stop"() : () -> ()
    %94 = vector.shape_cast %43 : vector<8x8xi1> to vector<1x8x8xi1>
    %95 = vector.broadcast %94 : vector<1x8x8xi1> to vector<2x8x8xi1>
    %96 = vector.broadcast %cst_39 : f32 to vector<2x8x8xf32>
    %97 = arith.select %95, %93, %96 : vector<2x8x8xi1>, vector<2x8x8xf32>
    %cst_40 = arith.constant dense<0xFF800000> : vector<2x8xf32>
    %98 = vector.multi_reduction <maximumf>, %97, %cst_40 [2] : vector<2x8x8xf32> to vector<2x8xf32>
    %99 = vector.shape_cast %98 : vector<2x8xf32> to vector<2x8x1xf32>
    %100 = vector.broadcast %99 : vector<2x8x1xf32> to vector<2x8x8xf32>
    %101 = arith.subf %97, %100 : vector<2x8x8xf32>
    %102 = math.exp %101 : vector<2x8x8xf32>
    %cst_41 = arith.constant dense<0.000000e+00> : vector<2x8xf32>
    %103 = vector.multi_reduction <add>, %102, %cst_41 [2] : vector<2x8x8xf32> to vector<2x8xf32>
    %104 = vector.shape_cast %103 : vector<2x8xf32> to vector<2x8x1xf32>
    %105 = tpu.reciprocal %104 {approx = true} : vector<2x8x1xf32> -> vector<2x8x1xf32>
    %106 = vector.broadcast %105 : vector<2x8x1xf32> to vector<2x8x8xf32>
    %107 = arith.mulf %102, %106 : vector<2x8x8xf32>
    "tpu.trace_start"() <{level = 10 : i32, message = "bqk,bkd->bqd"}> : () -> ()
    %cst_42 = arith.constant dense<0.000000e+00> : vector<2x8x8xf32>
    %108 = tpu.matmul %107, %92, %cst_42 {dimension_numbers = #tpu.dot_dimension_numbers<[2], [1], [1], [2], [0, 0, 0, 1, 1, 2], [0], [0]>} : vector<2x8x8xf32>, vector<2x8x8xf32>, vector<2x8x8xf32> -> vector<2x8x8xf32>
    "tpu.trace_stop"() : () -> ()
    %c0_43 = arith.constant 0 : index
    %c0_44 = arith.constant 0 : index
    %c16 = arith.constant 16 : index
    %109 = vector.load %arg22[%c0_43, %c0_44, %c16] : memref<2x8x32xf32, #tpu.memory_space<vmem>>, vector<2x8x8xf32>
    tpu.vector_store %arg22[%c0_43, %c0_44, %c16], %108 {strides = array<i32>} : memref<2x8x32xf32, #tpu.memory_space<vmem>>, vector<2x8x8xf32>,
    %110 = vector.extract_strided_slice %40 {offsets = [0, 0, 24], sizes = [2, 8, 8], strides = [1, 1, 1]} : vector<2x8x96xf32> to vector<2x8x8xf32>
    %cst_45 = arith.constant 0.353553385 : f32
    %111 = vector.broadcast %cst_45 : f32 to vector<2x8x8xf32>
    %112 = arith.mulf %110, %111 : vector<2x8x8xf32>
    %113 = vector.extract_strided_slice %40 {offsets = [0, 0, 56], sizes = [2, 8, 8], strides = [1, 1, 1]} : vector<2x8x96xf32> to vector<2x8x8xf32>
    %114 = vector.extract_strided_slice %40 {offsets = [0, 0, 88], sizes = [2, 8, 8], strides = [1, 1, 1]} : vector<2x8x96xf32> to vector<2x8x8xf32>
    "tpu.trace_start"() <{level = 10 : i32, message = "bqd,bkd->bqk"}> : () -> ()
    %cst_46 = arith.constant dense<0.000000e+00> : vector<2x8x8xf32>
    %115 = tpu.matmul %112, %113, %cst_46 {dimension_numbers = #tpu.dot_dimension_numbers<[2], [2], [1], [1], [0, 0, 0, 1, 1, 1], [0], [0]>} : vector<2x8x8xf32>, vector<2x8x8xf32>, vector<2x8x8xf32> -> vector<2x8x8xf32>
    %cst_47 = arith.constant -1.000000e+30 : f32
    "tpu.trace_stop"() : () -> ()
    %116 = vector.shape_cast %43 : vector<8x8xi1> to vector<1x8x8xi1>
    %117 = vector.broadcast %116 : vector<1x8x8xi1> to vector<2x8x8xi1>
    %118 = vector.broadcast %cst_47 : f32 to vector<2x8x8xf32>
    %119 = arith.select %117, %115, %118 : vector<2x8x8xi1>, vector<2x8x8xf32>
    %cst_48 = arith.constant dense<0xFF800000> : vector<2x8xf32>
    %120 = vector.multi_reduction <maximumf>, %119, %cst_48 [2] : vector<2x8x8xf32> to vector<2x8xf32>
    %121 = vector.shape_cast %120 : vector<2x8xf32> to vector<2x8x1xf32>
    %122 = vector.broadcast %121 : vector<2x8x1xf32> to vector<2x8x8xf32>
    %123 = arith.subf %119, %122 : vector<2x8x8xf32>
    %124 = math.exp %123 : vector<2x8x8xf32>
    %cst_49 = arith.constant dense<0.000000e+00> : vector<2x8xf32>
    %125 = vector.multi_reduction <add>, %124, %cst_49 [2] : vector<2x8x8xf32> to vector<2x8xf32>
    %126 = vector.shape_cast %125 : vector<2x8xf32> to vector<2x8x1xf32>
    %127 = tpu.reciprocal %126 {approx = true} : vector<2x8x1xf32> -> vector<2x8x1xf32>
    %128 = vector.broadcast %127 : vector<2x8x1xf32> to vector<2x8x8xf32>
    %129 = arith.mulf %124, %128 : vector<2x8x8xf32>
    "tpu.trace_start"() <{level = 10 : i32, message = "bqk,bkd->bqd"}> : () -> ()
    %cst_50 = arith.constant dense<0.000000e+00> : vector<2x8x8xf32>
    %130 = tpu.matmul %129, %114, %cst_50 {dimension_numbers = #tpu.dot_dimension_numbers<[2], [1], [1], [2], [0, 0, 0, 1, 1, 2], [0], [0]>} : vector<2x8x8xf32>, vector<2x8x8xf32>, vector<2x8x8xf32> -> vector<2x8x8xf32>
    "tpu.trace_stop"() : () -> ()
    %c0_51 = arith.constant 0 : index
    %c0_52 = arith.constant 0 : index
    %c24 = arith.constant 24 : index
    %131 = vector.load %arg22[%c0_51, %c0_52, %c24] : memref<2x8x32xf32, #tpu.memory_space<vmem>>, vector<2x8x8xf32>
    tpu.vector_store %arg22[%c0_51, %c0_52, %c24], %130 {strides = array<i32>} : memref<2x8x32xf32, #tpu.memory_space<vmem>>, vector<2x8x8xf32>,
    %c0_53 = arith.constant 0 : index
    %c0_54 = arith.constant 0 : index
    %c0_55 = arith.constant 0 : index
    %132 = vector.load %arg22[%c0_53, %c0_54, %c0_55] : memref<2x8x32xf32, #tpu.memory_space<vmem>>, vector<2x8x32xf32>
    %133 = vector.shape_cast %132 : vector<2x8x32xf32> to vector<16x32xf32>
    %c0_56 = arith.constant 0 : index
    %c0_57 = arith.constant 0 : index
    %c0_58 = arith.constant 0 : index
    %134 = vector.load %arg9[%c0_56, %c0_57, %c0_58] : memref<1x32x32xf32, #tpu.memory_space<vmem>>, vector<1x32x32xf32>
    %135 = vector.shape_cast %134 : vector<1x32x32xf32> to vector<32x32xf32>
    %cst_59 = arith.constant dense<0.000000e+00> : vector<16x32xf32>
    %136 = tpu.matmul %133, %135, %cst_59 {dimension_numbers = #tpu.dot_dimension_numbers<[1], [0], [0], [1], [0, 0, 1, 1], [], []>} : vector<16x32xf32>, vector<32x32xf32>, vector<16x32xf32> -> vector<16x32xf32>
    %c0_60 = arith.constant 0 : index
    %c0_61 = arith.constant 0 : index
    %c0_62 = arith.constant 0 : index
    %137 = vector.load %arg10[%c0_60, %c0_61, %c0_62] : memref<1x1x32xf32, #tpu.memory_space<vmem>>, vector<1x1x32xf32>
    %138 = vector.shape_cast %137 : vector<1x1x32xf32> to vector<1x32xf32>
    %139 = vector.broadcast %138 : vector<1x32xf32> to vector<16x32xf32>
    %140 = arith.addf %136, %139 : vector<16x32xf32>
    %141 = vector.shape_cast %140 : vector<16x32xf32> to vector<2x8x32xf32>
    %142 = arith.addf %3, %141 : vector<2x8x32xf32>
    %c0_63 = arith.constant 0 : index
    %c0_64 = arith.constant 0 : index
    %c0_65 = arith.constant 0 : index
    %143 = vector.load %arg11[%c0_63, %c0_64, %c0_65] : memref<1x1x32xf32, #tpu.memory_space<vmem>>, vector<1x1x32xf32>
    %144 = vector.shape_cast %143 : vector<1x1x32xf32> to vector<1x32xf32>
    %c0_66 = arith.constant 0 : index
    %c0_67 = arith.constant 0 : index
    %c0_68 = arith.constant 0 : index
    %145 = vector.load %arg12[%c0_66, %c0_67, %c0_68] : memref<1x1x32xf32, #tpu.memory_space<vmem>>, vector<1x1x32xf32>
    %146 = vector.shape_cast %145 : vector<1x1x32xf32> to vector<1x32xf32>
    %cst_69 = arith.constant dense<0.000000e+00> : vector<2x8xf32>
    %147 = vector.multi_reduction <add>, %142, %cst_69 [2] : vector<2x8x32xf32> to vector<2x8xf32>
    %148 = vector.shape_cast %147 : vector<2x8xf32> to vector<2x8x1xf32>
    %cst_70 = arith.constant 3.200000e+01 : f32
    %149 = vector.broadcast %cst_70 : f32 to vector<2x8x1xf32>
    %150 = arith.divf %148, %149 : vector<2x8x1xf32>
    %151 = vector.broadcast %150 : vector<2x8x1xf32> to vector<2x8x32xf32>
    %152 = arith.subf %142, %151 : vector<2x8x32xf32>
    %153 = arith.mulf %152, %152 : vector<2x8x32xf32>
    %cst_71 = arith.constant dense<0.000000e+00> : vector<2x8xf32>
    %154 = vector.multi_reduction <add>, %153, %cst_71 [2] : vector<2x8x32xf32> to vector<2x8xf32>
    %155 = vector.shape_cast %154 : vector<2x8xf32> to vector<2x8x1xf32>
    %cst_72 = arith.constant 3.200000e+01 : f32
    %156 = vector.broadcast %cst_72 : f32 to vector<2x8x1xf32>
    %157 = arith.divf %155, %156 : vector<2x8x1xf32>
    %158 = vector.broadcast %150 : vector<2x8x1xf32> to vector<2x8x32xf32>
    %159 = arith.subf %142, %158 : vector<2x8x32xf32>
    %cst_73 = arith.constant 9.99999974E-6 : f32
    %160 = vector.broadcast %cst_73 : f32 to vector<2x8x1xf32>
    %161 = arith.addf %157, %160 : vector<2x8x1xf32>
    %162 = math.rsqrt %161 : vector<2x8x1xf32>
    %163 = vector.broadcast %162 : vector<2x8x1xf32> to vector<2x8x32xf32>
    %164 = arith.mulf %159, %163 : vector<2x8x32xf32>
    %165 = vector.shape_cast %144 : vector<1x32xf32> to vector<1x1x32xf32>
    %166 = vector.broadcast %165 : vector<1x1x32xf32> to vector<2x8x32xf32>
    %167 = arith.mulf %164, %166 : vector<2x8x32xf32>
    %168 = vector.shape_cast %146 : vector<1x32xf32> to vector<1x1x32xf32>
    %169 = vector.broadcast %168 : vector<1x1x32xf32> to vector<2x8x32xf32>
    %170 = arith.addf %167, %169 : vector<2x8x32xf32>
    %171 = vector.shape_cast %170 : vector<2x8x32xf32> to vector<16x32xf32>
    %c0_74 = arith.constant 0 : index
    %c0_75 = arith.constant 0 : index
    %c0_76 = arith.constant 0 : index
    %172 = vector.load %arg13[%c0_74, %c0_75, %c0_76] : memref<1x32x128xf32, #tpu.memory_space<vmem>>, vector<1x32x128xf32>
    %173 = vector.shape_cast %172 : vector<1x32x128xf32> to vector<32x128xf32>
    %cst_77 = arith.constant dense<0.000000e+00> : vector<16x128xf32>
    %174 = tpu.matmul %171, %173, %cst_77 {dimension_numbers = #tpu.dot_dimension_numbers<[1], [0], [0], [1], [0, 0, 1, 1], [], []>} : vector<16x32xf32>, vector<32x128xf32>, vector<16x128xf32> -> vector<16x128xf32>
    %c0_78 = arith.constant 0 : index
    %c0_79 = arith.constant 0 : index
    %c0_80 = arith.constant 0 : index
    %175 = vector.load %arg14[%c0_78, %c0_79, %c0_80] : memref<1x1x128xf32, #tpu.memory_space<vmem>>, vector<1x1x128xf32>
    %176 = vector.shape_cast %175 : vector<1x1x128xf32> to vector<1x128xf32>
    %177 = vector.broadcast %176 : vector<1x128xf32> to vector<16x128xf32>
    %178 = arith.addf %174, %177 : vector<16x128xf32>
    %cst_81 = arith.constant 1.702000e+00 : f32
    %179 = vector.broadcast %cst_81 : f32 to vector<16x128xf32>
    %180 = arith.mulf %179, %178 : vector<16x128xf32>
    %181 = arith.negf %180 : vector<16x128xf32>
    %182 = math.exp %181 : vector<16x128xf32>
    %cst_82 = arith.constant 1.000000e+00 : f32
    %183 = vector.broadcast %cst_82 : f32 to vector<16x128xf32>
    %184 = arith.addf %183, %182 : vector<16x128xf32>
    %185 = arith.divf %183, %184 : vector<16x128xf32>
    %186 = arith.mulf %178, %185 : vector<16x128xf32>
    %c0_83 = arith.constant 0 : index
    %c0_84 = arith.constant 0 : index
    %c0_85 = arith.constant 0 : index
    %187 = vector.load %arg15[%c0_83, %c0_84, %c0_85] : memref<1x128x32xf32, #tpu.memory_space<vmem>>, vector<1x128x32xf32>
    %188 = vector.shape_cast %187 : vector<1x128x32xf32> to vector<128x32xf32>
    %cst_86 = arith.constant dense<0.000000e+00> : vector<16x32xf32>
    %189 = tpu.matmul %186, %188, %cst_86 {dimension_numbers = #tpu.dot_dimension_numbers<[1], [0], [0], [1], [0, 0, 1, 1], [], []>} : vector<16x128xf32>, vector<128x32xf32>, vector<16x32xf32> -> vector<16x32xf32>
    %c0_87 = arith.constant 0 : index
    %c0_88 = arith.constant 0 : index
    %c0_89 = arith.constant 0 : index
    %190 = vector.load %arg16[%c0_87, %c0_88, %c0_89] : memref<1x1x32xf32, #tpu.memory_space<vmem>>, vector<1x1x32xf32>
    %191 = vector.shape_cast %190 : vector<1x1x32xf32> to vector<1x32xf32>
    %192 = vector.broadcast %191 : vector<1x32xf32> to vector<16x32xf32>
    %193 = arith.addf %189, %192 : vector<16x32xf32>
    %194 = vector.shape_cast %193 : vector<16x32xf32> to vector<2x8x32xf32>
    %195 = arith.addf %142, %194 : vector<2x8x32xf32>
    %c0_90 = arith.constant 0 : index
    %c0_91 = arith.constant 0 : index
    %c0_92 = arith.constant 0 : index
    %196 = vector.load %arg21[%c0_90, %c0_91, %c0_92] : memref<2x8x32xf32, #tpu.memory_space<vmem>>, vector<2x8x32xf32>
    tpu.vector_store %arg21[%c0_90, %c0_91, %c0_92], %195 {strides = array<i32>} : memref<2x8x32xf32, #tpu.memory_space<vmem>>, vector<2x8x32xf32>,
    %c1_i32 = arith.constant 1 : i32
    %197 = arith.cmpi eq, %arg1, %c1_i32 : i32
    %198 = arith.extui %197 : i1 to i32
    %c0_i32_93 = arith.constant 0 : i32
    %199 = arith.cmpi ne, %198, %c0_i32_93 : i32
    scf.if %199 {
      %c2_i32 = arith.constant 2 : i32
      %200 = arith.muli %arg0, %c2_i32 : i32
      %c0_i32_94 = arith.constant 0 : i32
      %201 = arith.addi %200, %c0_i32_94 : i32
      %202 = arith.index_cast %201 : i32 to index
      %203 = memref.load %arg2[%202] : memref<2xi32, #tpu.memory_space<smem>>
      %204 = tpu.iota {dimensions = array<i32: 0>} : vector<8x1xi32>
      %205 = vector.broadcast %203 : i32 to vector<8x1xi32>
      %206 = arith.cmpi eq, %204, %205 : vector<8x1xi32>
      %207 = vector.extract_strided_slice %195 {offsets = [0, 0, 0], sizes = [1, 8, 32], strides = [1, 1, 1]} : vector<2x8x32xf32> to vector<1x8x32xf32>
      %208 = vector.shape_cast %207 : vector<1x8x32xf32> to vector<8x32xf32>
      %cst_95 = arith.constant 0.000000e+00 : f32
      %209 = vector.shape_cast %206 : vector<8x1xi1> to vector<8x1xi1>
      %210 = vector.broadcast %209 : vector<8x1xi1> to vector<8x32xi1>
      %211 = vector.broadcast %cst_95 : f32 to vector<8x32xf32>
      %212 = arith.select %210, %208, %211 : vector<8x32xi1>, vector<8x32xf32>
      %cst_96 = arith.constant dense<0.000000e+00> : vector<32xf32>
      %213 = vector.multi_reduction <add>, %212, %cst_96 [0] : vector<8x32xf32> to vector<32xf32>
      %214 = vector.shape_cast %213 : vector<32xf32> to vector<1x32xf32>
      %c1_i32_97 = arith.constant 1 : i32
      %215 = arith.addi %200, %c1_i32_97 : i32
      %216 = arith.index_cast %215 : i32 to index
      %217 = memref.load %arg2[%216] : memref<2xi32, #tpu.memory_space<smem>>
      %218 = tpu.iota {dimensions = array<i32: 0>} : vector<8x1xi32>
      %219 = vector.broadcast %217 : i32 to vector<8x1xi32>
      %220 = arith.cmpi eq, %218, %219 : vector<8x1xi32>
      %221 = vector.extract_strided_slice %195 {offsets = [1, 0, 0], sizes = [1, 8, 32], strides = [1, 1, 1]} : vector<2x8x32xf32> to vector<1x8x32xf32>
      %222 = vector.shape_cast %221 : vector<1x8x32xf32> to vector<8x32xf32>
      %cst_98 = arith.constant 0.000000e+00 : f32
      %223 = vector.shape_cast %220 : vector<8x1xi1> to vector<8x1xi1>
      %224 = vector.broadcast %223 : vector<8x1xi1> to vector<8x32xi1>
      %225 = vector.broadcast %cst_98 : f32 to vector<8x32xf32>
      %226 = arith.select %224, %222, %225 : vector<8x32xi1>, vector<8x32xf32>
      %cst_99 = arith.constant dense<0.000000e+00> : vector<32xf32>
      %227 = vector.multi_reduction <add>, %226, %cst_99 [0] : vector<8x32xf32> to vector<32xf32>
      %228 = vector.shape_cast %227 : vector<32xf32> to vector<1x32xf32>
      %229 = tpu.concatenate %214, %228 in 0 : vector<1x32xf32>, vector<1x32xf32> -> vector<2x32xf32>
      %c0_100 = arith.constant 0 : index
      %c0_101 = arith.constant 0 : index
      %230 = vector.load %arg17[%c0_100, %c0_101] : memref<1x32xf32, #tpu.memory_space<vmem>>, vector<1x32xf32>
      %c0_102 = arith.constant 0 : index
      %c0_103 = arith.constant 0 : index
      %231 = vector.load %arg18[%c0_102, %c0_103] : memref<1x32xf32, #tpu.memory_space<vmem>>, vector<1x32xf32>
      %cst_104 = arith.constant dense<0.000000e+00> : vector<2xf32>
      %232 = vector.multi_reduction <add>, %229, %cst_104 [1] : vector<2x32xf32> to vector<2xf32>
      %233 = vector.shape_cast %232 : vector<2xf32> to vector<2x1xf32>
      %cst_105 = arith.constant 3.200000e+01 : f32
      %234 = vector.broadcast %cst_105 : f32 to vector<2x1xf32>
      %235 = arith.divf %233, %234 : vector<2x1xf32>
      %236 = vector.broadcast %235 : vector<2x1xf32> to vector<2x32xf32>
      %237 = arith.subf %229, %236 : vector<2x32xf32>
      %238 = arith.mulf %237, %237 : vector<2x32xf32>
      %cst_106 = arith.constant dense<0.000000e+00> : vector<2xf32>
      %239 = vector.multi_reduction <add>, %238, %cst_106 [1] : vector<2x32xf32> to vector<2xf32>
      %240 = vector.shape_cast %239 : vector<2xf32> to vector<2x1xf32>
      %cst_107 = arith.constant 3.200000e+01 : f32
      %241 = vector.broadcast %cst_107 : f32 to vector<2x1xf32>
      %242 = arith.divf %240, %241 : vector<2x1xf32>
      %243 = vector.broadcast %235 : vector<2x1xf32> to vector<2x32xf32>
      %244 = arith.subf %229, %243 : vector<2x32xf32>
      %cst_108 = arith.constant 9.99999974E-6 : f32
      %245 = vector.broadcast %cst_108 : f32 to vector<2x1xf32>
      %246 = arith.addf %242, %245 : vector<2x1xf32>
      %247 = math.rsqrt %246 : vector<2x1xf32>
      %248 = vector.broadcast %247 : vector<2x1xf32> to vector<2x32xf32>
      %249 = arith.mulf %244, %248 : vector<2x32xf32>
      %250 = vector.broadcast %230 : vector<1x32xf32> to vector<2x32xf32>
      %251 = arith.mulf %249, %250 : vector<2x32xf32>
      %252 = vector.broadcast %231 : vector<1x32xf32> to vector<2x32xf32>
      %253 = arith.addf %251, %252 : vector<2x32xf32>
      %c0_109 = arith.constant 0 : index
      %c0_110 = arith.constant 0 : index
      %254 = vector.load %arg19[%c0_109, %c0_110] : memref<32x16xf32, #tpu.memory_space<vmem>>, vector<32x16xf32>
      %cst_111 = arith.constant dense<0.000000e+00> : vector<2x16xf32>
      %255 = tpu.matmul %253, %254, %cst_111 {dimension_numbers = #tpu.dot_dimension_numbers<[1], [0], [0], [1], [0, 0, 1, 1], [], []>} : vector<2x32xf32>, vector<32x16xf32>, vector<2x16xf32> -> vector<2x16xf32>
      %256 = vector.shape_cast %255 : vector<2x16xf32> to vector<2x1x16xf32>
      %c0_112 = arith.constant 0 : index
      %c0_113 = arith.constant 0 : index
      %c0_114 = arith.constant 0 : index
      %257 = vector.load %arg20[%c0_112, %c0_113, %c0_114] : memref<2x1x16xf32, #tpu.memory_space<vmem>>, vector<2x1x16xf32>
      tpu.vector_store %arg20[%c0_112, %c0_113, %c0_114], %256 {strides = array<i32>} : memref<2x1x16xf32, #tpu.memory_space<vmem>>, vector<2x1x16xf32>,
    } else {
    }
    return
  }
  func.func @transform_0(%arg0: i32, %arg1: i32, %arg2: memref<2xi32, #tpu.memory_space<smem>>) -> (i32, i32, i32) {
    %c0_i32 = arith.constant 0 : i32
    %c0_i32_0 = arith.constant 0 : i32
    %c0_i32_1 = arith.constant 0 : i32
    return %arg0, %c0_i32, %c0_i32_0 : i32, i32, i32
  }
  func.func @transform_1(%arg0: i32, %arg1: i32, %arg2: memref<2xi32, #tpu.memory_space<smem>>) -> (i32, i32) {
    %c0_i32 = arith.constant 0 : i32
    %c0_i32_0 = arith.constant 0 : i32
    %c0_i32_1 = arith.constant 0 : i32
    return %c0_i32, %c0_i32_0 : i32, i32
  }
  func.func @transform_2(%arg0: i32, %arg1: i32, %arg2: memref<2xi32, #tpu.memory_space<smem>>) -> (i32, i32, i32) {
    %c0_i32 = arith.constant 0 : i32
    %c0_i32_0 = arith.constant 0 : i32
    %c0_i32_1 = arith.constant 0 : i32
    return %arg1, %c0_i32, %c0_i32_0 : i32, i32, i32
  }
  func.func @transform_3(%arg0: i32, %arg1: i32, %arg2: memref<2xi32, #tpu.memory_space<smem>>) -> (i32, i32, i32) {
    %c0_i32 = arith.constant 0 : i32
    %c0_i32_0 = arith.constant 0 : i32
    %c0_i32_1 = arith.constant 0 : i32
    return %arg1, %c0_i32, %c0_i32_0 : i32, i32, i32
  }
  func.func @transform_4(%arg0: i32, %arg1: i32, %arg2: memref<2xi32, #tpu.memory_space<smem>>) -> (i32, i32, i32) {
    %c0_i32 = arith.constant 0 : i32
    %c0_i32_0 = arith.constant 0 : i32
    %c0_i32_1 = arith.constant 0 : i32
    return %arg1, %c0_i32, %c0_i32_0 : i32, i32, i32
  }
  func.func @transform_5(%arg0: i32, %arg1: i32, %arg2: memref<2xi32, #tpu.memory_space<smem>>) -> (i32, i32, i32) {
    %c0_i32 = arith.constant 0 : i32
    %c0_i32_0 = arith.constant 0 : i32
    %c0_i32_1 = arith.constant 0 : i32
    return %arg1, %c0_i32, %c0_i32_0 : i32, i32, i32
  }
  func.func @transform_6(%arg0: i32, %arg1: i32, %arg2: memref<2xi32, #tpu.memory_space<smem>>) -> (i32, i32, i32) {
    %c0_i32 = arith.constant 0 : i32
    %c0_i32_0 = arith.constant 0 : i32
    %c0_i32_1 = arith.constant 0 : i32
    return %arg1, %c0_i32, %c0_i32_0 : i32, i32, i32
  }
  func.func @transform_7(%arg0: i32, %arg1: i32, %arg2: memref<2xi32, #tpu.memory_space<smem>>) -> (i32, i32, i32) {
    %c0_i32 = arith.constant 0 : i32
    %c0_i32_0 = arith.constant 0 : i32
    %c0_i32_1 = arith.constant 0 : i32
    return %arg1, %c0_i32, %c0_i32_0 : i32, i32, i32
  }
  func.func @transform_8(%arg0: i32, %arg1: i32, %arg2: memref<2xi32, #tpu.memory_space<smem>>) -> (i32, i32, i32) {
    %c0_i32 = arith.constant 0 : i32
    %c0_i32_0 = arith.constant 0 : i32
    %c0_i32_1 = arith.constant 0 : i32
    return %arg1, %c0_i32, %c0_i32_0 : i32, i32, i32
  }
  func.func @transform_9(%arg0: i32, %arg1: i32, %arg2: memref<2xi32, #tpu.memory_space<smem>>) -> (i32, i32, i32) {
    %c0_i32 = arith.constant 0 : i32
    %c0_i32_0 = arith.constant 0 : i32
    %c0_i32_1 = arith.constant 0 : i32
    return %arg1, %c0_i32, %c0_i32_0 : i32, i32, i32
  }
  func.func @transform_10(%arg0: i32, %arg1: i32, %arg2: memref<2xi32, #tpu.memory_space<smem>>) -> (i32, i32, i32) {
    %c0_i32 = arith.constant 0 : i32
    %c0_i32_0 = arith.constant 0 : i32
    %c0_i32_1 = arith.constant 0 : i32
    return %arg1, %c0_i32, %c0_i32_0 : i32, i32, i32
  }
  func.func @transform_11(%arg0: i32, %arg1: i32, %arg2: memref<2xi32, #tpu.memory_space<smem>>) -> (i32, i32, i32) {
    %c0_i32 = arith.constant 0 : i32
    %c0_i32_0 = arith.constant 0 : i32
    %c0_i32_1 = arith.constant 0 : i32
    return %arg1, %c0_i32, %c0_i32_0 : i32, i32, i32
  }
  func.func @transform_12(%arg0: i32, %arg1: i32, %arg2: memref<2xi32, #tpu.memory_space<smem>>) -> (i32, i32, i32) {
    %c0_i32 = arith.constant 0 : i32
    %c0_i32_0 = arith.constant 0 : i32
    %c0_i32_1 = arith.constant 0 : i32
    return %arg1, %c0_i32, %c0_i32_0 : i32, i32, i32
  }
  func.func @transform_13(%arg0: i32, %arg1: i32, %arg2: memref<2xi32, #tpu.memory_space<smem>>) -> (i32, i32, i32) {
    %c0_i32 = arith.constant 0 : i32
    %c0_i32_0 = arith.constant 0 : i32
    %c0_i32_1 = arith.constant 0 : i32
    return %arg1, %c0_i32, %c0_i32_0 : i32, i32, i32
  }
  func.func @transform_14(%arg0: i32, %arg1: i32, %arg2: memref<2xi32, #tpu.memory_space<smem>>) -> (i32, i32) {
    %c0_i32 = arith.constant 0 : i32
    %c0_i32_0 = arith.constant 0 : i32
    %c0_i32_1 = arith.constant 0 : i32
    return %c0_i32, %c0_i32_0 : i32, i32
  }
  func.func @transform_15(%arg0: i32, %arg1: i32, %arg2: memref<2xi32, #tpu.memory_space<smem>>) -> (i32, i32) {
    %c0_i32 = arith.constant 0 : i32
    %c0_i32_0 = arith.constant 0 : i32
    %c0_i32_1 = arith.constant 0 : i32
    return %c0_i32, %c0_i32_0 : i32, i32
  }
  func.func @transform_16(%arg0: i32, %arg1: i32, %arg2: memref<2xi32, #tpu.memory_space<smem>>) -> (i32, i32) {
    %c0_i32 = arith.constant 0 : i32
    %c0_i32_0 = arith.constant 0 : i32
    %c0_i32_1 = arith.constant 0 : i32
    return %c0_i32, %c0_i32_0 : i32, i32
  }
  func.func @transform_17(%arg0: i32, %arg1: i32, %arg2: memref<2xi32, #tpu.memory_space<smem>>) -> (i32, i32, i32) {
    %c0_i32 = arith.constant 0 : i32
    %c0_i32_0 = arith.constant 0 : i32
    %c0_i32_1 = arith.constant 0 : i32
    return %arg0, %c0_i32, %c0_i32_0 : i32, i32, i32
  }
}

</mosaic_0001>

<llo_original>
// kernel: tpu_custom_call.1
$region0: #{tpu_custom_call.1}
  #allocation0 [shape = 'u32[]', space=smem, size = 0x4, offset = 0x4, fixed_abs, tag = 'smem constant byte address 0x4 - core index']
  #allocation1 [shape = 'u32[144,128]{1,0:T(1,128)}', space=vmem, size = 0x12000, scoped, tag = 'internal scratch']
  #allocation2 [shape = 'f32[2,8,32]{2,1,0:T(8,128)}', space=vmem, size = 0x2000, scoped, tag = 'scratch operand']
  #allocation3 [shape = 'f32[2,8,32]{2,1,0:T(8,128)}', space=vmem, size = 0x2000, scoped, tag = 'scratch operand']
  #allocation4 [shape = 's32[1]{0}', space=sflag, size = 0x4, scoped, tag = 'scoped memory for tpu_custom_call.1']
  #allocation5 [shape = 'u8[512]{0}', space=smem, size = 0x200, scoped, tag = 'prefetched SMEM operand 0']
  %s0 = inlined_call_operand.vmem [shape: s32[2], index: 0, kind: input, shape index: {}]
  %s1 = inlined_call_operand.vmem [shape: f32[2,8,32], index: 1, kind: input, shape index: {}]
  %s2 = inlined_call_operand.vmem [shape: f32[8,32], index: 2, kind: input, shape index: {}]
  %s3 = inlined_call_operand.vmem [shape: f32[2,1,32], index: 3, kind: input, shape index: {}]
  %s4 = inlined_call_operand.vmem [shape: f32[2,1,32], index: 4, kind: input, shape index: {}]
  %s5 = inlined_call_operand.vmem [shape: f32[2,32,96], index: 5, kind: input, shape index: {}]
  %s6 = inlined_call_operand.vmem [shape: f32[2,1,96], index: 6, kind: input, shape index: {}]
  %s7 = inlined_call_operand.vmem [shape: f32[2,32,32], index: 7, kind: input, shape index: {}]
  %s8 = inlined_call_operand.vmem [shape: f32[2,1,32], index: 8, kind: input, shape index: {}]
  %s9 = inlined_call_operand.vmem [shape: f32[2,1,32], index: 9, kind: input, shape index: {}]
  %s10 = inlined_call_operand.vmem [shape: f32[2,1,32], index: 10, kind: input, shape index: {}]
  %s11 = inlined_call_operand.vmem [shape: f32[2,32,128], index: 11, kind: input, shape index: {}]
  %s12 = inlined_call_operand.vmem [shape: f32[2,1,128], index: 12, kind: input, shape index: {}]
  %s13 = inlined_call_operand.vmem [shape: f32[2,128,32], index: 13, kind: input, shape index: {}]
  %s14 = inlined_call_operand.vmem [shape: f32[2,1,32], index: 14, kind: input, shape index: {}]
  %s15 = inlined_call_operand.vmem [shape: f32[1,32], index: 15, kind: input, shape index: {}]
  %s16 = inlined_call_operand.vmem [shape: f32[1,32], index: 16, kind: input, shape index: {}]
  %s17 = inlined_call_operand.vmem [shape: f32[32,16], index: 17, kind: input, shape index: {}]
  %s18 = inlined_call_operand.hbm [shape: f32[2,1,16], index: 18, kind: output, shape index: {}]
  %s19 = sld [smem:[#allocation0]]
  $region109: #{tpu_custom_call.1} parent=0
    _
  %s21 = ssub.s32 1, %s19
  %s22 = scalar_select 0, %s21, %s19
  %s23 = sshll.u32 %s0, 4
  %s24 = int_to_ptr.vmem [resolvable:$true] %s23
  %26 = dma.vmem_to_smem %s24, 16, [#allocation5], [#allocation4]
  %27 = dma.done [#allocation4], 16
  %28 = sfence
  $region1: #{tpu_custom_call.1} parent=0
    #allocation6 [shape = 'u8[1024]{0}', space=vmem, size = 0x400, scoped, tag = 'output window, operand 0, single buffered']
    #allocation7 [shape = 's32[2]{0}', space=sflag, size = 0x8, scoped, tag = 'scoped memory for tpu_custom_call.1']
    %29 = vsyncpa [#allocation7], 0
    loop: start=0, step=1, limit=4
    $region2: #{tpu_custom_call.1} parent=1 // loop_pre_header
      _
    $region3: #{tpu_custom_call.1} parent=1 // loop_header
      %s31 = sphi 0, %s35
      %p32 = scmp.ge.s32.totalorder %s31, 4
      %s38 = sphi 0, %s50
      %s39 = sphi 0, %s46
      %s40 = sphi 0, %s38
      %s41 = sphi 0, %s39
      %s42 = sphi 0, %s40
      %s43 = sphi 0, %s41
      %s53 = sphi 0, %s55
      %s56 = sphi 0, %s53
      %s57 = sphi 0, %s56
      %s73 = sphi 0, %s57
      %s77 = sphi 0, %s77
      %s79 = sphi 0, %s77
      %s80 = sphi 0, %s79
      %s94 = sphi 0, %s80
      %s100 = sphi 0, %s102
      %s103 = sphi 0, %s100
      %s104 = sphi 0, %s103
      %s120 = sphi 0, %s104
      %s126 = sphi 0, %s128
      %s129 = sphi 0, %s126
      %s130 = sphi 0, %s129
      %s146 = sphi 0, %s130
      %s152 = sphi 0, %s154
      %s155 = sphi 0, %s152
      %s156 = sphi 0, %s155
      %s172 = sphi 0, %s156
      %s178 = sphi 0, %s180
      %s181 = sphi 0, %s178
      %s182 = sphi 0, %s181
      %s198 = sphi 0, %s182
      %s204 = sphi 0, %s206
      %s207 = sphi 0, %s204
      %s208 = sphi 0, %s207
      %s224 = sphi 0, %s208
      %s230 = sphi 0, %s232
      %s233 = sphi 0, %s230
      %s234 = sphi 0, %s233
      %s250 = sphi 0, %s234
      %s256 = sphi 0, %s258
      %s259 = sphi 0, %s256
      %s260 = sphi 0, %s259
      %s276 = sphi 0, %s260
      %s282 = sphi 0, %s284
      %s285 = sphi 0, %s282
      %s286 = sphi 0, %s285
      %s302 = sphi 0, %s286
      %s308 = sphi 0, %s310
      %s311 = sphi 0, %s308
      %s312 = sphi 0, %s311
      %s328 = sphi 0, %s312
      %s334 = sphi 0, %s336
      %s337 = sphi 0, %s334
      %s338 = sphi 0, %s337
      %s354 = sphi 0, %s338
      %s360 = sphi 0, %s362
      %s363 = sphi 0, %s360
      %s364 = sphi 0, %s363
      %s380 = sphi 0, %s364
      %s386 = sphi 0, %s388
      %s389 = sphi 0, %s386
      %s390 = sphi 0, %s389
      %s406 = sphi 0, %s390
      %s410 = sphi 0, %s410
      %s412 = sphi 0, %s410
      %s413 = sphi 0, %s412
      %s427 = sphi 0, %s413
      %s431 = sphi 0, %s431
      %s433 = sphi 0, %s431
      %s434 = sphi 0, %s433
      %s448 = sphi 0, %s434
      %s452 = sphi 0, %s452
      %s454 = sphi 0, %s452
      %s455 = sphi 0, %s454
      %s469 = sphi 0, %s455
      %s475 = sphi 0, %s477
      %s478 = sphi 0, %s475
      %s479 = sphi 0, %s478
      %s495 = sphi 0, %s479
    $region4: #{tpu_custom_call.1} parent=1 // loop_header_branch
      %34 = sbr.rel (%p32) target = $region8
    $region5: #{tpu_custom_call.1} parent=1 // loop_body
      %s36 = ssub.s32 %s31, 1
      %s37 = ssub.s32 %s31, 2
      %s44 = sadd.s32 1, %s39
      %p45 = scmp.ge.s32.totalorder %s44, 2
      %s46 = scalar_select %p45, 0, %s44
      %s47 = sadd.s32 1, %s38
      %s48 = scalar_select %p45, %s47, %s38
      %p49 = scmp.ge.s32.totalorder %s48, 1
      %s50 = scalar_select %p49, 0, %s48
      %s51 = ssub.s32 %s38, %s50
      %p52 = scmp.eq.s32.totalorder %s51, 0
      %s54 = sadd.s32 %s53, 1
      %s55 = scalar_select %p52, %s53, %s54
      %p58 = pneg %p52
      %p59 = scmp.eq.s32.totalorder %s31, 1
      %p60 = por %p58, %p59
      %p61 = scmp.ne.s32.totalorder %s53, %s56
      %p62 = scmp.eq.s32.totalorder %s31, 0
      %p63 = por %p61, %p62
      %p64 = scmp.ne.s32.totalorder %s53, %s56
      %p65 = scmp.eq.s32.totalorder %s36, 1
      %p66 = por %p64, %p65
      %p67 = scmp.ne.s32.totalorder %s56, %s57
      %p68 = scmp.eq.s32.totalorder %s36, 0
      %p69 = por %p67, %p68
      %p70 = scmp.ne.s32.totalorder %s56, %s57
      %p71 = scmp.eq.s32.totalorder %s37, 1
      %p72 = por %p70, %p71
      %p74 = scmp.ne.s32.totalorder %s57, %s73
      %p75 = scmp.eq.s32.totalorder %s37, 0
      %p76 = por %p74, %p75
      %s78 = sadd.s32 %s77, 1
      %p81 = scmp.eq.s32.totalorder %s31, 1
      %p82 = scmp.ne.s32.totalorder %s77, %s79
      %p83 = scmp.eq.s32.totalorder %s31, 0
      %p84 = por %p82, %p83
      %p85 = scmp.ne.s32.totalorder %s77, %s79
      %p86 = scmp.eq.s32.totalorder %s36, 1
      %p87 = por %p85, %p86
      %p88 = scmp.ne.s32.totalorder %s79, %s80
      %p89 = scmp.eq.s32.totalorder %s36, 0
      %p90 = por %p88, %p89
      %p91 = scmp.ne.s32.totalorder %s79, %s80
      %p92 = scmp.eq.s32.totalorder %s37, 1
      %p93 = por %p91, %p92
      %p95 = scmp.ne.s32.totalorder %s80, %s94
      %p96 = scmp.eq.s32.totalorder %s37, 0
      %p97 = por %p95, %p96
      %s98 = ssub.s32 %s39, %s46
      %p99 = scmp.eq.s32.totalorder %s98, 0
      %s101 = sadd.s32 %s100, 1
      %s102 = scalar_select %p99, %s100, %s101
      %p105 = pneg %p99
      %p106 = scmp.eq.s32.totalorder %s31, 1
      %p107 = por %p105, %p106
      %p108 = scmp.ne.s32.totalorder %s100, %s103
      %p109 = scmp.eq.s32.totalorder %s31, 0
      %p110 = por %p108, %p109
      %p111 = scmp.ne.s32.totalorder %s100, %s103
      %p112 = scmp.eq.s32.totalorder %s36, 1
      %p113 = por %p111, %p112
      %p114 = scmp.ne.s32.totalorder %s103, %s104
      %p115 = scmp.eq.s32.totalorder %s36, 0
      %p116 = por %p114, %p115
      %p117 = scmp.ne.s32.totalorder %s103, %s104
      %p118 = scmp.eq.s32.totalorder %s37, 1
      %p119 = por %p117, %p118
      %p121 = scmp.ne.s32.totalorder %s104, %s120
      %p122 = scmp.eq.s32.totalorder %s37, 0
      %p123 = por %p121, %p122
      %s124 = ssub.s32 %s39, %s46
      %p125 = scmp.eq.s32.totalorder %s124, 0
      %s127 = sadd.s32 %s126, 1
      %s128 = scalar_select %p125, %s126, %s127
      %p131 = pneg %p125
      %p132 = scmp.eq.s32.totalorder %s31, 1
      %p133 = por %p131, %p132
      %p134 = scmp.ne.s32.totalorder %s126, %s129
      %p135 = scmp.eq.s32.totalorder %s31, 0
      %p136 = por %p134, %p135
      %p137 = scmp.ne.s32.totalorder %s126, %s129
      %p138 = scmp.eq.s32.totalorder %s36, 1
      %p139 = por %p137, %p138
      %p140 = scmp.ne.s32.totalorder %s129, %s130
      %p141 = scmp.eq.s32.totalorder %s36, 0
      %p142 = por %p140, %p141
      %p143 = scmp.ne.s32.totalorder %s129, %s130
      %p144 = scmp.eq.s32.totalorder %s37, 1
      %p145 = por %p143, %p144
      %p147 = scmp.ne.s32.totalorder %s130, %s146
      %p148 = scmp.eq.s32.totalorder %s37, 0
      %p149 = por %p147, %p148
      %s150 = ssub.s32 %s39, %s46
      %p151 = scmp.eq.s32.totalorder %s150, 0
      %s153 = sadd.s32 %s152, 1
      %s154 = scalar_select %p151, %s152, %s153
      %p157 = pneg %p151
      %p158 = scmp.eq.s32.totalorder %s31, 1
      %p159 = por %p157, %p158
      %p160 = scmp.ne.s32.totalorder %s152, %s155
      %p161 = scmp.eq.s32.totalorder %s31, 0
      %p162 = por %p160, %p161
      %p163 = scmp.ne.s32.totalorder %s152, %s155
      %p164 = scmp.eq.s32.totalorder %s36, 1
      %p165 = por %p163, %p164
      %p166 = scmp.ne.s32.totalorder %s155, %s156
      %p167 = scmp.eq.s32.totalorder %s36, 0
      %p168 = por %p166, %p167
      %p169 = scmp.ne.s32.totalorder %s155, %s156
      %p170 = scmp.eq.s32.totalorder %s37, 1
      %p171 = por %p169, %p170
      %p173 = scmp.ne.s32.totalorder %s156, %s172
      %p174 = scmp.eq.s32.totalorder %s37, 0
      %p175 = por %p173, %p174
      %s176 = ssub.s32 %s39, %s46
      %p177 = scmp.eq.s32.totalorder %s176, 0
      %s179 = sadd.s32 %s178, 1
      %s180 = scalar_select %p177, %s178, %s179
      %p183 = pneg %p177
      %p184 = scmp.eq.s32.totalorder %s31, 1
      %p185 = por %p183, %p184
      %p186 = scmp.ne.s32.totalorder %s178, %s181
      %p187 = scmp.eq.s32.totalorder %s31, 0
      %p188 = por %p186, %p187
      %p189 = scmp.ne.s32.totalorder %s178, %s181
      %p190 = scmp.eq.s32.totalorder %s36, 1
      %p191 = por %p189, %p190
      %p192 = scmp.ne.s32.totalorder %s181, %s182
      %p193 = scmp.eq.s32.totalorder %s36, 0
      %p194 = por %p192, %p193
      %p195 = scmp.ne.s32.totalorder %s181, %s182
      %p196 = scmp.eq.s32.totalorder %s37, 1
      %p197 = por %p195, %p196
      %p199 = scmp.ne.s32.totalorder %s182, %s198
      %p200 = scmp.eq.s32.totalorder %s37, 0
      %p201 = por %p199, %p200
      %s202 = ssub.s32 %s39, %s46
      %p203 = scmp.eq.s32.totalorder %s202, 0
      %s205 = sadd.s32 %s204, 1
      %s206 = scalar_select %p203, %s204, %s205
      %p209 = pneg %p203
      %p210 = scmp.eq.s32.totalorder %s31, 1
      %p211 = por %p209, %p210
      %p212 = scmp.ne.s32.totalorder %s204, %s207
      %p213 = scmp.eq.s32.totalorder %s31, 0
      %p214 = por %p212, %p213
      %p215 = scmp.ne.s32.totalorder %s204, %s207
      %p216 = scmp.eq.s32.totalorder %s36, 1
      %p217 = por %p215, %p216
      %p218 = scmp.ne.s32.totalorder %s207, %s208
      %p219 = scmp.eq.s32.totalorder %s36, 0
      %p220 = por %p218, %p219
      %p221 = scmp.ne.s32.totalorder %s207, %s208
      %p222 = scmp.eq.s32.totalorder %s37, 1
      %p223 = por %p221, %p222
      %p225 = scmp.ne.s32.totalorder %s208, %s224
      %p226 = scmp.eq.s32.totalorder %s37, 0
      %p227 = por %p225, %p226
      %s228 = ssub.s32 %s39, %s46
      %p229 = scmp.eq.s32.totalorder %s228, 0
      %s231 = sadd.s32 %s230, 1
      %s232 = scalar_select %p229, %s230, %s231
      %p235 = pneg %p229
      %p236 = scmp.eq.s32.totalorder %s31, 1
      %p237 = por %p235, %p236
      %p238 = scmp.ne.s32.totalorder %s230, %s233
      %p239 = scmp.eq.s32.totalorder %s31, 0
      %p240 = por %p238, %p239
      %p241 = scmp.ne.s32.totalorder %s230, %s233
      %p242 = scmp.eq.s32.totalorder %s36, 1
      %p243 = por %p241, %p242
      %p244 = scmp.ne.s32.totalorder %s233, %s234
      %p245 = scmp.eq.s32.totalorder %s36, 0
      %p246 = por %p244, %p245
      %p247 = scmp.ne.s32.totalorder %s233, %s234
      %p248 = scmp.eq.s32.totalorder %s37, 1
      %p249 = por %p247, %p248
      %p251 = scmp.ne.s32.totalorder %s234, %s250
      %p252 = scmp.eq.s32.totalorder %s37, 0
      %p253 = por %p251, %p252
      %s254 = ssub.s32 %s39, %s46
      %p255 = scmp.eq.s32.totalorder %s254, 0
      %s257 = sadd.s32 %s256, 1
      %s258 = scalar_select %p255, %s256, %s257
      %p261 = pneg %p255
      %p262 = scmp.eq.s32.totalorder %s31, 1
      %p263 = por %p261, %p262
      %p264 = scmp.ne.s32.totalorder %s256, %s259
      %p265 = scmp.eq.s32.totalorder %s31, 0
      %p266 = por %p264, %p265
      %p267 = scmp.ne.s32.totalorder %s256, %s259
      %p268 = scmp.eq.s32.totalorder %s36, 1
      %p269 = por %p267, %p268
      %p270 = scmp.ne.s32.totalorder %s259, %s260
      %p271 = scmp.eq.s32.totalorder %s36, 0
      %p272 = por %p270, %p271
      %p273 = scmp.ne.s32.totalorder %s259, %s260
      %p274 = scmp.eq.s32.totalorder %s37, 1
      %p275 = por %p273, %p274
      %p277 = scmp.ne.s32.totalorder %s260, %s276
      %p278 = scmp.eq.s32.totalorder %s37, 0
      %p279 = por %p277, %p278
      %s280 = ssub.s32 %s39, %s46
      %p281 = scmp.eq.s32.totalorder %s280, 0
      %s283 = sadd.s32 %s282, 1
      %s284 = scalar_select %p281, %s282, %s283
      %p287 = pneg %p281
      %p288 = scmp.eq.s32.totalorder %s31, 1
      %p289 = por %p287, %p288
      %p290 = scmp.ne.s32.totalorder %s282, %s285
      %p291 = scmp.eq.s32.totalorder %s31, 0
      %p292 = por %p290, %p291
      %p293 = scmp.ne.s32.totalorder %s282, %s285
      %p294 = scmp.eq.s32.totalorder %s36, 1
      %p295 = por %p293, %p294
      %p296 = scmp.ne.s32.totalorder %s285, %s286
      %p297 = scmp.eq.s32.totalorder %s36, 0
      %p298 = por %p296, %p297
      %p299 = scmp.ne.s32.totalorder %s285, %s286
      %p300 = scmp.eq.s32.totalorder %s37, 1
      %p301 = por %p299, %p300
      %p303 = scmp.ne.s32.totalorder %s286, %s302
      %p304 = scmp.eq.s32.totalorder %s37, 0
      %p305 = por %p303, %p304
      %s306 = ssub.s32 %s39, %s46
      %p307 = scmp.eq.s32.totalorder %s306, 0
      %s309 = sadd.s32 %s308, 1
      %s310 = scalar_select %p307, %s308, %s309
      %p313 = pneg %p307
      %p314 = scmp.eq.s32.totalorder %s31, 1
      %p315 = por %p313, %p314
      %p316 = scmp.ne.s32.totalorder %s308, %s311
      %p317 = scmp.eq.s32.totalorder %s31, 0
      %p318 = por %p316, %p317
      %p319 = scmp.ne.s32.totalorder %s308, %s311
      %p320 = scmp.eq.s32.totalorder %s36, 1
      %p321 = por %p319, %p320
      %p322 = scmp.ne.s32.totalorder %s311, %s312
      %p323 = scmp.eq.s32.totalorder %s36, 0
      %p324 = por %p322, %p323
      %p325 = scmp.ne.s32.totalorder %s311, %s312
      %p326 = scmp.eq.s32.totalorder %s37, 1
      %p327 = por %p325, %p326
      %p329 = scmp.ne.s32.totalorder %s312, %s328
      %p330 = scmp.eq.s32.totalorder %s37, 0
      %p331 = por %p329, %p330
      %s332 = ssub.s32 %s39, %s46
      %p333 = scmp.eq.s32.totalorder %s332, 0
      %s335 = sadd.s32 %s334, 1
      %s336 = scalar_select %p333, %s334, %s335
      %p339 = pneg %p333
      %p340 = scmp.eq.s32.totalorder %s31, 1
      %p341 = por %p339, %p340
      %p342 = scmp.ne.s32.totalorder %s334, %s337
      %p343 = scmp.eq.s32.totalorder %s31, 0
      %p344 = por %p342, %p343
      %p345 = scmp.ne.s32.totalorder %s334, %s337
      %p346 = scmp.eq.s32.totalorder %s36, 1
      %p347 = por %p345, %p346
      %p348 = scmp.ne.s32.totalorder %s337, %s338
      %p349 = scmp.eq.s32.totalorder %s36, 0
      %p350 = por %p348, %p349
      %p351 = scmp.ne.s32.totalorder %s337, %s338
      %p352 = scmp.eq.s32.totalorder %s37, 1
      %p353 = por %p351, %p352
      %p355 = scmp.ne.s32.totalorder %s338, %s354
      %p356 = scmp.eq.s32.totalorder %s37, 0
      %p357 = por %p355, %p356
      %s358 = ssub.s32 %s39, %s46
      %p359 = scmp.eq.s32.totalorder %s358, 0
      %s361 = sadd.s32 %s360, 1
      %s362 = scalar_select %p359, %s360, %s361
      %p365 = pneg %p359
      %p366 = scmp.eq.s32.totalorder %s31, 1
      %p367 = por %p365, %p366
      %p368 = scmp.ne.s32.totalorder %s360, %s363
      %p369 = scmp.eq.s32.totalorder %s31, 0
      %p370 = por %p368, %p369
      %p371 = scmp.ne.s32.totalorder %s360, %s363
      %p372 = scmp.eq.s32.totalorder %s36, 1
      %p373 = por %p371, %p372
      %p374 = scmp.ne.s32.totalorder %s363, %s364
      %p375 = scmp.eq.s32.totalorder %s36, 0
      %p376 = por %p374, %p375
      %p377 = scmp.ne.s32.totalorder %s363, %s364
      %p378 = scmp.eq.s32.totalorder %s37, 1
      %p379 = por %p377, %p378
      %p381 = scmp.ne.s32.totalorder %s364, %s380
      %p382 = scmp.eq.s32.totalorder %s37, 0
      %p383 = por %p381, %p382
      %s384 = ssub.s32 %s39, %s46
      %p385 = scmp.eq.s32.totalorder %s384, 0
      %s387 = sadd.s32 %s386, 1
      %s388 = scalar_select %p385, %s386, %s387
      %p391 = pneg %p385
      %p392 = scmp.eq.s32.totalorder %s31, 1
      %p393 = por %p391, %p392
      %p394 = scmp.ne.s32.totalorder %s386, %s389
      %p395 = scmp.eq.s32.totalorder %s31, 0
      %p396 = por %p394, %p395
      %p397 = scmp.ne.s32.totalorder %s386, %s389
      %p398 = scmp.eq.s32.totalorder %s36, 1
      %p399 = por %p397, %p398
      %p400 = scmp.ne.s32.totalorder %s389, %s390
      %p401 = scmp.eq.s32.totalorder %s36, 0
      %p402 = por %p400, %p401
      %p403 = scmp.ne.s32.totalorder %s389, %s390
      %p404 = scmp.eq.s32.totalorder %s37, 1
      %p405 = por %p403, %p404
      %p407 = scmp.ne.s32.totalorder %s390, %s406
      %p408 = scmp.eq.s32.totalorder %s37, 0
      %p409 = por %p407, %p408
      %s411 = sadd.s32 %s410, 1
      %p414 = scmp.eq.s32.totalorder %s31, 1
      %p415 = scmp.ne.s32.totalorder %s410, %s412
      %p416 = scmp.eq.s32.totalorder %s31, 0
      %p417 = por %p415, %p416
      %p418 = scmp.ne.s32.totalorder %s410, %s412
      %p419 = scmp.eq.s32.totalorder %s36, 1
      %p420 = por %p418, %p419
      %p421 = scmp.ne.s32.totalorder %s412, %s413
      %p422 = scmp.eq.s32.totalorder %s36, 0
      %p423 = por %p421, %p422
      %p424 = scmp.ne.s32.totalorder %s412, %s413
      %p425 = scmp.eq.s32.totalorder %s37, 1
      %p426 = por %p424, %p425
      %p428 = scmp.ne.s32.totalorder %s413, %s427
      %p429 = scmp.eq.s32.totalorder %s37, 0
      %p430 = por %p428, %p429
      %s432 = sadd.s32 %s431, 1
      %p435 = scmp.eq.s32.totalorder %s31, 1
      %p436 = scmp.ne.s32.totalorder %s431, %s433
      %p437 = scmp.eq.s32.totalorder %s31, 0
      %p438 = por %p436, %p437
      %p439 = scmp.ne.s32.totalorder %s431, %s433
      %p440 = scmp.eq.s32.totalorder %s36, 1
      %p441 = por %p439, %p440
      %p442 = scmp.ne.s32.totalorder %s433, %s434
      %p443 = scmp.eq.s32.totalorder %s36, 0
      %p444 = por %p442, %p443
      %p445 = scmp.ne.s32.totalorder %s433, %s434
      %p446 = scmp.eq.s32.totalorder %s37, 1
      %p447 = por %p445, %p446
      %p449 = scmp.ne.s32.totalorder %s434, %s448
      %p450 = scmp.eq.s32.totalorder %s37, 0
      %p451 = por %p449, %p450
      %s453 = sadd.s32 %s452, 1
      %p456 = scmp.eq.s32.totalorder %s31, 1
      %p457 = scmp.ne.s32.totalorder %s452, %s454
      %p458 = scmp.eq.s32.totalorder %s31, 0
      %p459 = por %p457, %p458
      %p460 = scmp.ne.s32.totalorder %s452, %s454
      %p461 = scmp.eq.s32.totalorder %s36, 1
      %p462 = por %p460, %p461
      %p463 = scmp.ne.s32.totalorder %s454, %s455
      %p464 = scmp.eq.s32.totalorder %s36, 0
      %p465 = por %p463, %p464
      %p466 = scmp.ne.s32.totalorder %s454, %s455
      %p467 = scmp.eq.s32.totalorder %s37, 1
      %p468 = por %p466, %p467
      %p470 = scmp.ne.s32.totalorder %s455, %s469
      %p471 = scmp.eq.s32.totalorder %s37, 0
      %p472 = por %p470, %p471
      %s473 = ssub.s32 %s38, %s50
      %p474 = scmp.eq.s32.totalorder %s473, 0
      %s476 = sadd.s32 %s475, 1
      %s477 = scalar_select %p474, %s475, %s476
      %p480 = pneg %p474
      %p481 = scmp.eq.s32.totalorder %s31, 1
      %p482 = por %p480, %p481
      %p483 = scmp.ne.s32.totalorder %s475, %s478
      %p484 = scmp.eq.s32.totalorder %s31, 0
      %p485 = por %p483, %p484
      %p486 = scmp.ne.s32.totalorder %s475, %s478
      %p487 = scmp.eq.s32.totalorder %s36, 1
      %p488 = por %p486, %p487
      %p489 = scmp.ne.s32.totalorder %s478, %s479
      %p490 = scmp.eq.s32.totalorder %s36, 0
      %p491 = por %p489, %p490
      %p492 = scmp.ne.s32.totalorder %s478, %s479
      %p493 = scmp.eq.s32.totalorder %s37, 1
      %p494 = por %p492, %p493
      %p496 = scmp.ne.s32.totalorder %s479, %s495
      %p497 = scmp.eq.s32.totalorder %s37, 0
      %p498 = por %p496, %p497
      %p499 = scmp.le.s32.totalorder 1, %s31
      %p500 = scmp.lt.s32.totalorder %s31, 3
      %p501 = pnand %p499, %p500
      %p502 = pneg %p501
      // Predicated region
      $region9: #{tpu_custom_call.1} parent=5 // pred_check
        _
      $region10: #{tpu_custom_call.1} parent=5 // pred_check_branch
        %504 = sbr.rel (%p501) target = $region12
      $region11: #{tpu_custom_call.1} parent=5 // pred_region
        %s505 = ssub.s32 %s31, 1
        // Predicated region
        $region13: #{tpu_custom_call.1} parent=11 // pred_check
          %p506 = pneg %p69
        $region14: #{tpu_custom_call.1} parent=11 // pred_check_branch
          %508 = sbr.rel (%p506) target = $region16
        $region15: #{tpu_custom_call.1} parent=11 // pred_region
          %s509 = smul.u32 2, %s40
          %p510 = scmp.lt.s32.totalorder %s509, 1
          %s511 = scalar_select %p510, %s509, 1
          %s512 = smul.addr %s511, 8
          %s513 = scalar_lea.vmem %s1, %s512
          %s514 = smul.u32 2, %s40
        $region16: #{tpu_custom_call.1} parent=11 // pred_fallthru
          _
        // Predicated region
        $region17: #{tpu_custom_call.1} parent=11 // pred_check
          %p515 = pneg %p90
        $region18: #{tpu_custom_call.1} parent=11 // pred_check_branch
          %517 = sbr.rel (%p515) target = $region20
        $region19: #{tpu_custom_call.1} parent=11 // pred_region
          _
        $region20: #{tpu_custom_call.1} parent=11 // pred_fallthru
          _
        // Predicated region
        $region21: #{tpu_custom_call.1} parent=11 // pred_check
          %p518 = pneg %p423
        $region22: #{tpu_custom_call.1} parent=11 // pred_check_branch
          %520 = sbr.rel (%p518) target = $region24
        $region23: #{tpu_custom_call.1} parent=11 // pred_region
          _
        $region24: #{tpu_custom_call.1} parent=11 // pred_fallthru
          _
        // Predicated region
        $region25: #{tpu_custom_call.1} parent=11 // pred_check
          %p521 = pneg %p444
        $region26: #{tpu_custom_call.1} parent=11 // pred_check_branch
          %523 = sbr.rel (%p521) target = $region28
        $region27: #{tpu_custom_call.1} parent=11 // pred_region
          _
        $region28: #{tpu_custom_call.1} parent=11 // pred_fallthru
          _
        // Predicated region
        $region29: #{tpu_custom_call.1} parent=11 // pred_check
          %p524 = pneg %p465
        $region30: #{tpu_custom_call.1} parent=11 // pred_check_branch
          %526 = sbr.rel (%p524) target = $region32
        $region31: #{tpu_custom_call.1} parent=11 // pred_region
          _
        $region32: #{tpu_custom_call.1} parent=11 // pred_fallthru
          _
      $region12: #{tpu_custom_call.1} parent=5 // pred_fallthru
        _
      %p527 = scmp.lt.s32.totalorder %s31, 2
      // Predicated region
      $region33: #{tpu_custom_call.1} parent=5 // pred_check
        %p528 = pneg %p527
      $region34: #{tpu_custom_call.1} parent=5 // pred_check_branch
        %530 = sbr.rel (%p528) target = $region36
      $region35: #{tpu_custom_call.1} parent=5 // pred_region
        // Predicated region
        $region37: #{tpu_custom_call.1} parent=35 // pred_check
          %p531 = pneg %p110
        $region38: #{tpu_custom_call.1} parent=35 // pred_check_branch
          %533 = sbr.rel (%p531) target = $region40
        $region39: #{tpu_custom_call.1} parent=35 // pred_region
          %p534 = scmp.lt.s32.totalorder %s39, 1
          %s535 = scalar_select %p534, %s39, 1
          %s536 = scalar_lea.vmem %s3, %s535
        $region40: #{tpu_custom_call.1} parent=35 // pred_fallthru
          _
        // Predicated region
        $region41: #{tpu_custom_call.1} parent=35 // pred_check
          %p537 = pneg %p136
        $region42: #{tpu_custom_call.1} parent=35 // pred_check_branch
          %539 = sbr.rel (%p537) target = $region44
        $region43: #{tpu_custom_call.1} parent=35 // pred_region
          %p540 = scmp.lt.s32.totalorder %s39, 1
          %s541 = scalar_select %p540, %s39, 1
          %s542 = scalar_lea.vmem %s4, %s541
        $region44: #{tpu_custom_call.1} parent=35 // pred_fallthru
          _
        // Predicated region
        $region45: #{tpu_custom_call.1} parent=35 // pred_check
          %p543 = pneg %p162
        $region46: #{tpu_custom_call.1} parent=35 // pred_check_branch
          %545 = sbr.rel (%p543) target = $region48
        $region47: #{tpu_custom_call.1} parent=35 // pred_region
          %p546 = scmp.lt.s32.totalorder %s39, 1
          %s547 = scalar_select %p546, %s39, 1
          %s548 = smul.addr %s547, 4
          %s549 = smul.addr %s548, 8
          %s550 = scalar_lea.vmem %s5, %s549
        $region48: #{tpu_custom_call.1} parent=35 // pred_fallthru
          _
        // Predicated region
        $region49: #{tpu_custom_call.1} parent=35 // pred_check
          %p551 = pneg %p188
        $region50: #{tpu_custom_call.1} parent=35 // pred_check_branch
          %553 = sbr.rel (%p551) target = $region52
        $region51: #{tpu_custom_call.1} parent=35 // pred_region
          %p554 = scmp.lt.s32.totalorder %s39, 1
          %s555 = scalar_select %p554, %s39, 1
          %s556 = scalar_lea.vmem %s6, %s555
        $region52: #{tpu_custom_call.1} parent=35 // pred_fallthru
          _
        // Predicated region
        $region53: #{tpu_custom_call.1} parent=35 // pred_check
          %p557 = pneg %p214
        $region54: #{tpu_custom_call.1} parent=35 // pred_check_branch
          %559 = sbr.rel (%p557) target = $region56
        $region55: #{tpu_custom_call.1} parent=35 // pred_region
          %p560 = scmp.lt.s32.totalorder %s39, 1
          %s561 = scalar_select %p560, %s39, 1
          %s562 = smul.addr %s561, 4
          %s563 = smul.addr %s562, 8
          %s564 = scalar_lea.vmem %s7, %s563
        $region56: #{tpu_custom_call.1} parent=35 // pred_fallthru
          _
        // Predicated region
        $region57: #{tpu_custom_call.1} parent=35 // pred_check
          %p565 = pneg %p240
        $region58: #{tpu_custom_call.1} parent=35 // pred_check_branch
          %567 = sbr.rel (%p565) target = $region60
        $region59: #{tpu_custom_call.1} parent=35 // pred_region
          %p568 = scmp.lt.s32.totalorder %s39, 1
          %s569 = scalar_select %p568, %s39, 1
          %s570 = scalar_lea.vmem %s8, %s569
        $region60: #{tpu_custom_call.1} parent=35 // pred_fallthru
          _
        // Predicated region
        $region61: #{tpu_custom_call.1} parent=35 // pred_check
          %p571 = pneg %p266
        $region62: #{tpu_custom_call.1} parent=35 // pred_check_branch
          %573 = sbr.rel (%p571) target = $region64
        $region63: #{tpu_custom_call.1} parent=35 // pred_region
          %p574 = scmp.lt.s32.totalorder %s39, 1
          %s575 = scalar_select %p574, %s39, 1
          %s576 = scalar_lea.vmem %s9, %s575
        $region64: #{tpu_custom_call.1} parent=35 // pred_fallthru
          _
        // Predicated region
        $region65: #{tpu_custom_call.1} parent=35 // pred_check
          %p577 = pneg %p292
        $region66: #{tpu_custom_call.1} parent=35 // pred_check_branch
          %579 = sbr.rel (%p577) target = $region68
        $region67: #{tpu_custom_call.1} parent=35 // pred_region
          %p580 = scmp.lt.s32.totalorder %s39, 1
          %s581 = scalar_select %p580, %s39, 1
          %s582 = scalar_lea.vmem %s10, %s581
        $region68: #{tpu_custom_call.1} parent=35 // pred_fallthru
          _
        // Predicated region
        $region69: #{tpu_custom_call.1} parent=35 // pred_check
          %p583 = pneg %p318
        $region70: #{tpu_custom_call.1} parent=35 // pred_check_branch
          %585 = sbr.rel (%p583) target = $region72
        $region71: #{tpu_custom_call.1} parent=35 // pred_region
          %p586 = scmp.lt.s32.totalorder %s39, 1
          %s587 = scalar_select %p586, %s39, 1
          %s588 = smul.addr %s587, 4
          %s589 = smul.addr %s588, 8
          %s590 = scalar_lea.vmem %s11, %s589
        $region72: #{tpu_custom_call.1} parent=35 // pred_fallthru
          _
        // Predicated region
        $region73: #{tpu_custom_call.1} parent=35 // pred_check
          %p591 = pneg %p344
        $region74: #{tpu_custom_call.1} parent=35 // pred_check_branch
          %593 = sbr.rel (%p591) target = $region76
        $region75: #{tpu_custom_call.1} parent=35 // pred_region
          %p594 = scmp.lt.s32.totalorder %s39, 1
          %s595 = scalar_select %p594, %s39, 1
          %s596 = scalar_lea.vmem %s12, %s595
        $region76: #{tpu_custom_call.1} parent=35 // pred_fallthru
          _
        // Predicated region
        $region77: #{tpu_custom_call.1} parent=35 // pred_check
          %p597 = pneg %p370
        $region78: #{tpu_custom_call.1} parent=35 // pred_check_branch
          %599 = sbr.rel (%p597) target = $region80
        $region79: #{tpu_custom_call.1} parent=35 // pred_region
          %p600 = scmp.lt.s32.totalorder %s39, 1
          %s601 = scalar_select %p600, %s39, 1
          %s602 = smul.addr %s601, 16
          %s603 = smul.addr %s602, 8
          %s604 = scalar_lea.vmem %s13, %s603
        $region80: #{tpu_custom_call.1} parent=35 // pred_fallthru
          _
        // Predicated region
        $region81: #{tpu_custom_call.1} parent=35 // pred_check
          %p605 = pneg %p396
        $region82: #{tpu_custom_call.1} parent=35 // pred_check_branch
          %607 = sbr.rel (%p605) target = $region84
        $region83: #{tpu_custom_call.1} parent=35 // pred_region
          %p608 = scmp.lt.s32.totalorder %s39, 1
          %s609 = scalar_select %p608, %s39, 1
          %s610 = scalar_lea.vmem %s14, %s609
        $region84: #{tpu_custom_call.1} parent=35 // pred_fallthru
          _
      $region36: #{tpu_custom_call.1} parent=5 // pred_fallthru
        _
      %p611 = scmp.le.s32.totalorder 1, %s31
      %p612 = scmp.lt.s32.totalorder %s31, 3
      %p613 = pnand %p611, %p612
      %p614 = pneg %p613
      // Predicated region
      $region85: #{tpu_custom_call.1} parent=5 // pred_check
        _
      $region86: #{tpu_custom_call.1} parent=5 // pred_check_branch
        %616 = sbr.rel (%p613) target = $region88
      $region87: #{tpu_custom_call.1} parent=5 // pred_region
        %s617 = ssub.s32 %s31, 1
        %s618 = smul.u32 2, %s40
        %p619 = scmp.lt.s32.totalorder %s618, 1
        %s620 = scalar_select %p619, %s618, 1
        %s621 = smul.addr %s620, 8
        %s622 = scalar_lea.vmem %s1, %s621
        %p623 = pneg %p69
        %p624 = pneg %p66
        %p625 = pneg %p90
        %p626 = pneg %p87
        %p627 = scmp.lt.s32.totalorder %s41, 1
        %s628 = scalar_select %p627, %s41, 1
        %s629 = scalar_lea.vmem %s3, %s628
        %p630 = pneg %p116
        %p631 = pneg %p113
        %p632 = scmp.lt.s32.totalorder %s41, 1
        %s633 = scalar_select %p632, %s41, 1
        %s634 = scalar_lea.vmem %s4, %s633
        %p635 = pneg %p142
        %p636 = pneg %p139
        %p637 = scmp.lt.s32.totalorder %s41, 1
        %s638 = scalar_select %p637, %s41, 1
        %s639 = smul.addr %s638, 4
        %s640 = smul.addr %s639, 8
        %s641 = scalar_lea.vmem %s5, %s640
        %p642 = pneg %p168
        %p643 = pneg %p165
        %p644 = scmp.lt.s32.totalorder %s41, 1
        %s645 = scalar_select %p644, %s41, 1
        %s646 = scalar_lea.vmem %s6, %s645
        %p647 = pneg %p194
        %p648 = pneg %p191
        %p649 = scmp.lt.s32.totalorder %s41, 1
        %s650 = scalar_select %p649, %s41, 1
        %s651 = smul.addr %s650, 4
        %s652 = smul.addr %s651, 8
        %s653 = scalar_lea.vmem %s7, %s652
        %p654 = pneg %p220
        %p655 = pneg %p217
        %p656 = scmp.lt.s32.totalorder %s41, 1
        %s657 = scalar_select %p656, %s41, 1
        %s658 = scalar_lea.vmem %s8, %s657
        %p659 = pneg %p246
        %p660 = pneg %p243
        %p661 = scmp.lt.s32.totalorder %s41, 1
        %s662 = scalar_select %p661, %s41, 1
        %s663 = scalar_lea.vmem %s9, %s662
        %p664 = pneg %p272
        %p665 = pneg %p269
        %p666 = scmp.lt.s32.totalorder %s41, 1
        %s667 = scalar_select %p666, %s41, 1
        %s668 = scalar_lea.vmem %s10, %s667
        %p669 = pneg %p298
        %p670 = pneg %p295
        %p671 = scmp.lt.s32.totalorder %s41, 1
        %s672 = scalar_select %p671, %s41, 1
        %s673 = smul.addr %s672, 4
        %s674 = smul.addr %s673, 8
        %s675 = scalar_lea.vmem %s11, %s674
        %p676 = pneg %p324
        %p677 = pneg %p321
        %p678 = scmp.lt.s32.totalorder %s41, 1
        %s679 = scalar_select %p678, %s41, 1
        %s680 = scalar_lea.vmem %s12, %s679
        %p681 = pneg %p350
        %p682 = pneg %p347
        %p683 = scmp.lt.s32.totalorder %s41, 1
        %s684 = scalar_select %p683, %s41, 1
        %s685 = smul.addr %s684, 16
        %s686 = smul.addr %s685, 8
        %s687 = scalar_lea.vmem %s13, %s686
        %p688 = pneg %p376
        %p689 = pneg %p373
        %p690 = scmp.lt.s32.totalorder %s41, 1
        %s691 = scalar_select %p690, %s41, 1
        %s692 = scalar_lea.vmem %s14, %s691
        %p693 = pneg %p402
        %p694 = pneg %p399
        %p695 = pneg %p423
        %p696 = pneg %p420
        %p697 = pneg %p444
        %p698 = pneg %p441
        %p699 = pneg %p465
        %p700 = pneg %p462
        %p701 = pneg %p491
        %p702 = pneg %p488
        %s703 = smul.u32 2, %s40
        %p704 = scmp.lt.s32.totalorder %s703, 1
        %s705 = scalar_select %p704, %s703, 1
        %s706 = smul.addr %s705, 8
        %s707 = scalar_lea.vmem %s1, %s706
        %s708 = smul.u32 2, %s40
        %p709 = scmp.lt.s32.totalorder %s41, 1
        %s710 = scalar_select %p709, %s41, 1
        %s711 = scalar_lea.vmem %s3, %s710
        %p712 = scmp.lt.s32.totalorder %s41, 1
        %s713 = scalar_select %p712, %s41, 1
        %s714 = scalar_lea.vmem %s4, %s713
        %p715 = scmp.lt.s32.totalorder %s41, 1
        %s716 = scalar_select %p715, %s41, 1
        %s717 = smul.addr %s716, 4
        %s718 = smul.addr %s717, 8
        %s719 = scalar_lea.vmem %s5, %s718
        %p720 = scmp.lt.s32.totalorder %s41, 1
        %s721 = scalar_select %p720, %s41, 1
        %s722 = scalar_lea.vmem %s6, %s721
        %p723 = scmp.lt.s32.totalorder %s41, 1
        %s724 = scalar_select %p723, %s41, 1
        %s725 = smul.addr %s724, 4
        %s726 = smul.addr %s725, 8
        %s727 = scalar_lea.vmem %s7, %s726
        %p728 = scmp.lt.s32.totalorder %s41, 1
        %s729 = scalar_select %p728, %s41, 1
        %s730 = scalar_lea.vmem %s8, %s729
        %p731 = scmp.lt.s32.totalorder %s41, 1
        %s732 = scalar_select %p731, %s41, 1
        %s733 = scalar_lea.vmem %s9, %s732
        %p734 = scmp.lt.s32.totalorder %s41, 1
        %s735 = scalar_select %p734, %s41, 1
        %s736 = scalar_lea.vmem %s10, %s735
        %p737 = scmp.lt.s32.totalorder %s41, 1
        %s738 = scalar_select %p737, %s41, 1
        %s739 = smul.addr %s738, 4
        %s740 = smul.addr %s739, 8
        %s741 = scalar_lea.vmem %s11, %s740
        %p742 = scmp.lt.s32.totalorder %s41, 1
        %s743 = scalar_select %p742, %s41, 1
        %s744 = scalar_lea.vmem %s12, %s743
        %p745 = scmp.lt.s32.totalorder %s41, 1
        %s746 = scalar_select %p745, %s41, 1
        %s747 = smul.addr %s746, 16
        %s748 = smul.addr %s747, 8
        %s749 = scalar_lea.vmem %s13, %s748
        %p750 = scmp.lt.s32.totalorder %s41, 1
        %s751 = scalar_select %p750, %s41, 1
        %s752 = scalar_lea.vmem %s14, %s751
        %s753 = smul.u32 2, %s40
        %p754 = scmp.eq.s32.totalorder %s41, 0
        // Predicated region
        $region89: #{tpu_custom_call.1} parent=87 // pred_check
          %p755 = pneg %p754
        $region90: #{tpu_custom_call.1} parent=87 // pred_check_branch
          %757 = sbr.rel (%p755) target = $region92
        $region91: #{tpu_custom_call.1} parent=87 // pred_region
          %v758 = vld [vmem:[%s707] sm:$0xff]
          %v759 = vld [vmem:[%s707 + $0x8] sm:$0xff]
          %v760 = vld [vmem:[%s2] sm:$0xff]
          %v761 = vadd.f32 %v758, %v760
          %v762 = vadd.f32 %v759, %v760
          %vm763 = vcmask 261120
          %764 = vst.msk [vmem:[#allocation2] sm:$0xff] %vm763, %v761
          %765 = vst.msk [vmem:[#allocation2 + $0x8] sm:$0xff] %vm763, %v762
        $region92: #{tpu_custom_call.1} parent=87 // pred_fallthru
          _
        %v766 = vld [vmem:[#allocation2] sm:$0xff]
        %v767 = vld [vmem:[#allocation2 + $0x8] sm:$0xff]
        %v768 = vld [vmem:[%s711] sm:$0x1]
        %v769 = vld [vmem:[%s714] sm:$0x1]
        %vm770 = vcmask 261120
        %v771 = vsel %vm770, %v766, 0.0
        %772 = vadd.xlane.f32.xlu0 %v771
        %v773 = vpop.xlane.xlu0 %772
        %v774 = vsel %vm770, %v767, 0.0
        %775 = vadd.xlane.f32.xlu0 %v774
        %v776 = vpop.xlane.xlu0 %775
        %v777 = vrcp.pop 32.0
        %v778 = vmul.f32 %v773, %v777
        %v779 = vmul.f32 %v776, %v777
        %v780 = vsub.f32 %v766, %v778
        %v781 = vsub.f32 %v767, %v779
        %v782 = vmul.f32 %v780, %v780
        %v783 = vmul.f32 %v781, %v781
        %v784 = vsel %vm770, %v782, 0.0
        %785 = vadd.xlane.f32.xlu0 %v784
        %v786 = vpop.xlane.xlu0 %785
        %v787 = vsel %vm770, %v783, 0.0
        %788 = vadd.xlane.f32.xlu0 %v787
        %v789 = vpop.xlane.xlu0 %788
        %v790 = vmul.f32 %v786, %v777
        %v791 = vmul.f32 %v789, %v777
        %v792 = vadd.f32 %v790, 1e-05
        %v793 = vadd.f32 %v791, 1e-05
        %v794 = vrsqrt.pop %v792
        %v795 = vrsqrt.pop %v793
        %v796 = vmul.f32 %v780, %v794
        %v797 = vmul.f32 %v781, %v795
        %v799 = vlaneseq
        %v800 = vshrl.u32 %v799, 7
        %v801 = vsub.s32 0, %v800
        %v802 = vrot.slane %v768, %v801
        %v804 = vmul.f32 %v796, %v802
        %v805 = vmul.f32 %v797, %v802
        %v807 = vlaneseq
        %v808 = vshrl.u32 %v807, 7
        %v809 = vsub.s32 0, %v808
        %v810 = vrot.slane %v769, %v809
        %v812 = vadd.f32 %v804, %v810
        %v813 = vadd.f32 %v805, %v810
        %v814 = vld [vmem:[%s719] sm:$0xff]
        %v815 = vld [vmem:[%s719 + $0x8] sm:$0xff]
        %v816 = vld [vmem:[%s719 + $0x10] sm:$0xff]
        %v817 = vld [vmem:[%s719 + $0x18] sm:$0xff]
        %v818 = vld [vmem:[%s722] sm:$0x1]
        %v820 = vlaneseq
        %v821 = vshrl.u32 %v820, 7
        %v822 = vsub.s32 0, %v821
        %v823 = vrot.slane %v818, %v822
        %v826 = vsel %vm770, %v812, 0
        %v829 = vsel %vm770, %v813, 0
        %831 = vmatprep.subr.mxu0 0.0
        %832 = vmatpush1.msra.mxu0 %v814
        %833 = vmatprep.subr.mxu0 0.0
        %834 = vmatpush1.msra.mxu0 %v815
        %835 = vmatprep.subr.mxu0 0.0
        %836 = vmatpush1.msra.mxu0 %v816
        %837 = vmatprep.subr.mxu0 0.0
        %838 = vmatpush1.msra.mxu0 %v817
        %839 = vmatprep.subr.mxu0 0.0
        %840 = vmatpush1.msra.mxu0 0.0
        %841 = vmatprep.subr.mxu0 0.0
        %842 = vmatpush1.msra.mxu0 0.0
        %843 = vmatprep.subr.mxu0 0.0
        %844 = vmatpush1.msra.mxu0 0.0
        %845 = vmatprep.subr.mxu0 0.0
        %846 = vmatpush1.msra.mxu0 0.0
        %847 = vmatprep.subr.mxu0 0.0
        %848 = vmatpush1.msra.mxu0 0.0
        %849 = vmatprep.subr.mxu0 0.0
        %850 = vmatpush1.msra.mxu0 0.0
        %851 = vmatprep.subr.mxu0 0.0
        %852 = vmatpush1.msra.mxu0 0.0
        %853 = vmatprep.subr.mxu0 0.0
        %854 = vmatpush1.msra.mxu0 0.0
        %855 = vmatprep.subr.mxu0 0.0
        %856 = vmatpush1.msra.mxu0 0.0
        %857 = vmatprep.subr.mxu0 0.0
        %858 = vmatpush1.msra.mxu0 0.0
        %859 = vmatprep.subr.mxu0 0.0
        %860 = vmatpush1.msra.mxu0 0.0
        %861 = vmatprep.subr.mxu0 0.0
        %862 = vmatpush1.msra.mxu0 0.0
        %863 = vmatprep.subr.mxu0 0.0
        %864 = vmatpush1.msra.mxu0 0.0
        %865 = vmatprep.subr.mxu0 0.0
        %866 = vmatpush1.msra.mxu0 0.0
        %867 = vmatprep.subr.mxu0 0.0
        %868 = vmatpush1.msra.mxu0 0.0
        %869 = vmatprep.subr.mxu0 0.0
        %870 = vmatpush1.msra.mxu0 0.0
        %871 = vmatprep.subr.mxu0 0.0
        %872 = vmatpush1.msra.mxu0 0.0
        %873 = vmatprep.subr.mxu0 0.0
        %874 = vmatpush1.msra.mxu0 0.0
        %875 = vmatprep.subr.mxu0 0.0
        %876 = vmatpush1.msra.mxu0 0.0
        %877 = vmatprep.subr.mxu0 0.0
        %878 = vmatpush1.msra.mxu0 0.0
        %879 = vmatprep.subr.mxu0 0.0
        %880 = vmatpush1.msra.mxu0 0.0
        %881 = vmatprep.subr.mxu0 0.0
        %882 = vmatpush1.msra.mxu0 0.0
        %883 = vmatprep.subr.mxu0 0.0
        %884 = vmatpush1.msra.mxu0 0.0
        %885 = vmatprep.subr.mxu0 0.0
        %886 = vmatpush1.msra.mxu0 0.0
        %887 = vmatprep.subr.mxu0 0.0
        %888 = vmatpush1.msra.mxu0 0.0
        %889 = vmatprep.subr.mxu0 0.0
        %890 = vmatpush1.msra.mxu0 0.0
        %891 = vmatprep.subr.mxu0 0.0
        %892 = vmatpush1.msra.mxu0 0.0
        %893 = vmatprep.subr.mxu0 0.0
        %894 = vmatpush1.msra.mxu0 0.0
        %895 = vmatprep.mubr.f32.mxu0 0.0
        %896 = vmatmul.mubr.f32.gmra.mrb[0].mxu0 %v826
        %v897 = vpop.f32.mrb[0].mxu0
        %v898 = vadd.f32 %v823, %v897
        %v899 = vpop.f32.mrb[0].mxu0
        %900 = vmatprep.mubr.f32.mxu0 0.0
        %901 = vmatmul.mubr.f32.gmra.mrb[0].mxu0 %v829
        %v902 = vpop.f32.mrb[0].mxu0
        %v903 = vadd.f32 %v823, %v902
        %v904 = vpop.f32.mrb[0].mxu0
        %905 = vdwg.mxu0
        %v906 = vlaneseq
        %v907 = vshrl.u32 %v906, 7
        %v908 = vlaneseq
        %v909 = vand.u32 %v908, 127
        %vm910 = vcmp.le.s32.totalorder %v909, %v907
        %v911 = vmul.f32 %v898, 0.35355338
        %v912 = vmul.f32 %v903, 0.35355338
        %914 = vrot.lane.b32.xlu0 %v898, 96
        %v915 = vpop.permute.xlu0 %914
        %vm916 = vcmask 64512
        %v918 = vsel %vm916, %v911, 0
        %v920 = vsel %vm916, %v915, 0
        %922 = vmatprep.subr.mxu0 0.0
        %923 = vmatpush1.xpose.msra.mxu0 %v920
        %924 = vmatprep.subr.mxu0 0.0
        %925 = vmatpush1.xpose.msra.mxu0 0.0
        %926 = vmatprep.subr.mxu0 0.0
        %927 = vmatpush1.xpose.msra.mxu0 0.0
        %928 = vmatprep.subr.mxu0 0.0
        %929 = vmatpush1.xpose.msra.mxu0 0.0
        %930 = vmatprep.subr.mxu0 0.0
        %931 = vmatpush1.xpose.msra.mxu0 0.0
        %932 = vmatprep.subr.mxu0 0.0
        %933 = vmatpush1.xpose.msra.mxu0 0.0
        %934 = vmatprep.subr.mxu0 0.0
        %935 = vmatpush1.xpose.msra.mxu0 0.0
        %936 = vmatprep.subr.mxu0 0.0
        %937 = vmatpush1.xpose.msra.mxu0 0.0
        %938 = vmatprep.subr.mxu0 0.0
        %939 = vmatpush1.xpose.msra.mxu0 0.0
        %940 = vmatprep.subr.mxu0 0.0
        %941 = vmatpush1.xpose.msra.mxu0 0.0
        %942 = vmatprep.subr.mxu0 0.0
        %943 = vmatpush1.xpose.msra.mxu0 0.0
        %944 = vmatprep.subr.mxu0 0.0
        %945 = vmatpush1.xpose.msra.mxu0 0.0
        %946 = vmatprep.subr.mxu0 0.0
        %947 = vmatpush1.xpose.msra.mxu0 0.0
        %948 = vmatprep.subr.mxu0 0.0
        %949 = vmatpush1.xpose.msra.mxu0 0.0
        %950 = vmatprep.subr.mxu0 0.0
        %951 = vmatpush1.xpose.msra.mxu0 0.0
        %952 = vmatprep.subr.mxu0 0.0
        %953 = vmatpush1.xpose.msra.mxu0 0.0
        %954 = vmatprep.subr.mxu0 0.0
        %955 = vmatpush1.xpose.msra.mxu0 0.0
        %956 = vmatprep.subr.mxu0 0.0
        %957 = vmatpush1.xpose.msra.mxu0 0.0
        %958 = vmatprep.subr.mxu0 0.0
        %959 = vmatpush1.xpose.msra.mxu0 0.0
        %960 = vmatprep.subr.mxu0 0.0
        %961 = vmatpush1.xpose.msra.mxu0 0.0
        %962 = vmatprep.subr.mxu0 0.0
        %963 = vmatpush1.xpose.msra.mxu0 0.0
        %964 = vmatprep.subr.mxu0 0.0
        %965 = vmatpush1.xpose.msra.mxu0 0.0
        %966 = vmatprep.subr.mxu0 0.0
        %967 = vmatpush1.xpose.msra.mxu0 0.0
        %968 = vmatprep.subr.mxu0 0.0
        %969 = vmatpush1.xpose.msra.mxu0 0.0
        %970 = vmatprep.subr.mxu0 0.0
        %971 = vmatpush1.xpose.msra.mxu0 0.0
        %972 = vmatprep.subr.mxu0 0.0
        %973 = vmatpush1.xpose.msra.mxu0 0.0
        %974 = vmatprep.subr.mxu0 0.0
        %975 = vmatpush1.xpose.msra.mxu0 0.0
        %976 = vmatprep.subr.mxu0 0.0
        %977 = vmatpush1.xpose.msra.mxu0 0.0
        %978 = vmatprep.subr.mxu0 0.0
        %979 = vmatpush1.xpose.msra.mxu0 0.0
        %980 = vmatprep.subr.mxu0 0.0
        %981 = vmatpush1.xpose.msra.mxu0 0.0
        %982 = vmatprep.subr.mxu0 0.0
        %983 = vmatpush1.xpose.msra.mxu0 0.0
        %984 = vmatprep.subr.mxu0 0.0
        %985 = vmatpush1.xpose.msra.mxu0 0.0
        %986 = vmatprep.mubr.f32.mxu0 0.0
        %987 = vmatmul.mubr.f32.gmra.mrb[0].mxu0 %v918
        %v988 = vpop.f32.mrb[0].mxu0
        %v989 = vadd.f32 0.0, %v988
        %v990 = vpop.f32.mrb[0].mxu0
        %991 = vdwg.mxu0
        %993 = vrot.lane.b32.xlu0 %v903, 96
        %v994 = vpop.permute.xlu0 %993
        %v996 = vsel %vm916, %v912, 0
        %v998 = vsel %vm916, %v994, 0
        %1000 = vmatprep.subr.mxu0 0.0
        %1001 = vmatpush1.xpose.msra.mxu0 %v998
        %1002 = vmatprep.subr.mxu0 0.0
        %1003 = vmatpush1.xpose.msra.mxu0 0.0
        %1004 = vmatprep.subr.mxu0 0.0
        %1005 = vmatpush1.xpose.msra.mxu0 0.0
        %1006 = vmatprep.subr.mxu0 0.0
        %1007 = vmatpush1.xpose.msra.mxu0 0.0
        %1008 = vmatprep.subr.mxu0 0.0
        %1009 = vmatpush1.xpose.msra.mxu0 0.0
        %1010 = vmatprep.subr.mxu0 0.0
        %1011 = vmatpush1.xpose.msra.mxu0 0.0
        %1012 = vmatprep.subr.mxu0 0.0
        %1013 = vmatpush1.xpose.msra.mxu0 0.0
        %1014 = vmatprep.subr.mxu0 0.0
        %1015 = vmatpush1.xpose.msra.mxu0 0.0
        %1016 = vmatprep.subr.mxu0 0.0
        %1017 = vmatpush1.xpose.msra.mxu0 0.0
        %1018 = vmatprep.subr.mxu0 0.0
        %1019 = vmatpush1.xpose.msra.mxu0 0.0
        %1020 = vmatprep.subr.mxu0 0.0
        %1021 = vmatpush1.xpose.msra.mxu0 0.0
        %1022 = vmatprep.subr.mxu0 0.0
        %1023 = vmatpush1.xpose.msra.mxu0 0.0
        %1024 = vmatprep.subr.mxu0 0.0
        %1025 = vmatpush1.xpose.msra.mxu0 0.0
        %1026 = vmatprep.subr.mxu0 0.0
        %1027 = vmatpush1.xpose.msra.mxu0 0.0
        %1028 = vmatprep.subr.mxu0 0.0
        %1029 = vmatpush1.xpose.msra.mxu0 0.0
        %1030 = vmatprep.subr.mxu0 0.0
        %1031 = vmatpush1.xpose.msra.mxu0 0.0
        %1032 = vmatprep.subr.mxu0 0.0
        %1033 = vmatpush1.xpose.msra.mxu0 0.0
        %1034 = vmatprep.subr.mxu0 0.0
        %1035 = vmatpush1.xpose.msra.mxu0 0.0
        %1036 = vmatprep.subr.mxu0 0.0
        %1037 = vmatpush1.xpose.msra.mxu0 0.0
        %1038 = vmatprep.subr.mxu0 0.0
        %1039 = vmatpush1.xpose.msra.mxu0 0.0
        %1040 = vmatprep.subr.mxu0 0.0
        %1041 = vmatpush1.xpose.msra.mxu0 0.0
        %1042 = vmatprep.subr.mxu0 0.0
        %1043 = vmatpush1.xpose.msra.mxu0 0.0
        %1044 = vmatprep.subr.mxu0 0.0
        %1045 = vmatpush1.xpose.msra.mxu0 0.0
        %1046 = vmatprep.subr.mxu0 0.0
        %1047 = vmatpush1.xpose.msra.mxu0 0.0
        %1048 = vmatprep.subr.mxu0 0.0
        %1049 = vmatpush1.xpose.msra.mxu0 0.0
        %1050 = vmatprep.subr.mxu0 0.0
        %1051 = vmatpush1.xpose.msra.mxu0 0.0
        %1052 = vmatprep.subr.mxu0 0.0
        %1053 = vmatpush1.xpose.msra.mxu0 0.0
        %1054 = vmatprep.subr.mxu0 0.0
        %1055 = vmatpush1.xpose.msra.mxu0 0.0
        %1056 = vmatprep.subr.mxu0 0.0
        %1057 = vmatpush1.xpose.msra.mxu0 0.0
        %1058 = vmatprep.subr.mxu0 0.0
        %1059 = vmatpush1.xpose.msra.mxu0 0.0
        %1060 = vmatprep.subr.mxu0 0.0
        %1061 = vmatpush1.xpose.msra.mxu0 0.0
        %1062 = vmatprep.subr.mxu0 0.0
        %1063 = vmatpush1.xpose.msra.mxu0 0.0
        %1064 = vmatprep.mubr.f32.mxu0 0.0
        %1065 = vmatmul.mubr.f32.gmra.mrb[0].mxu0 %v996
        %v1066 = vpop.f32.mrb[0].mxu0
        %v1067 = vadd.f32 0.0, %v1066
        %v1068 = vpop.f32.mrb[0].mxu0
        %1069 = vdwg.mxu0
        %v1070 = vsel %vm910, 1, 0
        %vm1071 = vcmp.eq.s32.totalorder %v1070, 1
        %v1072 = vsel %vm1071, %v989, -1e+30
        %v1073 = vsel %vm1071, %v1067, -1e+30
        %v1074 = vsel %vm916, %v1072, -inf
        %1075 = vmax.xlane.f32.xlu0 %v1074
        %v1076 = vpop.xlane.xlu0 %1075
        %v1077 = vsel %vm916, %v1073, -inf
        %1078 = vmax.xlane.f32.xlu0 %v1077
        %v1079 = vpop.xlane.xlu0 %1078
        %v1080 = vsub.f32 %v1072, %v1076
        %v1081 = vsub.f32 %v1073, %v1079
        %v1082 = vmul.f32 %v1080, 1.442695
        %v1083 = vpow.pop %v1082
        %v1084 = vmul.f32 %v1081, 1.442695
        %v1085 = vpow.pop %v1084
        %v1086 = vsel %vm916, %v1083, 0.0
        %1087 = vadd.xlane.f32.xlu0 %v1086
        %v1088 = vpop.xlane.xlu0 %1087
        %v1089 = vsel %vm916, %v1085, 0.0
        %1090 = vadd.xlane.f32.xlu0 %v1089
        %v1091 = vpop.xlane.xlu0 %1090
        %v1092 = vrcp.pop %v1088
        %v1093 = vrcp.pop %v1091
        %v1094 = vmul.f32 %v1083, %v1092
        %v1095 = vmul.f32 %v1085, %v1093
        %1096 = vrot.lane.b32.xlu0 %v898, 64
        %v1097 = vpop.permute.xlu0 %1096
        %v1100 = vsel %vm916, %v1094, 0
        %1102 = vmatprep.subr.mxu0 0.0
        %1103 = vmatpush1.msra.mxu0 %v1097
        %1104 = vmatprep.subr.mxu0 0.0
        %1105 = vmatpush1.msra.mxu0 0.0
        %1106 = vmatprep.subr.mxu0 0.0
        %1107 = vmatpush1.msra.mxu0 0.0
        %1108 = vmatprep.subr.mxu0 0.0
        %1109 = vmatpush1.msra.mxu0 0.0
        %1110 = vmatprep.subr.mxu0 0.0
        %1111 = vmatpush1.msra.mxu0 0.0
        %1112 = vmatprep.subr.mxu0 0.0
        %1113 = vmatpush1.msra.mxu0 0.0
        %1114 = vmatprep.subr.mxu0 0.0
        %1115 = vmatpush1.msra.mxu0 0.0
        %1116 = vmatprep.subr.mxu0 0.0
        %1117 = vmatpush1.msra.mxu0 0.0
        %1118 = vmatprep.subr.mxu0 0.0
        %1119 = vmatpush1.msra.mxu0 0.0
        %1120 = vmatprep.subr.mxu0 0.0
        %1121 = vmatpush1.msra.mxu0 0.0
        %1122 = vmatprep.subr.mxu0 0.0
        %1123 = vmatpush1.msra.mxu0 0.0
        %1124 = vmatprep.subr.mxu0 0.0
        %1125 = vmatpush1.msra.mxu0 0.0
        %1126 = vmatprep.subr.mxu0 0.0
        %1127 = vmatpush1.msra.mxu0 0.0
        %1128 = vmatprep.subr.mxu0 0.0
        %1129 = vmatpush1.msra.mxu0 0.0
        %1130 = vmatprep.subr.mxu0 0.0
        %1131 = vmatpush1.msra.mxu0 0.0
        %1132 = vmatprep.subr.mxu0 0.0
        %1133 = vmatpush1.msra.mxu0 0.0
        %1134 = vmatprep.subr.mxu0 0.0
        %1135 = vmatpush1.msra.mxu0 0.0
        %1136 = vmatprep.subr.mxu0 0.0
        %1137 = vmatpush1.msra.mxu0 0.0
        %1138 = vmatprep.subr.mxu0 0.0
        %1139 = vmatpush1.msra.mxu0 0.0
        %1140 = vmatprep.subr.mxu0 0.0
        %1141 = vmatpush1.msra.mxu0 0.0
        %1142 = vmatprep.subr.mxu0 0.0
        %1143 = vmatpush1.msra.mxu0 0.0
        %1144 = vmatprep.subr.mxu0 0.0
        %1145 = vmatpush1.msra.mxu0 0.0
        %1146 = vmatprep.subr.mxu0 0.0
        %1147 = vmatpush1.msra.mxu0 0.0
        %1148 = vmatprep.subr.mxu0 0.0
        %1149 = vmatpush1.msra.mxu0 0.0
        %1150 = vmatprep.subr.mxu0 0.0
        %1151 = vmatpush1.msra.mxu0 0.0
        %1152 = vmatprep.subr.mxu0 0.0
        %1153 = vmatpush1.msra.mxu0 0.0
        %1154 = vmatprep.subr.mxu0 0.0
        %1155 = vmatpush1.msra.mxu0 0.0
        %1156 = vmatprep.subr.mxu0 0.0
        %1157 = vmatpush1.msra.mxu0 0.0
        %1158 = vmatprep.subr.mxu0 0.0
        %1159 = vmatpush1.msra.mxu0 0.0
        %1160 = vmatprep.subr.mxu0 0.0
        %1161 = vmatpush1.msra.mxu0 0.0
        %1162 = vmatprep.subr.mxu0 0.0
        %1163 = vmatpush1.msra.mxu0 0.0
        %1164 = vmatprep.subr.mxu0 0.0
        %1165 = vmatpush1.msra.mxu0 0.0
        %1166 = vmatprep.mubr.f32.mxu0 0.0
        %1167 = vmatmul.mubr.f32.gmra.mrb[0].mxu0 %v1100
        %v1168 = vpop.f32.mrb[0].mxu0
        %v1169 = vadd.f32 0.0, %v1168
        %v1170 = vpop.f32.mrb[0].mxu0
        %1171 = vdwg.mxu0
        %1172 = vrot.lane.b32.xlu0 %v903, 64
        %v1173 = vpop.permute.xlu0 %1172
        %v1176 = vsel %vm916, %v1095, 0
        %1178 = vmatprep.subr.mxu0 0.0
        %1179 = vmatpush1.msra.mxu0 %v1173
        %1180 = vmatprep.subr.mxu0 0.0
        %1181 = vmatpush1.msra.mxu0 0.0
        %1182 = vmatprep.subr.mxu0 0.0
        %1183 = vmatpush1.msra.mxu0 0.0
        %1184 = vmatprep.subr.mxu0 0.0
        %1185 = vmatpush1.msra.mxu0 0.0
        %1186 = vmatprep.subr.mxu0 0.0
        %1187 = vmatpush1.msra.mxu0 0.0
        %1188 = vmatprep.subr.mxu0 0.0
        %1189 = vmatpush1.msra.mxu0 0.0
        %1190 = vmatprep.subr.mxu0 0.0
        %1191 = vmatpush1.msra.mxu0 0.0
        %1192 = vmatprep.subr.mxu0 0.0
        %1193 = vmatpush1.msra.mxu0 0.0
        %1194 = vmatprep.subr.mxu0 0.0
        %1195 = vmatpush1.msra.mxu0 0.0
        %1196 = vmatprep.subr.mxu0 0.0
        %1197 = vmatpush1.msra.mxu0 0.0
        %1198 = vmatprep.subr.mxu0 0.0
        %1199 = vmatpush1.msra.mxu0 0.0
        %1200 = vmatprep.subr.mxu0 0.0
        %1201 = vmatpush1.msra.mxu0 0.0
        %1202 = vmatprep.subr.mxu0 0.0
        %1203 = vmatpush1.msra.mxu0 0.0
        %1204 = vmatprep.subr.mxu0 0.0
        %1205 = vmatpush1.msra.mxu0 0.0
        %1206 = vmatprep.subr.mxu0 0.0
        %1207 = vmatpush1.msra.mxu0 0.0
        %1208 = vmatprep.subr.mxu0 0.0
        %1209 = vmatpush1.msra.mxu0 0.0
        %1210 = vmatprep.subr.mxu0 0.0
        %1211 = vmatpush1.msra.mxu0 0.0
        %1212 = vmatprep.subr.mxu0 0.0
        %1213 = vmatpush1.msra.mxu0 0.0
        %1214 = vmatprep.subr.mxu0 0.0
        %1215 = vmatpush1.msra.mxu0 0.0
        %1216 = vmatprep.subr.mxu0 0.0
        %1217 = vmatpush1.msra.mxu0 0.0
        %1218 = vmatprep.subr.mxu0 0.0
        %1219 = vmatpush1.msra.mxu0 0.0
        %1220 = vmatprep.subr.mxu0 0.0
        %1221 = vmatpush1.msra.mxu0 0.0
        %1222 = vmatprep.subr.mxu0 0.0
        %1223 = vmatpush1.msra.mxu0 0.0
        %1224 = vmatprep.subr.mxu0 0.0
        %1225 = vmatpush1.msra.mxu0 0.0
        %1226 = vmatprep.subr.mxu0 0.0
        %1227 = vmatpush1.msra.mxu0 0.0
        %1228 = vmatprep.subr.mxu0 0.0
        %1229 = vmatpush1.msra.mxu0 0.0
        %1230 = vmatprep.subr.mxu0 0.0
        %1231 = vmatpush1.msra.mxu0 0.0
        %1232 = vmatprep.subr.mxu0 0.0
        %1233 = vmatpush1.msra.mxu0 0.0
        %1234 = vmatprep.subr.mxu0 0.0
        %1235 = vmatpush1.msra.mxu0 0.0
        %1236 = vmatprep.subr.mxu0 0.0
        %1237 = vmatpush1.msra.mxu0 0.0
        %1238 = vmatprep.subr.mxu0 0.0
        %1239 = vmatpush1.msra.mxu0 0.0
        %1240 = vmatprep.subr.mxu0 0.0
        %1241 = vmatpush1.msra.mxu0 0.0
        %1242 = vmatprep.mubr.f32.mxu0 0.0
        %1243 = vmatmul.mubr.f32.gmra.mrb[0].mxu0 %v1176
        %v1244 = vpop.f32.mrb[0].mxu0
        %v1245 = vadd.f32 0.0, %v1244
        %v1246 = vpop.f32.mrb[0].mxu0
        %1247 = vdwg.mxu0
        %1248 = vst.msk [vmem:[#allocation3] sm:$0xff] %vm916, %v1169
        %1249 = vst.msk [vmem:[#allocation3 + $0x8] sm:$0xff] %vm916, %v1245
        %1250 = vrot.lane.b32.xlu0 %v911, 120
        %v1251 = vpop.permute.xlu0 %1250
        %1252 = vrot.lane.b32.xlu0 %v898, 88
        %v1253 = vpop.permute.xlu0 %1252
        %v1254 = vsel %vm916, %v1251, 0
        %v1256 = vsel %vm916, %v1253, 0
        %1258 = vmatprep.subr.mxu0 0.0
        %1259 = vmatpush1.xpose.msra.mxu0 %v1256
        %1260 = vmatprep.subr.mxu0 0.0
        %1261 = vmatpush1.xpose.msra.mxu0 0.0
        %1262 = vmatprep.subr.mxu0 0.0
        %1263 = vmatpush1.xpose.msra.mxu0 0.0
        %1264 = vmatprep.subr.mxu0 0.0
        %1265 = vmatpush1.xpose.msra.mxu0 0.0
        %1266 = vmatprep.subr.mxu0 0.0
        %1267 = vmatpush1.xpose.msra.mxu0 0.0
        %1268 = vmatprep.subr.mxu0 0.0
        %1269 = vmatpush1.xpose.msra.mxu0 0.0
        %1270 = vmatprep.subr.mxu0 0.0
        %1271 = vmatpush1.xpose.msra.mxu0 0.0
        %1272 = vmatprep.subr.mxu0 0.0
        %1273 = vmatpush1.xpose.msra.mxu0 0.0
        %1274 = vmatprep.subr.mxu0 0.0
        %1275 = vmatpush1.xpose.msra.mxu0 0.0
        %1276 = vmatprep.subr.mxu0 0.0
        %1277 = vmatpush1.xpose.msra.mxu0 0.0
        %1278 = vmatprep.subr.mxu0 0.0
        %1279 = vmatpush1.xpose.msra.mxu0 0.0
        %1280 = vmatprep.subr.mxu0 0.0
        %1281 = vmatpush1.xpose.msra.mxu0 0.0
        %1282 = vmatprep.subr.mxu0 0.0
        %1283 = vmatpush1.xpose.msra.mxu0 0.0
        %1284 = vmatprep.subr.mxu0 0.0
        %1285 = vmatpush1.xpose.msra.mxu0 0.0
        %1286 = vmatprep.subr.mxu0 0.0
        %1287 = vmatpush1.xpose.msra.mxu0 0.0
        %1288 = vmatprep.subr.mxu0 0.0
        %1289 = vmatpush1.xpose.msra.mxu0 0.0
        %1290 = vmatprep.subr.mxu0 0.0
        %1291 = vmatpush1.xpose.msra.mxu0 0.0
        %1292 = vmatprep.subr.mxu0 0.0
        %1293 = vmatpush1.xpose.msra.mxu0 0.0
        %1294 = vmatprep.subr.mxu0 0.0
        %1295 = vmatpush1.xpose.msra.mxu0 0.0
        %1296 = vmatprep.subr.mxu0 0.0
        %1297 = vmatpush1.xpose.msra.mxu0 0.0
        %1298 = vmatprep.subr.mxu0 0.0
        %1299 = vmatpush1.xpose.msra.mxu0 0.0
        %1300 = vmatprep.subr.mxu0 0.0
        %1301 = vmatpush1.xpose.msra.mxu0 0.0
        %1302 = vmatprep.subr.mxu0 0.0
        %1303 = vmatpush1.xpose.msra.mxu0 0.0
        %1304 = vmatprep.subr.mxu0 0.0
        %1305 = vmatpush1.xpose.msra.mxu0 0.0
        %1306 = vmatprep.subr.mxu0 0.0
        %1307 = vmatpush1.xpose.msra.mxu0 0.0
        %1308 = vmatprep.subr.mxu0 0.0
        %1309 = vmatpush1.xpose.msra.mxu0 0.0
        %1310 = vmatprep.subr.mxu0 0.0
        %1311 = vmatpush1.xpose.msra.mxu0 0.0
        %1312 = vmatprep.subr.mxu0 0.0
        %1313 = vmatpush1.xpose.msra.mxu0 0.0
        %1314 = vmatprep.subr.mxu0 0.0
        %1315 = vmatpush1.xpose.msra.mxu0 0.0
        %1316 = vmatprep.subr.mxu0 0.0
        %1317 = vmatpush1.xpose.msra.mxu0 0.0
        %1318 = vmatprep.subr.mxu0 0.0
        %1319 = vmatpush1.xpose.msra.mxu0 0.0
        %1320 = vmatprep.subr.mxu0 0.0
        %1321 = vmatpush1.xpose.msra.mxu0 0.0
        %1322 = vmatprep.mubr.f32.mxu0 0.0
        %1323 = vmatmul.mubr.f32.gmra.mrb[0].mxu0 %v1254
        %v1324 = vpop.f32.mrb[0].mxu0
        %v1325 = vadd.f32 0.0, %v1324
        %v1326 = vpop.f32.mrb[0].mxu0
        %1327 = vdwg.mxu0
        %1328 = vrot.lane.b32.xlu0 %v912, 120
        %v1329 = vpop.permute.xlu0 %1328
        %1330 = vrot.lane.b32.xlu0 %v903, 88
        %v1331 = vpop.permute.xlu0 %1330
        %v1332 = vsel %vm916, %v1329, 0
        %v1334 = vsel %vm916, %v1331, 0
        %1336 = vmatprep.subr.mxu0 0.0
        %1337 = vmatpush1.xpose.msra.mxu0 %v1334
        %1338 = vmatprep.subr.mxu0 0.0
        %1339 = vmatpush1.xpose.msra.mxu0 0.0
        %1340 = vmatprep.subr.mxu0 0.0
        %1341 = vmatpush1.xpose.msra.mxu0 0.0
        %1342 = vmatprep.subr.mxu0 0.0
        %1343 = vmatpush1.xpose.msra.mxu0 0.0
        %1344 = vmatprep.subr.mxu0 0.0
        %1345 = vmatpush1.xpose.msra.mxu0 0.0
        %1346 = vmatprep.subr.mxu0 0.0
        %1347 = vmatpush1.xpose.msra.mxu0 0.0
        %1348 = vmatprep.subr.mxu0 0.0
        %1349 = vmatpush1.xpose.msra.mxu0 0.0
        %1350 = vmatprep.subr.mxu0 0.0
        %1351 = vmatpush1.xpose.msra.mxu0 0.0
        %1352 = vmatprep.subr.mxu0 0.0
        %1353 = vmatpush1.xpose.msra.mxu0 0.0
        %1354 = vmatprep.subr.mxu0 0.0
        %1355 = vmatpush1.xpose.msra.mxu0 0.0
        %1356 = vmatprep.subr.mxu0 0.0
        %1357 = vmatpush1.xpose.msra.mxu0 0.0
        %1358 = vmatprep.subr.mxu0 0.0
        %1359 = vmatpush1.xpose.msra.mxu0 0.0
        %1360 = vmatprep.subr.mxu0 0.0
        %1361 = vmatpush1.xpose.msra.mxu0 0.0
        %1362 = vmatprep.subr.mxu0 0.0
        %1363 = vmatpush1.xpose.msra.mxu0 0.0
        %1364 = vmatprep.subr.mxu0 0.0
        %1365 = vmatpush1.xpose.msra.mxu0 0.0
        %1366 = vmatprep.subr.mxu0 0.0
        %1367 = vmatpush1.xpose.msra.mxu0 0.0
        %1368 = vmatprep.subr.mxu0 0.0
        %1369 = vmatpush1.xpose.msra.mxu0 0.0
        %1370 = vmatprep.subr.mxu0 0.0
        %1371 = vmatpush1.xpose.msra.mxu0 0.0
        %1372 = vmatprep.subr.mxu0 0.0
        %1373 = vmatpush1.xpose.msra.mxu0 0.0
        %1374 = vmatprep.subr.mxu0 0.0
        %1375 = vmatpush1.xpose.msra.mxu0 0.0
        %1376 = vmatprep.subr.mxu0 0.0
        %1377 = vmatpush1.xpose.msra.mxu0 0.0
        %1378 = vmatprep.subr.mxu0 0.0
        %1379 = vmatpush1.xpose.msra.mxu0 0.0
        %1380 = vmatprep.subr.mxu0 0.0
        %1381 = vmatpush1.xpose.msra.mxu0 0.0
        %1382 = vmatprep.subr.mxu0 0.0
        %1383 = vmatpush1.xpose.msra.mxu0 0.0
        %1384 = vmatprep.subr.mxu0 0.0
        %1385 = vmatpush1.xpose.msra.mxu0 0.0
        %1386 = vmatprep.subr.mxu0 0.0
        %1387 = vmatpush1.xpose.msra.mxu0 0.0
        %1388 = vmatprep.subr.mxu0 0.0
        %1389 = vmatpush1.xpose.msra.mxu0 0.0
        %1390 = vmatprep.subr.mxu0 0.0
        %1391 = vmatpush1.xpose.msra.mxu0 0.0
        %1392 = vmatprep.subr.mxu0 0.0
        %1393 = vmatpush1.xpose.msra.mxu0 0.0
        %1394 = vmatprep.subr.mxu0 0.0
        %1395 = vmatpush1.xpose.msra.mxu0 0.0
        %1396 = vmatprep.subr.mxu0 0.0
        %1397 = vmatpush1.xpose.msra.mxu0 0.0
        %1398 = vmatprep.subr.mxu0 0.0
        %1399 = vmatpush1.xpose.msra.mxu0 0.0
        %1400 = vmatprep.mubr.f32.mxu0 0.0
        %1401 = vmatmul.mubr.f32.gmra.mrb[0].mxu0 %v1332
        %v1402 = vpop.f32.mrb[0].mxu0
        %v1403 = vadd.f32 0.0, %v1402
        %v1404 = vpop.f32.mrb[0].mxu0
        %1405 = vdwg.mxu0
        %v1406 = vsel %vm1071, %v1325, -1e+30
        %v1407 = vsel %vm1071, %v1403, -1e+30
        %v1408 = vsel %vm916, %v1406, -inf
        %1409 = vmax.xlane.f32.xlu0 %v1408
        %v1410 = vpop.xlane.xlu0 %1409
        %v1411 = vsel %vm916, %v1407, -inf
        %1412 = vmax.xlane.f32.xlu0 %v1411
        %v1413 = vpop.xlane.xlu0 %1412
        %v1414 = vsub.f32 %v1406, %v1410
        %v1415 = vsub.f32 %v1407, %v1413
        %v1416 = vmul.f32 %v1414, 1.442695
        %v1417 = vpow.pop %v1416
        %v1418 = vmul.f32 %v1415, 1.442695
        %v1419 = vpow.pop %v1418
        %v1420 = vsel %vm916, %v1417, 0.0
        %1421 = vadd.xlane.f32.xlu0 %v1420
        %v1422 = vpop.xlane.xlu0 %1421
        %v1423 = vsel %vm916, %v1419, 0.0
        %1424 = vadd.xlane.f32.xlu0 %v1423
        %v1425 = vpop.xlane.xlu0 %1424
        %v1426 = vrcp.pop %v1422
        %v1427 = vrcp.pop %v1425
        %v1428 = vmul.f32 %v1417, %v1426
        %v1429 = vmul.f32 %v1419, %v1427
        %1430 = vrot.lane.b32.xlu0 %v898, 56
        %v1431 = vpop.permute.xlu0 %1430
        %v1434 = vsel %vm916, %v1428, 0
        %1436 = vmatprep.subr.mxu0 0.0
        %1437 = vmatpush1.msra.mxu0 %v1431
        %1438 = vmatprep.subr.mxu0 0.0
        %1439 = vmatpush1.msra.mxu0 0.0
        %1440 = vmatprep.subr.mxu0 0.0
        %1441 = vmatpush1.msra.mxu0 0.0
        %1442 = vmatprep.subr.mxu0 0.0
        %1443 = vmatpush1.msra.mxu0 0.0
        %1444 = vmatprep.subr.mxu0 0.0
        %1445 = vmatpush1.msra.mxu0 0.0
        %1446 = vmatprep.subr.mxu0 0.0
        %1447 = vmatpush1.msra.mxu0 0.0
        %1448 = vmatprep.subr.mxu0 0.0
        %1449 = vmatpush1.msra.mxu0 0.0
        %1450 = vmatprep.subr.mxu0 0.0
        %1451 = vmatpush1.msra.mxu0 0.0
        %1452 = vmatprep.subr.mxu0 0.0
        %1453 = vmatpush1.msra.mxu0 0.0
        %1454 = vmatprep.subr.mxu0 0.0
        %1455 = vmatpush1.msra.mxu0 0.0
        %1456 = vmatprep.subr.mxu0 0.0
        %1457 = vmatpush1.msra.mxu0 0.0
        %1458 = vmatprep.subr.mxu0 0.0
        %1459 = vmatpush1.msra.mxu0 0.0
        %1460 = vmatprep.subr.mxu0 0.0
        %1461 = vmatpush1.msra.mxu0 0.0
        %1462 = vmatprep.subr.mxu0 0.0
        %1463 = vmatpush1.msra.mxu0 0.0
        %1464 = vmatprep.subr.mxu0 0.0
        %1465 = vmatpush1.msra.mxu0 0.0
        %1466 = vmatprep.subr.mxu0 0.0
        %1467 = vmatpush1.msra.mxu0 0.0
        %1468 = vmatprep.subr.mxu0 0.0
        %1469 = vmatpush1.msra.mxu0 0.0
        %1470 = vmatprep.subr.mxu0 0.0
        %1471 = vmatpush1.msra.mxu0 0.0
        %1472 = vmatprep.subr.mxu0 0.0
        %1473 = vmatpush1.msra.mxu0 0.0
        %1474 = vmatprep.subr.mxu0 0.0
        %1475 = vmatpush1.msra.mxu0 0.0
        %1476 = vmatprep.subr.mxu0 0.0
        %1477 = vmatpush1.msra.mxu0 0.0
        %1478 = vmatprep.subr.mxu0 0.0
        %1479 = vmatpush1.msra.mxu0 0.0
        %1480 = vmatprep.subr.mxu0 0.0
        %1481 = vmatpush1.msra.mxu0 0.0
        %1482 = vmatprep.subr.mxu0 0.0
        %1483 = vmatpush1.msra.mxu0 0.0
        %1484 = vmatprep.subr.mxu0 0.0
        %1485 = vmatpush1.msra.mxu0 0.0
        %1486 = vmatprep.subr.mxu0 0.0
        %1487 = vmatpush1.msra.mxu0 0.0
        %1488 = vmatprep.subr.mxu0 0.0
        %1489 = vmatpush1.msra.mxu0 0.0
        %1490 = vmatprep.subr.mxu0 0.0
        %1491 = vmatpush1.msra.mxu0 0.0
        %1492 = vmatprep.subr.mxu0 0.0
        %1493 = vmatpush1.msra.mxu0 0.0
        %1494 = vmatprep.subr.mxu0 0.0
        %1495 = vmatpush1.msra.mxu0 0.0
        %1496 = vmatprep.subr.mxu0 0.0
        %1497 = vmatpush1.msra.mxu0 0.0
        %1498 = vmatprep.subr.mxu0 0.0
        %1499 = vmatpush1.msra.mxu0 0.0
        %1500 = vmatprep.mubr.f32.mxu0 0.0
        %1501 = vmatmul.mubr.f32.gmra.mrb[0].mxu0 %v1434
        %v1502 = vpop.f32.mrb[0].mxu0
        %v1503 = vadd.f32 0.0, %v1502
        %v1504 = vpop.f32.mrb[0].mxu0
        %1505 = vdwg.mxu0
        %1506 = vrot.lane.b32.xlu0 %v903, 56
        %v1507 = vpop.permute.xlu0 %1506
        %v1510 = vsel %vm916, %v1429, 0
        %1512 = vmatprep.subr.mxu0 0.0
        %1513 = vmatpush1.msra.mxu0 %v1507
        %1514 = vmatprep.subr.mxu0 0.0
        %1515 = vmatpush1.msra.mxu0 0.0
        %1516 = vmatprep.subr.mxu0 0.0
        %1517 = vmatpush1.msra.mxu0 0.0
        %1518 = vmatprep.subr.mxu0 0.0
        %1519 = vmatpush1.msra.mxu0 0.0
        %1520 = vmatprep.subr.mxu0 0.0
        %1521 = vmatpush1.msra.mxu0 0.0
        %1522 = vmatprep.subr.mxu0 0.0
        %1523 = vmatpush1.msra.mxu0 0.0
        %1524 = vmatprep.subr.mxu0 0.0
        %1525 = vmatpush1.msra.mxu0 0.0
        %1526 = vmatprep.subr.mxu0 0.0
        %1527 = vmatpush1.msra.mxu0 0.0
        %1528 = vmatprep.subr.mxu0 0.0
        %1529 = vmatpush1.msra.mxu0 0.0
        %1530 = vmatprep.subr.mxu0 0.0
        %1531 = vmatpush1.msra.mxu0 0.0
        %1532 = vmatprep.subr.mxu0 0.0
        %1533 = vmatpush1.msra.mxu0 0.0
        %1534 = vmatprep.subr.mxu0 0.0
        %1535 = vmatpush1.msra.mxu0 0.0
        %1536 = vmatprep.subr.mxu0 0.0
        %1537 = vmatpush1.msra.mxu0 0.0
        %1538 = vmatprep.subr.mxu0 0.0
        %1539 = vmatpush1.msra.mxu0 0.0
        %1540 = vmatprep.subr.mxu0 0.0
        %1541 = vmatpush1.msra.mxu0 0.0
        %1542 = vmatprep.subr.mxu0 0.0
        %1543 = vmatpush1.msra.mxu0 0.0
        %1544 = vmatprep.subr.mxu0 0.0
        %1545 = vmatpush1.msra.mxu0 0.0
        %1546 = vmatprep.subr.mxu0 0.0
        %1547 = vmatpush1.msra.mxu0 0.0
        %1548 = vmatprep.subr.mxu0 0.0
        %1549 = vmatpush1.msra.mxu0 0.0
        %1550 = vmatprep.subr.mxu0 0.0
        %1551 = vmatpush1.msra.mxu0 0.0
        %1552 = vmatprep.subr.mxu0 0.0
        %1553 = vmatpush1.msra.mxu0 0.0
        %1554 = vmatprep.subr.mxu0 0.0
        %1555 = vmatpush1.msra.mxu0 0.0
        %1556 = vmatprep.subr.mxu0 0.0
        %1557 = vmatpush1.msra.mxu0 0.0
        %1558 = vmatprep.subr.mxu0 0.0
        %1559 = vmatpush1.msra.mxu0 0.0
        %1560 = vmatprep.subr.mxu0 0.0
        %1561 = vmatpush1.msra.mxu0 0.0
        %1562 = vmatprep.subr.mxu0 0.0
        %1563 = vmatpush1.msra.mxu0 0.0
        %1564 = vmatprep.subr.mxu0 0.0
        %1565 = vmatpush1.msra.mxu0 0.0
        %1566 = vmatprep.subr.mxu0 0.0
        %1567 = vmatpush1.msra.mxu0 0.0
        %1568 = vmatprep.subr.mxu0 0.0
        %1569 = vmatpush1.msra.mxu0 0.0
        %1570 = vmatprep.subr.mxu0 0.0
        %1571 = vmatpush1.msra.mxu0 0.0
        %1572 = vmatprep.subr.mxu0 0.0
        %1573 = vmatpush1.msra.mxu0 0.0
        %1574 = vmatprep.subr.mxu0 0.0
        %1575 = vmatpush1.msra.mxu0 0.0
        %1576 = vmatprep.mubr.f32.mxu0 0.0
        %1577 = vmatmul.mubr.f32.gmra.mrb[0].mxu0 %v1510
        %v1578 = vpop.f32.mrb[0].mxu0
        %v1579 = vadd.f32 0.0, %v1578
        %v1580 = vpop.f32.mrb[0].mxu0
        %1581 = vdwg.mxu0
        %1584 = vrot.lane.b32.xlu0 %v1503, 8
        %v1585 = vpop.permute.xlu0 %1584
        %1586 = vrot.lane.b32.xlu0 %v1579, 8
        %v1587 = vpop.permute.xlu0 %1586
        %vm1590 = vcmask 130112
        %1591 = vst.msk [vmem:[#allocation3] sm:$0xff] %vm1590, %v1585
        %1592 = vst.msk [vmem:[#allocation3 + $0x8] sm:$0xff] %vm1590, %v1587
        %1593 = vrot.lane.b32.xlu0 %v911, 112
        %v1594 = vpop.permute.xlu0 %1593
        %1595 = vrot.lane.b32.xlu0 %v898, 80
        %v1596 = vpop.permute.xlu0 %1595
        %v1597 = vsel %vm916, %v1594, 0
        %v1599 = vsel %vm916, %v1596, 0
        %1601 = vmatprep.subr.mxu0 0.0
        %1602 = vmatpush1.xpose.msra.mxu0 %v1599
        %1603 = vmatprep.subr.mxu0 0.0
        %1604 = vmatpush1.xpose.msra.mxu0 0.0
        %1605 = vmatprep.subr.mxu0 0.0
        %1606 = vmatpush1.xpose.msra.mxu0 0.0
        %1607 = vmatprep.subr.mxu0 0.0
        %1608 = vmatpush1.xpose.msra.mxu0 0.0
        %1609 = vmatprep.subr.mxu0 0.0
        %1610 = vmatpush1.xpose.msra.mxu0 0.0
        %1611 = vmatprep.subr.mxu0 0.0
        %1612 = vmatpush1.xpose.msra.mxu0 0.0
        %1613 = vmatprep.subr.mxu0 0.0
        %1614 = vmatpush1.xpose.msra.mxu0 0.0
        %1615 = vmatprep.subr.mxu0 0.0
        %1616 = vmatpush1.xpose.msra.mxu0 0.0
        %1617 = vmatprep.subr.mxu0 0.0
        %1618 = vmatpush1.xpose.msra.mxu0 0.0
        %1619 = vmatprep.subr.mxu0 0.0
        %1620 = vmatpush1.xpose.msra.mxu0 0.0
        %1621 = vmatprep.subr.mxu0 0.0
        %1622 = vmatpush1.xpose.msra.mxu0 0.0
        %1623 = vmatprep.subr.mxu0 0.0
        %1624 = vmatpush1.xpose.msra.mxu0 0.0
        %1625 = vmatprep.subr.mxu0 0.0
        %1626 = vmatpush1.xpose.msra.mxu0 0.0
        %1627 = vmatprep.subr.mxu0 0.0
        %1628 = vmatpush1.xpose.msra.mxu0 0.0
        %1629 = vmatprep.subr.mxu0 0.0
        %1630 = vmatpush1.xpose.msra.mxu0 0.0
        %1631 = vmatprep.subr.mxu0 0.0
        %1632 = vmatpush1.xpose.msra.mxu0 0.0
        %1633 = vmatprep.subr.mxu0 0.0
        %1634 = vmatpush1.xpose.msra.mxu0 0.0
        %1635 = vmatprep.subr.mxu0 0.0
        %1636 = vmatpush1.xpose.msra.mxu0 0.0
        %1637 = vmatprep.subr.mxu0 0.0
        %1638 = vmatpush1.xpose.msra.mxu0 0.0
        %1639 = vmatprep.subr.mxu0 0.0
        %1640 = vmatpush1.xpose.msra.mxu0 0.0
        %1641 = vmatprep.subr.mxu0 0.0
        %1642 = vmatpush1.xpose.msra.mxu0 0.0
        %1643 = vmatprep.subr.mxu0 0.0
        %1644 = vmatpush1.xpose.msra.mxu0 0.0
        %1645 = vmatprep.subr.mxu0 0.0
        %1646 = vmatpush1.xpose.msra.mxu0 0.0
        %1647 = vmatprep.subr.mxu0 0.0
        %1648 = vmatpush1.xpose.msra.mxu0 0.0
        %1649 = vmatprep.subr.mxu0 0.0
        %1650 = vmatpush1.xpose.msra.mxu0 0.0
        %1651 = vmatprep.subr.mxu0 0.0
        %1652 = vmatpush1.xpose.msra.mxu0 0.0
        %1653 = vmatprep.subr.mxu0 0.0
        %1654 = vmatpush1.xpose.msra.mxu0 0.0
        %1655 = vmatprep.subr.mxu0 0.0
        %1656 = vmatpush1.xpose.msra.mxu0 0.0
        %1657 = vmatprep.subr.mxu0 0.0
        %1658 = vmatpush1.xpose.msra.mxu0 0.0
        %1659 = vmatprep.subr.mxu0 0.0
        %1660 = vmatpush1.xpose.msra.mxu0 0.0
        %1661 = vmatprep.subr.mxu0 0.0
        %1662 = vmatpush1.xpose.msra.mxu0 0.0
        %1663 = vmatprep.subr.mxu0 0.0
        %1664 = vmatpush1.xpose.msra.mxu0 0.0
        %1665 = vmatprep.mubr.f32.mxu0 0.0
        %1666 = vmatmul.mubr.f32.gmra.mrb[0].mxu0 %v1597
        %v1667 = vpop.f32.mrb[0].mxu0
        %v1668 = vadd.f32 0.0, %v1667
        %v1669 = vpop.f32.mrb[0].mxu0
        %1670 = vdwg.mxu0
        %1671 = vrot.lane.b32.xlu0 %v912, 112
        %v1672 = vpop.permute.xlu0 %1671
        %1673 = vrot.lane.b32.xlu0 %v903, 80
        %v1674 = vpop.permute.xlu0 %1673
        %v1675 = vsel %vm916, %v1672, 0
        %v1677 = vsel %vm916, %v1674, 0
        %1679 = vmatprep.subr.mxu0 0.0
        %1680 = vmatpush1.xpose.msra.mxu0 %v1677
        %1681 = vmatprep.subr.mxu0 0.0
        %1682 = vmatpush1.xpose.msra.mxu0 0.0
        %1683 = vmatprep.subr.mxu0 0.0
        %1684 = vmatpush1.xpose.msra.mxu0 0.0
        %1685 = vmatprep.subr.mxu0 0.0
        %1686 = vmatpush1.xpose.msra.mxu0 0.0
        %1687 = vmatprep.subr.mxu0 0.0
        %1688 = vmatpush1.xpose.msra.mxu0 0.0
        %1689 = vmatprep.subr.mxu0 0.0
        %1690 = vmatpush1.xpose.msra.mxu0 0.0
        %1691 = vmatprep.subr.mxu0 0.0
        %1692 = vmatpush1.xpose.msra.mxu0 0.0
        %1693 = vmatprep.subr.mxu0 0.0
        %1694 = vmatpush1.xpose.msra.mxu0 0.0
        %1695 = vmatprep.subr.mxu0 0.0
        %1696 = vmatpush1.xpose.msra.mxu0 0.0
        %1697 = vmatprep.subr.mxu0 0.0
        %1698 = vmatpush1.xpose.msra.mxu0 0.0
        %1699 = vmatprep.subr.mxu0 0.0
        %1700 = vmatpush1.xpose.msra.mxu0 0.0
        %1701 = vmatprep.subr.mxu0 0.0
        %1702 = vmatpush1.xpose.msra.mxu0 0.0
        %1703 = vmatprep.subr.mxu0 0.0
        %1704 = vmatpush1.xpose.msra.mxu0 0.0
        %1705 = vmatprep.subr.mxu0 0.0
        %1706 = vmatpush1.xpose.msra.mxu0 0.0
        %1707 = vmatprep.subr.mxu0 0.0
        %1708 = vmatpush1.xpose.msra.mxu0 0.0
        %1709 = vmatprep.subr.mxu0 0.0
        %1710 = vmatpush1.xpose.msra.mxu0 0.0
        %1711 = vmatprep.subr.mxu0 0.0
        %1712 = vmatpush1.xpose.msra.mxu0 0.0
        %1713 = vmatprep.subr.mxu0 0.0
        %1714 = vmatpush1.xpose.msra.mxu0 0.0
        %1715 = vmatprep.subr.mxu0 0.0
        %1716 = vmatpush1.xpose.msra.mxu0 0.0
        %1717 = vmatprep.subr.mxu0 0.0
        %1718 = vmatpush1.xpose.msra.mxu0 0.0
        %1719 = vmatprep.subr.mxu0 0.0
        %1720 = vmatpush1.xpose.msra.mxu0 0.0
        %1721 = vmatprep.subr.mxu0 0.0
        %1722 = vmatpush1.xpose.msra.mxu0 0.0
        %1723 = vmatprep.subr.mxu0 0.0
        %1724 = vmatpush1.xpose.msra.mxu0 0.0
        %1725 = vmatprep.subr.mxu0 0.0
        %1726 = vmatpush1.xpose.msra.mxu0 0.0
        %1727 = vmatprep.subr.mxu0 0.0
        %1728 = vmatpush1.xpose.msra.mxu0 0.0
        %1729 = vmatprep.subr.mxu0 0.0
        %1730 = vmatpush1.xpose.msra.mxu0 0.0
        %1731 = vmatprep.subr.mxu0 0.0
        %1732 = vmatpush1.xpose.msra.mxu0 0.0
        %1733 = vmatprep.subr.mxu0 0.0
        %1734 = vmatpush1.xpose.msra.mxu0 0.0
        %1735 = vmatprep.subr.mxu0 0.0
        %1736 = vmatpush1.xpose.msra.mxu0 0.0
        %1737 = vmatprep.subr.mxu0 0.0
        %1738 = vmatpush1.xpose.msra.mxu0 0.0
        %1739 = vmatprep.subr.mxu0 0.0
        %1740 = vmatpush1.xpose.msra.mxu0 0.0
        %1741 = vmatprep.subr.mxu0 0.0
        %1742 = vmatpush1.xpose.msra.mxu0 0.0
        %1743 = vmatprep.mubr.f32.mxu0 0.0
        %1744 = vmatmul.mubr.f32.gmra.mrb[0].mxu0 %v1675
        %v1745 = vpop.f32.mrb[0].mxu0
        %v1746 = vadd.f32 0.0, %v1745
        %v1747 = vpop.f32.mrb[0].mxu0
        %1748 = vdwg.mxu0
        %v1749 = vsel %vm1071, %v1668, -1e+30
        %v1750 = vsel %vm1071, %v1746, -1e+30
        %v1751 = vsel %vm916, %v1749, -inf
        %1752 = vmax.xlane.f32.xlu0 %v1751
        %v1753 = vpop.xlane.xlu0 %1752
        %v1754 = vsel %vm916, %v1750, -inf
        %1755 = vmax.xlane.f32.xlu0 %v1754
        %v1756 = vpop.xlane.xlu0 %1755
        %v1757 = vsub.f32 %v1749, %v1753
        %v1758 = vsub.f32 %v1750, %v1756
        %v1759 = vmul.f32 %v1757, 1.442695
        %v1760 = vpow.pop %v1759
        %v1761 = vmul.f32 %v1758, 1.442695
        %v1762 = vpow.pop %v1761
        %v1763 = vsel %vm916, %v1760, 0.0
        %1764 = vadd.xlane.f32.xlu0 %v1763
        %v1765 = vpop.xlane.xlu0 %1764
        %v1766 = vsel %vm916, %v1762, 0.0
        %1767 = vadd.xlane.f32.xlu0 %v1766
        %v1768 = vpop.xlane.xlu0 %1767
        %v1769 = vrcp.pop %v1765
        %v1770 = vrcp.pop %v1768
        %v1771 = vmul.f32 %v1760, %v1769
        %v1772 = vmul.f32 %v1762, %v1770
        %1773 = vrot.lane.b32.xlu0 %v898, 48
        %v1774 = vpop.permute.xlu0 %1773
        %v1777 = vsel %vm916, %v1771, 0
        %1779 = vmatprep.subr.mxu0 0.0
        %1780 = vmatpush1.msra.mxu0 %v1774
        %1781 = vmatprep.subr.mxu0 0.0
        %1782 = vmatpush1.msra.mxu0 0.0
        %1783 = vmatprep.subr.mxu0 0.0
        %1784 = vmatpush1.msra.mxu0 0.0
        %1785 = vmatprep.subr.mxu0 0.0
        %1786 = vmatpush1.msra.mxu0 0.0
        %1787 = vmatprep.subr.mxu0 0.0
        %1788 = vmatpush1.msra.mxu0 0.0
        %1789 = vmatprep.subr.mxu0 0.0
        %1790 = vmatpush1.msra.mxu0 0.0
        %1791 = vmatprep.subr.mxu0 0.0
        %1792 = vmatpush1.msra.mxu0 0.0
        %1793 = vmatprep.subr.mxu0 0.0
        %1794 = vmatpush1.msra.mxu0 0.0
        %1795 = vmatprep.subr.mxu0 0.0
        %1796 = vmatpush1.msra.mxu0 0.0
        %1797 = vmatprep.subr.mxu0 0.0
        %1798 = vmatpush1.msra.mxu0 0.0
        %1799 = vmatprep.subr.mxu0 0.0
        %1800 = vmatpush1.msra.mxu0 0.0
        %1801 = vmatprep.subr.mxu0 0.0
        %1802 = vmatpush1.msra.mxu0 0.0
        %1803 = vmatprep.subr.mxu0 0.0
        %1804 = vmatpush1.msra.mxu0 0.0
        %1805 = vmatprep.subr.mxu0 0.0
        %1806 = vmatpush1.msra.mxu0 0.0
        %1807 = vmatprep.subr.mxu0 0.0
        %1808 = vmatpush1.msra.mxu0 0.0
        %1809 = vmatprep.subr.mxu0 0.0
        %1810 = vmatpush1.msra.mxu0 0.0
        %1811 = vmatprep.subr.mxu0 0.0
        %1812 = vmatpush1.msra.mxu0 0.0
        %1813 = vmatprep.subr.mxu0 0.0
        %1814 = vmatpush1.msra.mxu0 0.0
        %1815 = vmatprep.subr.mxu0 0.0
        %1816 = vmatpush1.msra.mxu0 0.0
        %1817 = vmatprep.subr.mxu0 0.0
        %1818 = vmatpush1.msra.mxu0 0.0
        %1819 = vmatprep.subr.mxu0 0.0
        %1820 = vmatpush1.msra.mxu0 0.0
        %1821 = vmatprep.subr.mxu0 0.0
        %1822 = vmatpush1.msra.mxu0 0.0
        %1823 = vmatprep.subr.mxu0 0.0
        %1824 = vmatpush1.msra.mxu0 0.0
        %1825 = vmatprep.subr.mxu0 0.0
        %1826 = vmatpush1.msra.mxu0 0.0
        %1827 = vmatprep.subr.mxu0 0.0
        %1828 = vmatpush1.msra.mxu0 0.0
        %1829 = vmatprep.subr.mxu0 0.0
        %1830 = vmatpush1.msra.mxu0 0.0
        %1831 = vmatprep.subr.mxu0 0.0
        %1832 = vmatpush1.msra.mxu0 0.0
        %1833 = vmatprep.subr.mxu0 0.0
        %1834 = vmatpush1.msra.mxu0 0.0
        %1835 = vmatprep.subr.mxu0 0.0
        %1836 = vmatpush1.msra.mxu0 0.0
        %1837 = vmatprep.subr.mxu0 0.0
        %1838 = vmatpush1.msra.mxu0 0.0
        %1839 = vmatprep.subr.mxu0 0.0
        %1840 = vmatpush1.msra.mxu0 0.0
        %1841 = vmatprep.subr.mxu0 0.0
        %1842 = vmatpush1.msra.mxu0 0.0
        %1843 = vmatprep.mubr.f32.mxu0 0.0
        %1844 = vmatmul.mubr.f32.gmra.mrb[0].mxu0 %v1777
        %v1845 = vpop.f32.mrb[0].mxu0
        %v1846 = vadd.f32 0.0, %v1845
        %v1847 = vpop.f32.mrb[0].mxu0
        %1848 = vdwg.mxu0
        %1849 = vrot.lane.b32.xlu0 %v903, 48
        %v1850 = vpop.permute.xlu0 %1849
        %v1853 = vsel %vm916, %v1772, 0
        %1855 = vmatprep.subr.mxu0 0.0
        %1856 = vmatpush1.msra.mxu0 %v1850
        %1857 = vmatprep.subr.mxu0 0.0
        %1858 = vmatpush1.msra.mxu0 0.0
        %1859 = vmatprep.subr.mxu0 0.0
        %1860 = vmatpush1.msra.mxu0 0.0
        %1861 = vmatprep.subr.mxu0 0.0
        %1862 = vmatpush1.msra.mxu0 0.0
        %1863 = vmatprep.subr.mxu0 0.0
        %1864 = vmatpush1.msra.mxu0 0.0
        %1865 = vmatprep.subr.mxu0 0.0
        %1866 = vmatpush1.msra.mxu0 0.0
        %1867 = vmatprep.subr.mxu0 0.0
        %1868 = vmatpush1.msra.mxu0 0.0
        %1869 = vmatprep.subr.mxu0 0.0
        %1870 = vmatpush1.msra.mxu0 0.0
        %1871 = vmatprep.subr.mxu0 0.0
        %1872 = vmatpush1.msra.mxu0 0.0
        %1873 = vmatprep.subr.mxu0 0.0
        %1874 = vmatpush1.msra.mxu0 0.0
        %1875 = vmatprep.subr.mxu0 0.0
        %1876 = vmatpush1.msra.mxu0 0.0
        %1877 = vmatprep.subr.mxu0 0.0
        %1878 = vmatpush1.msra.mxu0 0.0
        %1879 = vmatprep.subr.mxu0 0.0
        %1880 = vmatpush1.msra.mxu0 0.0
        %1881 = vmatprep.subr.mxu0 0.0
        %1882 = vmatpush1.msra.mxu0 0.0
        %1883 = vmatprep.subr.mxu0 0.0
        %1884 = vmatpush1.msra.mxu0 0.0
        %1885 = vmatprep.subr.mxu0 0.0
        %1886 = vmatpush1.msra.mxu0 0.0
        %1887 = vmatprep.subr.mxu0 0.0
        %1888 = vmatpush1.msra.mxu0 0.0
        %1889 = vmatprep.subr.mxu0 0.0
        %1890 = vmatpush1.msra.mxu0 0.0
        %1891 = vmatprep.subr.mxu0 0.0
        %1892 = vmatpush1.msra.mxu0 0.0
        %1893 = vmatprep.subr.mxu0 0.0
        %1894 = vmatpush1.msra.mxu0 0.0
        %1895 = vmatprep.subr.mxu0 0.0
        %1896 = vmatpush1.msra.mxu0 0.0
        %1897 = vmatprep.subr.mxu0 0.0
        %1898 = vmatpush1.msra.mxu0 0.0
        %1899 = vmatprep.subr.mxu0 0.0
        %1900 = vmatpush1.msra.mxu0 0.0
        %1901 = vmatprep.subr.mxu0 0.0
        %1902 = vmatpush1.msra.mxu0 0.0
        %1903 = vmatprep.subr.mxu0 0.0
        %1904 = vmatpush1.msra.mxu0 0.0
        %1905 = vmatprep.subr.mxu0 0.0
        %1906 = vmatpush1.msra.mxu0 0.0
        %1907 = vmatprep.subr.mxu0 0.0
        %1908 = vmatpush1.msra.mxu0 0.0
        %1909 = vmatprep.subr.mxu0 0.0
        %1910 = vmatpush1.msra.mxu0 0.0
        %1911 = vmatprep.subr.mxu0 0.0
        %1912 = vmatpush1.msra.mxu0 0.0
        %1913 = vmatprep.subr.mxu0 0.0
        %1914 = vmatpush1.msra.mxu0 0.0
        %1915 = vmatprep.subr.mxu0 0.0
        %1916 = vmatpush1.msra.mxu0 0.0
        %1917 = vmatprep.subr.mxu0 0.0
        %1918 = vmatpush1.msra.mxu0 0.0
        %1919 = vmatprep.mubr.f32.mxu0 0.0
        %1920 = vmatmul.mubr.f32.gmra.mrb[0].mxu0 %v1853
        %v1921 = vpop.f32.mrb[0].mxu0
        %v1922 = vadd.f32 0.0, %v1921
        %v1923 = vpop.f32.mrb[0].mxu0
        %1924 = vdwg.mxu0
        %1927 = vrot.lane.b32.xlu0 %v1846, 16
        %v1928 = vpop.permute.xlu0 %1927
        %1929 = vrot.lane.b32.xlu0 %v1922, 16
        %v1930 = vpop.permute.xlu0 %1929
        %vm1933 = vcmask 195712
        %1934 = vst.msk [vmem:[#allocation3] sm:$0xff] %vm1933, %v1928
        %1935 = vst.msk [vmem:[#allocation3 + $0x8] sm:$0xff] %vm1933, %v1930
        %1936 = vrot.lane.b32.xlu0 %v911, 104
        %v1937 = vpop.permute.xlu0 %1936
        %1938 = vrot.lane.b32.xlu0 %v898, 72
        %v1939 = vpop.permute.xlu0 %1938
        %v1940 = vsel %vm916, %v1937, 0
        %v1942 = vsel %vm916, %v1939, 0
        %1944 = vmatprep.subr.mxu0 0.0
        %1945 = vmatpush1.xpose.msra.mxu0 %v1942
        %1946 = vmatprep.subr.mxu0 0.0
        %1947 = vmatpush1.xpose.msra.mxu0 0.0
        %1948 = vmatprep.subr.mxu0 0.0
        %1949 = vmatpush1.xpose.msra.mxu0 0.0
        %1950 = vmatprep.subr.mxu0 0.0
        %1951 = vmatpush1.xpose.msra.mxu0 0.0
        %1952 = vmatprep.subr.mxu0 0.0
        %1953 = vmatpush1.xpose.msra.mxu0 0.0
        %1954 = vmatprep.subr.mxu0 0.0
        %1955 = vmatpush1.xpose.msra.mxu0 0.0
        %1956 = vmatprep.subr.mxu0 0.0
        %1957 = vmatpush1.xpose.msra.mxu0 0.0
        %1958 = vmatprep.subr.mxu0 0.0
        %1959 = vmatpush1.xpose.msra.mxu0 0.0
        %1960 = vmatprep.subr.mxu0 0.0
        %1961 = vmatpush1.xpose.msra.mxu0 0.0
        %1962 = vmatprep.subr.mxu0 0.0
        %1963 = vmatpush1.xpose.msra.mxu0 0.0
        %1964 = vmatprep.subr.mxu0 0.0
        %1965 = vmatpush1.xpose.msra.mxu0 0.0
        %1966 = vmatprep.subr.mxu0 0.0
        %1967 = vmatpush1.xpose.msra.mxu0 0.0
        %1968 = vmatprep.subr.mxu0 0.0
        %1969 = vmatpush1.xpose.msra.mxu0 0.0
        %1970 = vmatprep.subr.mxu0 0.0
        %1971 = vmatpush1.xpose.msra.mxu0 0.0
        %1972 = vmatprep.subr.mxu0 0.0
        %1973 = vmatpush1.xpose.msra.mxu0 0.0
        %1974 = vmatprep.subr.mxu0 0.0
        %1975 = vmatpush1.xpose.msra.mxu0 0.0
        %1976 = vmatprep.subr.mxu0 0.0
        %1977 = vmatpush1.xpose.msra.mxu0 0.0
        %1978 = vmatprep.subr.mxu0 0.0
        %1979 = vmatpush1.xpose.msra.mxu0 0.0
        %1980 = vmatprep.subr.mxu0 0.0
        %1981 = vmatpush1.xpose.msra.mxu0 0.0
        %1982 = vmatprep.subr.mxu0 0.0
        %1983 = vmatpush1.xpose.msra.mxu0 0.0
        %1984 = vmatprep.subr.mxu0 0.0
        %1985 = vmatpush1.xpose.msra.mxu0 0.0
        %1986 = vmatprep.subr.mxu0 0.0
        %1987 = vmatpush1.xpose.msra.mxu0 0.0
        %1988 = vmatprep.subr.mxu0 0.0
        %1989 = vmatpush1.xpose.msra.mxu0 0.0
        %1990 = vmatprep.subr.mxu0 0.0
        %1991 = vmatpush1.xpose.msra.mxu0 0.0
        %1992 = vmatprep.subr.mxu0 0.0
        %1993 = vmatpush1.xpose.msra.mxu0 0.0
        %1994 = vmatprep.subr.mxu0 0.0
        %1995 = vmatpush1.xpose.msra.mxu0 0.0
        %1996 = vmatprep.subr.mxu0 0.0
        %1997 = vmatpush1.xpose.msra.mxu0 0.0
        %1998 = vmatprep.subr.mxu0 0.0
        %1999 = vmatpush1.xpose.msra.mxu0 0.0
        %2000 = vmatprep.subr.mxu0 0.0
        %2001 = vmatpush1.xpose.msra.mxu0 0.0
        %2002 = vmatprep.subr.mxu0 0.0
        %2003 = vmatpush1.xpose.msra.mxu0 0.0
        %2004 = vmatprep.subr.mxu0 0.0
        %2005 = vmatpush1.xpose.msra.mxu0 0.0
        %2006 = vmatprep.subr.mxu0 0.0
        %2007 = vmatpush1.xpose.msra.mxu0 0.0
        %2008 = vmatprep.mubr.f32.mxu0 0.0
        %2009 = vmatmul.mubr.f32.gmra.mrb[0].mxu0 %v1940
        %v2010 = vpop.f32.mrb[0].mxu0
        %v2011 = vadd.f32 0.0, %v2010
        %v2012 = vpop.f32.mrb[0].mxu0
        %2013 = vdwg.mxu0
        %2014 = vrot.lane.b32.xlu0 %v912, 104
        %v2015 = vpop.permute.xlu0 %2014
        %2016 = vrot.lane.b32.xlu0 %v903, 72
        %v2017 = vpop.permute.xlu0 %2016
        %v2018 = vsel %vm916, %v2015, 0
        %v2020 = vsel %vm916, %v2017, 0
        %2022 = vmatprep.subr.mxu0 0.0
        %2023 = vmatpush1.xpose.msra.mxu0 %v2020
        %2024 = vmatprep.subr.mxu0 0.0
        %2025 = vmatpush1.xpose.msra.mxu0 0.0
        %2026 = vmatprep.subr.mxu0 0.0
        %2027 = vmatpush1.xpose.msra.mxu0 0.0
        %2028 = vmatprep.subr.mxu0 0.0
        %2029 = vmatpush1.xpose.msra.mxu0 0.0
        %2030 = vmatprep.subr.mxu0 0.0
        %2031 = vmatpush1.xpose.msra.mxu0 0.0
        %2032 = vmatprep.subr.mxu0 0.0
        %2033 = vmatpush1.xpose.msra.mxu0 0.0
        %2034 = vmatprep.subr.mxu0 0.0
        %2035 = vmatpush1.xpose.msra.mxu0 0.0
        %2036 = vmatprep.subr.mxu0 0.0
        %2037 = vmatpush1.xpose.msra.mxu0 0.0
        %2038 = vmatprep.subr.mxu0 0.0
        %2039 = vmatpush1.xpose.msra.mxu0 0.0
        %2040 = vmatprep.subr.mxu0 0.0
        %2041 = vmatpush1.xpose.msra.mxu0 0.0
        %2042 = vmatprep.subr.mxu0 0.0
        %2043 = vmatpush1.xpose.msra.mxu0 0.0
        %2044 = vmatprep.subr.mxu0 0.0
        %2045 = vmatpush1.xpose.msra.mxu0 0.0
        %2046 = vmatprep.subr.mxu0 0.0
        %2047 = vmatpush1.xpose.msra.mxu0 0.0
        %2048 = vmatprep.subr.mxu0 0.0
        %2049 = vmatpush1.xpose.msra.mxu0 0.0
        %2050 = vmatprep.subr.mxu0 0.0
        %2051 = vmatpush1.xpose.msra.mxu0 0.0
        %2052 = vmatprep.subr.mxu0 0.0
        %2053 = vmatpush1.xpose.msra.mxu0 0.0
        %2054 = vmatprep.subr.mxu0 0.0
        %2055 = vmatpush1.xpose.msra.mxu0 0.0
        %2056 = vmatprep.subr.mxu0 0.0
        %2057 = vmatpush1.xpose.msra.mxu0 0.0
        %2058 = vmatprep.subr.mxu0 0.0
        %2059 = vmatpush1.xpose.msra.mxu0 0.0
        %2060 = vmatprep.subr.mxu0 0.0
        %2061 = vmatpush1.xpose.msra.mxu0 0.0
        %2062 = vmatprep.subr.mxu0 0.0
        %2063 = vmatpush1.xpose.msra.mxu0 0.0
        %2064 = vmatprep.subr.mxu0 0.0
        %2065 = vmatpush1.xpose.msra.mxu0 0.0
        %2066 = vmatprep.subr.mxu0 0.0
        %2067 = vmatpush1.xpose.msra.mxu0 0.0
        %2068 = vmatprep.subr.mxu0 0.0
        %2069 = vmatpush1.xpose.msra.mxu0 0.0
        %2070 = vmatprep.subr.mxu0 0.0
        %2071 = vmatpush1.xpose.msra.mxu0 0.0
        %2072 = vmatprep.subr.mxu0 0.0
        %2073 = vmatpush1.xpose.msra.mxu0 0.0
        %2074 = vmatprep.subr.mxu0 0.0
        %2075 = vmatpush1.xpose.msra.mxu0 0.0
        %2076 = vmatprep.subr.mxu0 0.0
        %2077 = vmatpush1.xpose.msra.mxu0 0.0
        %2078 = vmatprep.subr.mxu0 0.0
        %2079 = vmatpush1.xpose.msra.mxu0 0.0
        %2080 = vmatprep.subr.mxu0 0.0
        %2081 = vmatpush1.xpose.msra.mxu0 0.0
        %2082 = vmatprep.subr.mxu0 0.0
        %2083 = vmatpush1.xpose.msra.mxu0 0.0
        %2084 = vmatprep.subr.mxu0 0.0
        %2085 = vmatpush1.xpose.msra.mxu0 0.0
        %2086 = vmatprep.mubr.f32.mxu0 0.0
        %2087 = vmatmul.mubr.f32.gmra.mrb[0].mxu0 %v2018
        %v2088 = vpop.f32.mrb[0].mxu0
        %v2089 = vadd.f32 0.0, %v2088
        %v2090 = vpop.f32.mrb[0].mxu0
        %2091 = vdwg.mxu0
        %v2092 = vsel %vm1071, %v2011, -1e+30
        %v2093 = vsel %vm1071, %v2089, -1e+30
        %v2094 = vsel %vm916, %v2092, -inf
        %2095 = vmax.xlane.f32.xlu0 %v2094
        %v2096 = vpop.xlane.xlu0 %2095
        %v2097 = vsel %vm916, %v2093, -inf
        %2098 = vmax.xlane.f32.xlu0 %v2097
        %v2099 = vpop.xlane.xlu0 %2098
        %v2100 = vsub.f32 %v2092, %v2096
        %v2101 = vsub.f32 %v2093, %v2099
        %v2102 = vmul.f32 %v2100, 1.442695
        %v2103 = vpow.pop %v2102
        %v2104 = vmul.f32 %v2101, 1.442695
        %v2105 = vpow.pop %v2104
        %v2106 = vsel %vm916, %v2103, 0.0
        %2107 = vadd.xlane.f32.xlu0 %v2106
        %v2108 = vpop.xlane.xlu0 %2107
        %v2109 = vsel %vm916, %v2105, 0.0
        %2110 = vadd.xlane.f32.xlu0 %v2109
        %v2111 = vpop.xlane.xlu0 %2110
        %v2112 = vrcp.pop %v2108
        %v2113 = vrcp.pop %v2111
        %v2114 = vmul.f32 %v2103, %v2112
        %v2115 = vmul.f32 %v2105, %v2113
        %2116 = vrot.lane.b32.xlu0 %v898, 40
        %v2117 = vpop.permute.xlu0 %2116
        %v2120 = vsel %vm916, %v2114, 0
        %2122 = vmatprep.subr.mxu0 0.0
        %2123 = vmatpush1.msra.mxu0 %v2117
        %2124 = vmatprep.subr.mxu0 0.0
        %2125 = vmatpush1.msra.mxu0 0.0
        %2126 = vmatprep.subr.mxu0 0.0
        %2127 = vmatpush1.msra.mxu0 0.0
        %2128 = vmatprep.subr.mxu0 0.0
        %2129 = vmatpush1.msra.mxu0 0.0
        %2130 = vmatprep.subr.mxu0 0.0
        %2131 = vmatpush1.msra.mxu0 0.0
        %2132 = vmatprep.subr.mxu0 0.0
        %2133 = vmatpush1.msra.mxu0 0.0
        %2134 = vmatprep.subr.mxu0 0.0
        %2135 = vmatpush1.msra.mxu0 0.0
        %2136 = vmatprep.subr.mxu0 0.0
        %2137 = vmatpush1.msra.mxu0 0.0
        %2138 = vmatprep.subr.mxu0 0.0
        %2139 = vmatpush1.msra.mxu0 0.0
        %2140 = vmatprep.subr.mxu0 0.0
        %2141 = vmatpush1.msra.mxu0 0.0
        %2142 = vmatprep.subr.mxu0 0.0
        %2143 = vmatpush1.msra.mxu0 0.0
        %2144 = vmatprep.subr.mxu0 0.0
        %2145 = vmatpush1.msra.mxu0 0.0
        %2146 = vmatprep.subr.mxu0 0.0
        %2147 = vmatpush1.msra.mxu0 0.0
        %2148 = vmatprep.subr.mxu0 0.0
        %2149 = vmatpush1.msra.mxu0 0.0
        %2150 = vmatprep.subr.mxu0 0.0
        %2151 = vmatpush1.msra.mxu0 0.0
        %2152 = vmatprep.subr.mxu0 0.0
        %2153 = vmatpush1.msra.mxu0 0.0
        %2154 = vmatprep.subr.mxu0 0.0
        %2155 = vmatpush1.msra.mxu0 0.0
        %2156 = vmatprep.subr.mxu0 0.0
        %2157 = vmatpush1.msra.mxu0 0.0
        %2158 = vmatprep.subr.mxu0 0.0
        %2159 = vmatpush1.msra.mxu0 0.0
        %2160 = vmatprep.subr.mxu0 0.0
        %2161 = vmatpush1.msra.mxu0 0.0
        %2162 = vmatprep.subr.mxu0 0.0
        %2163 = vmatpush1.msra.mxu0 0.0
        %2164 = vmatprep.subr.mxu0 0.0
        %2165 = vmatpush1.msra.mxu0 0.0
        %2166 = vmatprep.subr.mxu0 0.0
        %2167 = vmatpush1.msra.mxu0 0.0
        %2168 = vmatprep.subr.mxu0 0.0
        %2169 = vmatpush1.msra.mxu0 0.0
        %2170 = vmatprep.subr.mxu0 0.0
        %2171 = vmatpush1.msra.mxu0 0.0
        %2172 = vmatprep.subr.mxu0 0.0
        %2173 = vmatpush1.msra.mxu0 0.0
        %2174 = vmatprep.subr.mxu0 0.0
        %2175 = vmatpush1.msra.mxu0 0.0
        %2176 = vmatprep.subr.mxu0 0.0
        %2177 = vmatpush1.msra.mxu0 0.0
        %2178 = vmatprep.subr.mxu0 0.0
        %2179 = vmatpush1.msra.mxu0 0.0
        %2180 = vmatprep.subr.mxu0 0.0
        %2181 = vmatpush1.msra.mxu0 0.0
        %2182 = vmatprep.subr.mxu0 0.0
        %2183 = vmatpush1.msra.mxu0 0.0
        %2184 = vmatprep.subr.mxu0 0.0
        %2185 = vmatpush1.msra.mxu0 0.0
        %2186 = vmatprep.mubr.f32.mxu0 0.0
        %2187 = vmatmul.mubr.f32.gmra.mrb[0].mxu0 %v2120
        %v2188 = vpop.f32.mrb[0].mxu0
        %v2189 = vadd.f32 0.0, %v2188
        %v2190 = vpop.f32.mrb[0].mxu0
        %2191 = vdwg.mxu0
        %2192 = vrot.lane.b32.xlu0 %v903, 40
        %v2193 = vpop.permute.xlu0 %2192
        %v2196 = vsel %vm916, %v2115, 0
        %2198 = vmatprep.subr.mxu0 0.0
        %2199 = vmatpush1.msra.mxu0 %v2193
        %2200 = vmatprep.subr.mxu0 0.0
        %2201 = vmatpush1.msra.mxu0 0.0
        %2202 = vmatprep.subr.mxu0 0.0
        %2203 = vmatpush1.msra.mxu0 0.0
        %2204 = vmatprep.subr.mxu0 0.0
        %2205 = vmatpush1.msra.mxu0 0.0
        %2206 = vmatprep.subr.mxu0 0.0
        %2207 = vmatpush1.msra.mxu0 0.0
        %2208 = vmatprep.subr.mxu0 0.0
        %2209 = vmatpush1.msra.mxu0 0.0
        %2210 = vmatprep.subr.mxu0 0.0
        %2211 = vmatpush1.msra.mxu0 0.0
        %2212 = vmatprep.subr.mxu0 0.0
        %2213 = vmatpush1.msra.mxu0 0.0
        %2214 = vmatprep.subr.mxu0 0.0
        %2215 = vmatpush1.msra.mxu0 0.0
        %2216 = vmatprep.subr.mxu0 0.0
        %2217 = vmatpush1.msra.mxu0 0.0
        %2218 = vmatprep.subr.mxu0 0.0
        %2219 = vmatpush1.msra.mxu0 0.0
        %2220 = vmatprep.subr.mxu0 0.0
        %2221 = vmatpush1.msra.mxu0 0.0
        %2222 = vmatprep.subr.mxu0 0.0
        %2223 = vmatpush1.msra.mxu0 0.0
        %2224 = vmatprep.subr.mxu0 0.0
        %2225 = vmatpush1.msra.mxu0 0.0
        %2226 = vmatprep.subr.mxu0 0.0
        %2227 = vmatpush1.msra.mxu0 0.0
        %2228 = vmatprep.subr.mxu0 0.0
        %2229 = vmatpush1.msra.mxu0 0.0
        %2230 = vmatprep.subr.mxu0 0.0
        %2231 = vmatpush1.msra.mxu0 0.0
        %2232 = vmatprep.subr.mxu0 0.0
        %2233 = vmatpush1.msra.mxu0 0.0
        %2234 = vmatprep.subr.mxu0 0.0
        %2235 = vmatpush1.msra.mxu0 0.0
        %2236 = vmatprep.subr.mxu0 0.0
        %2237 = vmatpush1.msra.mxu0 0.0
        %2238 = vmatprep.subr.mxu0 0.0
        %2239 = vmatpush1.msra.mxu0 0.0
        %2240 = vmatprep.subr.mxu0 0.0
        %2241 = vmatpush1.msra.mxu0 0.0
        %2242 = vmatprep.subr.mxu0 0.0
        %2243 = vmatpush1.msra.mxu0 0.0
        %2244 = vmatprep.subr.mxu0 0.0
        %2245 = vmatpush1.msra.mxu0 0.0
        %2246 = vmatprep.subr.mxu0 0.0
        %2247 = vmatpush1.msra.mxu0 0.0
        %2248 = vmatprep.subr.mxu0 0.0
        %2249 = vmatpush1.msra.mxu0 0.0
        %2250 = vmatprep.subr.mxu0 0.0
        %2251 = vmatpush1.msra.mxu0 0.0
        %2252 = vmatprep.subr.mxu0 0.0
        %2253 = vmatpush1.msra.mxu0 0.0
        %2254 = vmatprep.subr.mxu0 0.0
        %2255 = vmatpush1.msra.mxu0 0.0
        %2256 = vmatprep.subr.mxu0 0.0
        %2257 = vmatpush1.msra.mxu0 0.0
        %2258 = vmatprep.subr.mxu0 0.0
        %2259 = vmatpush1.msra.mxu0 0.0
        %2260 = vmatprep.subr.mxu0 0.0
        %2261 = vmatpush1.msra.mxu0 0.0
        %2262 = vmatprep.mubr.f32.mxu0 0.0
        %2263 = vmatmul.mubr.f32.gmra.mrb[0].mxu0 %v2196
        %v2264 = vpop.f32.mrb[0].mxu0
        %v2265 = vadd.f32 0.0, %v2264
        %v2266 = vpop.f32.mrb[0].mxu0
        %2267 = vdwg.mxu0
        %2270 = vrot.lane.b32.xlu0 %v2189, 24
        %v2271 = vpop.permute.xlu0 %2270
        %2272 = vrot.lane.b32.xlu0 %v2265, 24
        %v2273 = vpop.permute.xlu0 %2272
        %vm2276 = vcmask 261312
        %2277 = vst.msk [vmem:[#allocation3] sm:$0xff] %vm2276, %v2271
        %2278 = vst.msk [vmem:[#allocation3 + $0x8] sm:$0xff] %vm2276, %v2273
        %v2279 = vld [vmem:[#allocation3] sm:$0xff]
        %v2280 = vld [vmem:[#allocation3 + $0x8] sm:$0xff]
        %v2281 = vld [vmem:[%s727] sm:$0xff]
        %v2282 = vld [vmem:[%s727 + $0x8] sm:$0xff]
        %v2283 = vld [vmem:[%s727 + $0x10] sm:$0xff]
        %v2284 = vld [vmem:[%s727 + $0x18] sm:$0xff]
        %v2285 = vld [vmem:[%s730] sm:$0x1]
        %v2287 = vlaneseq
        %v2288 = vshrl.u32 %v2287, 7
        %v2289 = vsub.s32 0, %v2288
        %v2290 = vrot.slane %v2285, %v2289
        %v2293 = vsel %vm770, %v2279, 0
        %v2296 = vsel %vm770, %v2280, 0
        %2298 = vmatprep.subr.mxu0 0.0
        %2299 = vmatpush1.msra.mxu0 %v2281
        %2300 = vmatprep.subr.mxu0 0.0
        %2301 = vmatpush1.msra.mxu0 %v2282
        %2302 = vmatprep.subr.mxu0 0.0
        %2303 = vmatpush1.msra.mxu0 %v2283
        %2304 = vmatprep.subr.mxu0 0.0
        %2305 = vmatpush1.msra.mxu0 %v2284
        %2306 = vmatprep.subr.mxu0 0.0
        %2307 = vmatpush1.msra.mxu0 0.0
        %2308 = vmatprep.subr.mxu0 0.0
        %2309 = vmatpush1.msra.mxu0 0.0
        %2310 = vmatprep.subr.mxu0 0.0
        %2311 = vmatpush1.msra.mxu0 0.0
        %2312 = vmatprep.subr.mxu0 0.0
        %2313 = vmatpush1.msra.mxu0 0.0
        %2314 = vmatprep.subr.mxu0 0.0
        %2315 = vmatpush1.msra.mxu0 0.0
        %2316 = vmatprep.subr.mxu0 0.0
        %2317 = vmatpush1.msra.mxu0 0.0
        %2318 = vmatprep.subr.mxu0 0.0
        %2319 = vmatpush1.msra.mxu0 0.0
        %2320 = vmatprep.subr.mxu0 0.0
        %2321 = vmatpush1.msra.mxu0 0.0
        %2322 = vmatprep.subr.mxu0 0.0
        %2323 = vmatpush1.msra.mxu0 0.0
        %2324 = vmatprep.subr.mxu0 0.0
        %2325 = vmatpush1.msra.mxu0 0.0
        %2326 = vmatprep.subr.mxu0 0.0
        %2327 = vmatpush1.msra.mxu0 0.0
        %2328 = vmatprep.subr.mxu0 0.0
        %2329 = vmatpush1.msra.mxu0 0.0
        %2330 = vmatprep.subr.mxu0 0.0
        %2331 = vmatpush1.msra.mxu0 0.0
        %2332 = vmatprep.subr.mxu0 0.0
        %2333 = vmatpush1.msra.mxu0 0.0
        %2334 = vmatprep.subr.mxu0 0.0
        %2335 = vmatpush1.msra.mxu0 0.0
        %2336 = vmatprep.subr.mxu0 0.0
        %2337 = vmatpush1.msra.mxu0 0.0
        %2338 = vmatprep.subr.mxu0 0.0
        %2339 = vmatpush1.msra.mxu0 0.0
        %2340 = vmatprep.subr.mxu0 0.0
        %2341 = vmatpush1.msra.mxu0 0.0
        %2342 = vmatprep.subr.mxu0 0.0
        %2343 = vmatpush1.msra.mxu0 0.0
        %2344 = vmatprep.subr.mxu0 0.0
        %2345 = vmatpush1.msra.mxu0 0.0
        %2346 = vmatprep.subr.mxu0 0.0
        %2347 = vmatpush1.msra.mxu0 0.0
        %2348 = vmatprep.subr.mxu0 0.0
        %2349 = vmatpush1.msra.mxu0 0.0
        %2350 = vmatprep.subr.mxu0 0.0
        %2351 = vmatpush1.msra.mxu0 0.0
        %2352 = vmatprep.subr.mxu0 0.0
        %2353 = vmatpush1.msra.mxu0 0.0
        %2354 = vmatprep.subr.mxu0 0.0
        %2355 = vmatpush1.msra.mxu0 0.0
        %2356 = vmatprep.subr.mxu0 0.0
        %2357 = vmatpush1.msra.mxu0 0.0
        %2358 = vmatprep.subr.mxu0 0.0
        %2359 = vmatpush1.msra.mxu0 0.0
        %2360 = vmatprep.subr.mxu0 0.0
        %2361 = vmatpush1.msra.mxu0 0.0
        %2362 = vmatprep.mubr.f32.mxu0 0.0
        %2363 = vmatmul.mubr.f32.gmra.mrb[0].mxu0 %v2293
        %v2364 = vpop.f32.mrb[0].mxu0
        %v2365 = vadd.f32 %v2290, %v2364
        %v2366 = vpop.f32.mrb[0].mxu0
        %2367 = vmatprep.mubr.f32.mxu0 0.0
        %2368 = vmatmul.mubr.f32.gmra.mrb[0].mxu0 %v2296
        %v2369 = vpop.f32.mrb[0].mxu0
        %v2370 = vadd.f32 %v2290, %v2369
        %v2371 = vpop.f32.mrb[0].mxu0
        %2372 = vdwg.mxu0
        %v2373 = vadd.f32 %v766, %v2365
        %v2374 = vadd.f32 %v767, %v2370
        %v2375 = vld [vmem:[%s733] sm:$0x1]
        %v2376 = vld [vmem:[%s736] sm:$0x1]
        %v2377 = vsel %vm770, %v2373, 0.0
        %2378 = vadd.xlane.f32.xlu0 %v2377
        %v2379 = vpop.xlane.xlu0 %2378
        %v2380 = vsel %vm770, %v2374, 0.0
        %2381 = vadd.xlane.f32.xlu0 %v2380
        %v2382 = vpop.xlane.xlu0 %2381
        %v2383 = vmul.f32 %v2379, %v777
        %v2384 = vmul.f32 %v2382, %v777
        %v2385 = vsub.f32 %v2373, %v2383
        %v2386 = vsub.f32 %v2374, %v2384
        %v2387 = vmul.f32 %v2385, %v2385
        %v2388 = vmul.f32 %v2386, %v2386
        %v2389 = vsel %vm770, %v2387, 0.0
        %2390 = vadd.xlane.f32.xlu0 %v2389
        %v2391 = vpop.xlane.xlu0 %2390
        %v2392 = vsel %vm770, %v2388, 0.0
        %2393 = vadd.xlane.f32.xlu0 %v2392
        %v2394 = vpop.xlane.xlu0 %2393
        %v2395 = vmul.f32 %v2391, %v777
        %v2396 = vmul.f32 %v2394, %v777
        %v2397 = vadd.f32 %v2395, 1e-05
        %v2398 = vadd.f32 %v2396, 1e-05
        %v2399 = vrsqrt.pop %v2397
        %v2400 = vrsqrt.pop %v2398
        %v2401 = vmul.f32 %v2385, %v2399
        %v2402 = vmul.f32 %v2386, %v2400
        %v2404 = vlaneseq
        %v2405 = vshrl.u32 %v2404, 7
        %v2406 = vsub.s32 0, %v2405
        %v2407 = vrot.slane %v2375, %v2406
        %v2409 = vmul.f32 %v2401, %v2407
        %v2410 = vmul.f32 %v2402, %v2407
        %v2412 = vlaneseq
        %v2413 = vshrl.u32 %v2412, 7
        %v2414 = vsub.s32 0, %v2413
        %v2415 = vrot.slane %v2376, %v2414
        %v2417 = vadd.f32 %v2409, %v2415
        %v2418 = vadd.f32 %v2410, %v2415
        %v2419 = vld [vmem:[%s741] sm:$0xff]
        %v2420 = vld [vmem:[%s741 + $0x8] sm:$0xff]
        %v2421 = vld [vmem:[%s741 + $0x10] sm:$0xff]
        %v2422 = vld [vmem:[%s741 + $0x18] sm:$0xff]
        %v2423 = vld [vmem:[%s744] sm:$0x1]
        %v2425 = vlaneseq
        %v2426 = vshrl.u32 %v2425, 7
        %v2427 = vsub.s32 0, %v2426
        %v2428 = vrot.slane %v2423, %v2427
        %v2431 = vsel %vm770, %v2417, 0
        %v2434 = vsel %vm770, %v2418, 0
        %2436 = vmatprep.subr.mxu0 0.0
        %2437 = vmatpush1.msra.mxu0 %v2419
        %2438 = vmatprep.subr.mxu0 0.0
        %2439 = vmatpush1.msra.mxu0 %v2420
        %2440 = vmatprep.subr.mxu0 0.0
        %2441 = vmatpush1.msra.mxu0 %v2421
        %2442 = vmatprep.subr.mxu0 0.0
        %2443 = vmatpush1.msra.mxu0 %v2422
        %2444 = vmatprep.subr.mxu0 0.0
        %2445 = vmatpush1.msra.mxu0 0.0
        %2446 = vmatprep.subr.mxu0 0.0
        %2447 = vmatpush1.msra.mxu0 0.0
        %2448 = vmatprep.subr.mxu0 0.0
        %2449 = vmatpush1.msra.mxu0 0.0
        %2450 = vmatprep.subr.mxu0 0.0
        %2451 = vmatpush1.msra.mxu0 0.0
        %2452 = vmatprep.subr.mxu0 0.0
        %2453 = vmatpush1.msra.mxu0 0.0
        %2454 = vmatprep.subr.mxu0 0.0
        %2455 = vmatpush1.msra.mxu0 0.0
        %2456 = vmatprep.subr.mxu0 0.0
        %2457 = vmatpush1.msra.mxu0 0.0
        %2458 = vmatprep.subr.mxu0 0.0
        %2459 = vmatpush1.msra.mxu0 0.0
        %2460 = vmatprep.subr.mxu0 0.0
        %2461 = vmatpush1.msra.mxu0 0.0
        %2462 = vmatprep.subr.mxu0 0.0
        %2463 = vmatpush1.msra.mxu0 0.0
        %2464 = vmatprep.subr.mxu0 0.0
        %2465 = vmatpush1.msra.mxu0 0.0
        %2466 = vmatprep.subr.mxu0 0.0
        %2467 = vmatpush1.msra.mxu0 0.0
        %2468 = vmatprep.subr.mxu0 0.0
        %2469 = vmatpush1.msra.mxu0 0.0
        %2470 = vmatprep.subr.mxu0 0.0
        %2471 = vmatpush1.msra.mxu0 0.0
        %2472 = vmatprep.subr.mxu0 0.0
        %2473 = vmatpush1.msra.mxu0 0.0
        %2474 = vmatprep.subr.mxu0 0.0
        %2475 = vmatpush1.msra.mxu0 0.0
        %2476 = vmatprep.subr.mxu0 0.0
        %2477 = vmatpush1.msra.mxu0 0.0
        %2478 = vmatprep.subr.mxu0 0.0
        %2479 = vmatpush1.msra.mxu0 0.0
        %2480 = vmatprep.subr.mxu0 0.0
        %2481 = vmatpush1.msra.mxu0 0.0
        %2482 = vmatprep.subr.mxu0 0.0
        %2483 = vmatpush1.msra.mxu0 0.0
        %2484 = vmatprep.subr.mxu0 0.0
        %2485 = vmatpush1.msra.mxu0 0.0
        %2486 = vmatprep.subr.mxu0 0.0
        %2487 = vmatpush1.msra.mxu0 0.0
        %2488 = vmatprep.subr.mxu0 0.0
        %2489 = vmatpush1.msra.mxu0 0.0
        %2490 = vmatprep.subr.mxu0 0.0
        %2491 = vmatpush1.msra.mxu0 0.0
        %2492 = vmatprep.subr.mxu0 0.0
        %2493 = vmatpush1.msra.mxu0 0.0
        %2494 = vmatprep.subr.mxu0 0.0
        %2495 = vmatpush1.msra.mxu0 0.0
        %2496 = vmatprep.subr.mxu0 0.0
        %2497 = vmatpush1.msra.mxu0 0.0
        %2498 = vmatprep.subr.mxu0 0.0
        %2499 = vmatpush1.msra.mxu0 0.0
        %2500 = vmatprep.mubr.f32.mxu0 0.0
        %2501 = vmatmul.mubr.f32.gmra.mrb[0].mxu0 %v2431
        %v2502 = vpop.f32.mrb[0].mxu0
        %v2503 = vadd.f32 %v2428, %v2502
        %v2504 = vpop.f32.mrb[0].mxu0
        %2505 = vmatprep.mubr.f32.mxu0 0.0
        %2506 = vmatmul.mubr.f32.gmra.mrb[0].mxu0 %v2434
        %v2507 = vpop.f32.mrb[0].mxu0
        %v2508 = vadd.f32 %v2428, %v2507
        %v2509 = vpop.f32.mrb[0].mxu0
        %2510 = vdwg.mxu0
        %v2511 = vmul.f32 %v2503, 1.702
        %v2512 = vmul.f32 %v2508, 1.702
        %v2513 = vxor.u32 %v2511, 2147483648
        %v2514 = vxor.u32 %v2512, 2147483648
        %v2515 = vmul.f32 %v2513, 1.442695
        %v2516 = vpow.pop %v2515
        %v2517 = vmul.f32 %v2514, 1.442695
        %v2518 = vpow.pop %v2517
        %v2519 = vadd.f32 %v2516, 1.0
        %v2520 = vadd.f32 %v2518, 1.0
        %v2521 = vrcp.pop %v2519
        %v2522 = vmul.f32 1.0, %v2521
        %v2523 = vrcp.pop %v2520
        %v2524 = vmul.f32 1.0, %v2523
        %v2525 = vmul.f32 %v2503, %v2522
        %v2526 = vmul.f32 %v2508, %v2524
        %v2527 = vld [vmem:[%s749] sm:$0xff]
        %v2528 = vld [vmem:[%s749 + $0x8] sm:$0xff]
        %v2529 = vld [vmem:[%s749 + $0x10] sm:$0xff]
        %v2530 = vld [vmem:[%s749 + $0x18] sm:$0xff]
        %v2531 = vld [vmem:[%s749 + $0x20] sm:$0xff]
        %v2532 = vld [vmem:[%s749 + $0x28] sm:$0xff]
        %v2533 = vld [vmem:[%s749 + $0x30] sm:$0xff]
        %v2534 = vld [vmem:[%s749 + $0x38] sm:$0xff]
        %v2535 = vld [vmem:[%s749 + $0x40] sm:$0xff]
        %v2536 = vld [vmem:[%s749 + $0x48] sm:$0xff]
        %v2537 = vld [vmem:[%s749 + $0x50] sm:$0xff]
        %v2538 = vld [vmem:[%s749 + $0x58] sm:$0xff]
        %v2539 = vld [vmem:[%s749 + $0x60] sm:$0xff]
        %v2540 = vld [vmem:[%s749 + $0x68] sm:$0xff]
        %v2541 = vld [vmem:[%s749 + $0x70] sm:$0xff]
        %v2542 = vld [vmem:[%s749 + $0x78] sm:$0xff]
        %v2543 = vld [vmem:[%s752] sm:$0x1]
        %v2545 = vlaneseq
        %v2546 = vshrl.u32 %v2545, 7
        %v2547 = vsub.s32 0, %v2546
        %v2548 = vrot.slane %v2543, %v2547
        %2550 = vmatprep.subr.mxu0 0.0
        %2551 = vmatpush1.msra.mxu0 %v2527
        %2552 = vmatprep.subr.mxu0 0.0
        %2553 = vmatpush1.msra.mxu0 %v2528
        %2554 = vmatprep.subr.mxu0 0.0
        %2555 = vmatpush1.msra.mxu0 %v2529
        %2556 = vmatprep.subr.mxu0 0.0
        %2557 = vmatpush1.msra.mxu0 %v2530
        %2558 = vmatprep.subr.mxu0 0.0
        %2559 = vmatpush1.msra.mxu0 %v2531
        %2560 = vmatprep.subr.mxu0 0.0
        %2561 = vmatpush1.msra.mxu0 %v2532
        %2562 = vmatprep.subr.mxu0 0.0
        %2563 = vmatpush1.msra.mxu0 %v2533
        %2564 = vmatprep.subr.mxu0 0.0
        %2565 = vmatpush1.msra.mxu0 %v2534
        %2566 = vmatprep.subr.mxu0 0.0
        %2567 = vmatpush1.msra.mxu0 %v2535
        %2568 = vmatprep.subr.mxu0 0.0
        %2569 = vmatpush1.msra.mxu0 %v2536
        %2570 = vmatprep.subr.mxu0 0.0
        %2571 = vmatpush1.msra.mxu0 %v2537
        %2572 = vmatprep.subr.mxu0 0.0
        %2573 = vmatpush1.msra.mxu0 %v2538
        %2574 = vmatprep.subr.mxu0 0.0
        %2575 = vmatpush1.msra.mxu0 %v2539
        %2576 = vmatprep.subr.mxu0 0.0
        %2577 = vmatpush1.msra.mxu0 %v2540
        %2578 = vmatprep.subr.mxu0 0.0
        %2579 = vmatpush1.msra.mxu0 %v2541
        %2580 = vmatprep.subr.mxu0 0.0
        %2581 = vmatpush1.msra.mxu0 %v2542
        %2582 = vmatprep.subr.mxu0 0.0
        %2583 = vmatpush1.msra.mxu0 0.0
        %2584 = vmatprep.subr.mxu0 0.0
        %2585 = vmatpush1.msra.mxu0 0.0
        %2586 = vmatprep.subr.mxu0 0.0
        %2587 = vmatpush1.msra.mxu0 0.0
        %2588 = vmatprep.subr.mxu0 0.0
        %2589 = vmatpush1.msra.mxu0 0.0
        %2590 = vmatprep.subr.mxu0 0.0
        %2591 = vmatpush1.msra.mxu0 0.0
        %2592 = vmatprep.subr.mxu0 0.0
        %2593 = vmatpush1.msra.mxu0 0.0
        %2594 = vmatprep.subr.mxu0 0.0
        %2595 = vmatpush1.msra.mxu0 0.0
        %2596 = vmatprep.subr.mxu0 0.0
        %2597 = vmatpush1.msra.mxu0 0.0
        %2598 = vmatprep.subr.mxu0 0.0
        %2599 = vmatpush1.msra.mxu0 0.0
        %2600 = vmatprep.subr.mxu0 0.0
        %2601 = vmatpush1.msra.mxu0 0.0
        %2602 = vmatprep.subr.mxu0 0.0
        %2603 = vmatpush1.msra.mxu0 0.0
        %2604 = vmatprep.subr.mxu0 0.0
        %2605 = vmatpush1.msra.mxu0 0.0
        %2606 = vmatprep.subr.mxu0 0.0
        %2607 = vmatpush1.msra.mxu0 0.0
        %2608 = vmatprep.subr.mxu0 0.0
        %2609 = vmatpush1.msra.mxu0 0.0
        %2610 = vmatprep.subr.mxu0 0.0
        %2611 = vmatpush1.msra.mxu0 0.0
        %2612 = vmatprep.subr.mxu0 0.0
        %2613 = vmatpush1.msra.mxu0 0.0
        %2614 = vmatprep.mubr.f32.mxu0 0.0
        %2615 = vmatmul.mubr.f32.gmra.mrb[0].mxu0 %v2525
        %v2616 = vpop.f32.mrb[0].mxu0
        %v2617 = vadd.f32 %v2548, %v2616
        %v2618 = vpop.f32.mrb[0].mxu0
        %2619 = vmatprep.mubr.f32.mxu0 0.0
        %2620 = vmatmul.mubr.f32.gmra.mrb[0].mxu0 %v2526
        %v2621 = vpop.f32.mrb[0].mxu0
        %v2622 = vadd.f32 %v2548, %v2621
        %v2623 = vpop.f32.mrb[0].mxu0
        %2624 = vdwg.mxu0
        %v2625 = vadd.f32 %v2373, %v2617
        %v2626 = vadd.f32 %v2374, %v2622
        %2627 = vst.msk [vmem:[#allocation2] sm:$0xff] %vm770, %v2625
        %2628 = vst.msk [vmem:[#allocation2 + $0x8] sm:$0xff] %vm770, %v2626
        %p2629 = scmp.eq.s32.totalorder %s41, 1
        // Predicated region
        $region93: #{tpu_custom_call.1} parent=87 // pred_check
          %p2630 = pneg %p2629
        $region94: #{tpu_custom_call.1} parent=87 // pred_check_branch
          %2632 = sbr.rel (%p2630) target = $region96
        $region95: #{tpu_custom_call.1} parent=87 // pred_region
          %s2633 = smul.u32 %s40, 2
          %s2634 = sld [smem:[#allocation5 + %s2633]]
          %v2635 = vstv %s2634
          %vm2636 = vcmp.eq.s32.totalorder %v907, %v2635
          %v2637 = vsel %vm2636, 1, 0
          %vm2638 = vcmp.eq.s32.totalorder %v2637, 1
          %v2639 = vsel %vm2638, %v2625, 0.0
          %v2640 = vsel %vm770, %v2639, 0.0
          %v2641 = vrot.slane %v2640, 4
          %v2642 = vadd.f32 %v2640, %v2641
          %v2643 = vrot.slane %v2642, 2
          %v2644 = vadd.f32 %v2642, %v2643
          %v2645 = vrot.slane %v2644, 1
          %v2646 = vadd.f32 %v2644, %v2645
          %s2647 = sadd.s32 %s2633, 1
          %s2648 = sld [smem:[#allocation5 + %s2647]]
          %v2649 = vstv %s2648
          %vm2650 = vcmp.eq.s32.totalorder %v907, %v2649
          %v2651 = vsel %vm2650, 1, 0
          %vm2652 = vcmp.eq.s32.totalorder %v2651, 1
          %v2653 = vsel %vm2652, %v2626, 0.0
          %v2654 = vsel %vm770, %v2653, 0.0
          %v2655 = vrot.slane %v2654, 4
          %v2656 = vadd.f32 %v2654, %v2655
          %v2657 = vrot.slane %v2656, 2
          %v2658 = vadd.f32 %v2656, %v2657
          %v2659 = vrot.slane %v2658, 1
          %v2660 = vadd.f32 %v2658, %v2659
          %vm2661 = vcmask 1040384
          %v2662 = vsel %vm2661, %v2646, %v2660
          %v2663 = vld [vmem:[%s15] sm:$0x1]
          %v2664 = vld [vmem:[%s16] sm:$0x1]
          %vm2665 = vcmask 254976
          %v2666 = vsel %vm2665, %v2662, 0.0
          %2667 = vadd.xlane.f32.xlu0 %v2666
          %v2668 = vpop.xlane.xlu0 %2667
          %v2669 = vmul.f32 %v2668, %v777
          %v2670 = vsub.f32 %v2662, %v2669
          %v2671 = vmul.f32 %v2670, %v2670
          %v2672 = vsel %vm2665, %v2671, 0.0
          %2673 = vadd.xlane.f32.xlu0 %v2672
          %v2674 = vpop.xlane.xlu0 %2673
          %v2675 = vmul.f32 %v2674, %v777
          %v2676 = vadd.f32 %v2675, 1e-05
          %v2677 = vrsqrt.pop %v2676
          %v2678 = vmul.f32 %v2670, %v2677
          %v2680 = vlaneseq
          %v2681 = vshrl.u32 %v2680, 7
          %v2682 = vsub.s32 0, %v2681
          %v2683 = vrot.slane %v2663, %v2682
          %v2685 = vmul.f32 %v2678, %v2683
          %v2687 = vlaneseq
          %v2688 = vshrl.u32 %v2687, 7
          %v2689 = vsub.s32 0, %v2688
          %v2690 = vrot.slane %v2664, %v2689
          %v2692 = vadd.f32 %v2685, %v2690
          %v2693 = vld [vmem:[%s17] sm:$0xff]
          %v2694 = vld [vmem:[%s17 + $0x8] sm:$0xff]
          %v2695 = vld [vmem:[%s17 + $0x10] sm:$0xff]
          %v2696 = vld [vmem:[%s17 + $0x18] sm:$0xff]
          %v2698 = vsel %vm770, %v2692, 0
          %2700 = vmatprep.subr.mxu0 0.0
          %2701 = vmatpush1.msra.mxu0 %v2693
          %2702 = vmatprep.subr.mxu0 0.0
          %2703 = vmatpush1.msra.mxu0 %v2694
          %2704 = vmatprep.subr.mxu0 0.0
          %2705 = vmatpush1.msra.mxu0 %v2695
          %2706 = vmatprep.subr.mxu0 0.0
          %2707 = vmatpush1.msra.mxu0 %v2696
          %2708 = vmatprep.subr.mxu0 0.0
          %2709 = vmatpush1.msra.mxu0 0.0
          %2710 = vmatprep.subr.mxu0 0.0
          %2711 = vmatpush1.msra.mxu0 0.0
          %2712 = vmatprep.subr.mxu0 0.0
          %2713 = vmatpush1.msra.mxu0 0.0
          %2714 = vmatprep.subr.mxu0 0.0
          %2715 = vmatpush1.msra.mxu0 0.0
          %2716 = vmatprep.subr.mxu0 0.0
          %2717 = vmatpush1.msra.mxu0 0.0
          %2718 = vmatprep.subr.mxu0 0.0
          %2719 = vmatpush1.msra.mxu0 0.0
          %2720 = vmatprep.subr.mxu0 0.0
          %2721 = vmatpush1.msra.mxu0 0.0
          %2722 = vmatprep.subr.mxu0 0.0
          %2723 = vmatpush1.msra.mxu0 0.0
          %2724 = vmatprep.subr.mxu0 0.0
          %2725 = vmatpush1.msra.mxu0 0.0
          %2726 = vmatprep.subr.mxu0 0.0
          %2727 = vmatpush1.msra.mxu0 0.0
          %2728 = vmatprep.subr.mxu0 0.0
          %2729 = vmatpush1.msra.mxu0 0.0
          %2730 = vmatprep.subr.mxu0 0.0
          %2731 = vmatpush1.msra.mxu0 0.0
          %2732 = vmatprep.subr.mxu0 0.0
          %2733 = vmatpush1.msra.mxu0 0.0
          %2734 = vmatprep.subr.mxu0 0.0
          %2735 = vmatpush1.msra.mxu0 0.0
          %2736 = vmatprep.subr.mxu0 0.0
          %2737 = vmatpush1.msra.mxu0 0.0
          %2738 = vmatprep.subr.mxu0 0.0
          %2739 = vmatpush1.msra.mxu0 0.0
          %2740 = vmatprep.subr.mxu0 0.0
          %2741 = vmatpush1.msra.mxu0 0.0
          %2742 = vmatprep.subr.mxu0 0.0
          %2743 = vmatpush1.msra.mxu0 0.0
          %2744 = vmatprep.subr.mxu0 0.0
          %2745 = vmatpush1.msra.mxu0 0.0
          %2746 = vmatprep.subr.mxu0 0.0
          %2747 = vmatpush1.msra.mxu0 0.0
          %2748 = vmatprep.subr.mxu0 0.0
          %2749 = vmatpush1.msra.mxu0 0.0
          %2750 = vmatprep.subr.mxu0 0.0
          %2751 = vmatpush1.msra.mxu0 0.0
          %2752 = vmatprep.subr.mxu0 0.0
          %2753 = vmatpush1.msra.mxu0 0.0
          %2754 = vmatprep.subr.mxu0 0.0
          %2755 = vmatpush1.msra.mxu0 0.0
          %2756 = vmatprep.subr.mxu0 0.0
          %2757 = vmatpush1.msra.mxu0 0.0
          %2758 = vmatprep.subr.mxu0 0.0
          %2759 = vmatpush1.msra.mxu0 0.0
          %2760 = vmatprep.subr.mxu0 0.0
          %2761 = vmatpush1.msra.mxu0 0.0
          %2762 = vmatprep.subr.mxu0 0.0
          %2763 = vmatpush1.msra.mxu0 0.0
          %2764 = vmatprep.mubr.f32.mxu0 0.0
          %2765 = vmatmul.mubr.f32.gmra.mrb[0].mxu0 %v2698
          %v2766 = vpop.f32.mrb[0].mxu0
          %v2767 = vadd.f32 0.0, %v2766
          %v2768 = vpop.f32.mrb[0].mxu0
          %2769 = vdwg.mxu0
          %v2772 = vunpack.c.l.s4 1966171168
          %v2773 = vunpack.c.0.s8 %v2772
          %v2774 = vlaneseq
          %v2775 = vshrl.u32 %v2774, 7
          %v2776 = vsub.s32 %v2773, %v2775
          %v2777 = vrot.slane %v2767, %v2776
          %v2778 = vcombine.high %v2777, %v2777
          %v2780 = vunpack.c.l.s4 1966171168
          %v2781 = vunpack.c.0.s8 %v2780
          %v2782 = vlaneseq
          %v2783 = vshrl.u32 %v2782, 7
          %v2784 = vsub.s32 %v2781, %v2783
          %v2785 = vrot.slane %v2777, %v2784
          %v2787 = vunpack.c.l.s4 1966171168
          %v2788 = vunpack.c.0.s8 %v2787
          %v2789 = vlaneseq
          %v2790 = vshrl.u32 %v2789, 7
          %v2791 = vsub.s32 %v2788, %v2790
          %v2792 = vrot.slane %v2778, %v2791
          %vm2795 = vcmask 122880
          %2796 = vst.msk [vmem:[#allocation6] sm:$0x1] %vm2795, %v2785
          %2797 = vst.msk [vmem:[#allocation6 + $0x1] sm:$0x1] %vm2795, %v2792
        $region96: #{tpu_custom_call.1} parent=87 // pred_fallthru
          _
        // Predicated region
        $region97: #{tpu_custom_call.1} parent=87 // pred_check
          %p2798 = pneg %p488
        $region98: #{tpu_custom_call.1} parent=87 // pred_check_branch
          %2800 = sbr.rel (%p2798) target = $region100
        $region99: #{tpu_custom_call.1} parent=87 // pred_region
          %s2801 = smul.u32 2, %s40
          %s2803 = ssub.s32 32, 32
          %2804 = vsyncadd [#allocation7], %s2803
          %s2805 = smul.addr %s2801, 16
          %s2806 = scalar_lea.hbm %s18, %s2805
          %s2807 = sshll.u32 [#allocation6], 4
          %s2808 = int_to_ptr.vmem [resolvable:$true] %s2807
          %2813 = dma.vmem_to_hbm [thread:$0]  %s2808, 32, %s2806, [#allocation7], 16, 16, 1
        $region100: #{tpu_custom_call.1} parent=87 // pred_fallthru
          _
        // Predicated region
        $region101: #{tpu_custom_call.1} parent=87 // pred_check
          %p2814 = pneg %p488
        $region102: #{tpu_custom_call.1} parent=87 // pred_check_branch
          %2816 = sbr.rel (%p2814) target = $region104
        $region103: #{tpu_custom_call.1} parent=87 // pred_region
          %2817 = dma.done [#allocation7], 32
        $region104: #{tpu_custom_call.1} parent=87 // pred_fallthru
          _
      $region88: #{tpu_custom_call.1} parent=5 // pred_fallthru
        _
      %p2818 = scmp.le.s32.totalorder 2, %s31
      // Predicated region
      $region105: #{tpu_custom_call.1} parent=5 // pred_check
        %p2819 = pneg %p2818
      $region106: #{tpu_custom_call.1} parent=5 // pred_check_branch
        %2821 = sbr.rel (%p2819) target = $region108
      $region107: #{tpu_custom_call.1} parent=5 // pred_region
        %s2822 = ssub.s32 %s31, 2
      $region108: #{tpu_custom_call.1} parent=5 // pred_fallthru
        _
    $region6: #{tpu_custom_call.1} parent=1 // loop_footer
      %s35 = sadd.s32 1, %s31
    $region7: #{tpu_custom_call.1} parent=1 // loop_footer_branch
      %30 = sbr.rel target = $region3
    $region8: #{tpu_custom_call.1} parent=1 // loop_exit
      _
    %2823 = vsyncpa [#allocation7], 1
    %s2824 = scalar_lea.sflag [#allocation7], 1
    %2825 = vsyncpa %s2824, 1

</llo_original>
